<compile_context>
chip_gen: v7x
topology: tpu7x:2x2x1
jax: 0.10.0
libtpu: 0.0.40
codegen_flags: <defaults>
</compile_context>

<pallas_src>
import functools

import jax
import jax.numpy as jnp
from jax.experimental import pallas as pl
from jax.experimental.pallas import tpu as pltpu


def _round_up(x, m):
    return (x + m - 1) // m * m


def _pick_tile_h(H, W, cout_p, *, min_m, bytes_per_elem, budget_bytes):
    """Pick an h-tile: a divisor of H with th*W >= min_m, within a VMEM budget."""
    divs = [d for d in range(1, H + 1) if H % d == 0]
    max_m = max(min_m, budget_bytes // max(1, bytes_per_elem * cout_p))
    ok = [d for d in divs if d * W <= max_m] or [divs[0]]
    for d in ok:
        if d * W >= min_m:
            return d
    return ok[-1]   # H*W too small to reach min_m: take the whole image


def _vmem_limit_bytes():
    # Generation-aware scoped-VMEM request with headroom for double-buffers /
    # internal scratch: ~3/4 of per-core VMEM, safe 48 MiB fallback.
    try:
        cap = int(pltpu.get_tpu_info().vmem_capacity_bytes)
    except Exception:
        return 48 * 1024 * 1024
    return int(min(96 * 1024 * 1024, max(32 * 1024 * 1024, (cap * 3) // 4)))


def _conv3x3_stats_kernel(x_ref, w_ref, y_ref, stats_ref):
    # x_ref    : (1, H+2, W+2, Cin_p) padded image (bf16), resident per n
    # w_ref    : (9, Cin_p, Cout_p)   per-tap weights (bf16)
    # y_ref    : (1, TH, W, Cout_p)   conv output tile (bf16), lane-dense
    # stats_ref: (1, 1, 2, Cout_p)    per-(n, h-tile) [sum, sumsq] partials (f32)
    i = pl.program_id(1)
    _, TH, W, Cout_p = y_ref.shape
    Cin_p = x_ref.shape[-1]

    r0 = pl.multiple_of(i * TH, TH)

    # 3x3 conv as 9 accumulating MXU matmuls with f32 accumulation; taps are
    # taken directly from the resident image (no im2col slab, no casts, no
    # masked lane-offset slab stores).
    acc = None
    for kh in range(3):
        band = x_ref[0, pl.ds(r0 + kh, TH), :, :]             # (TH, W+2, Cin_p)
        for kw in range(3):
            tap = band[:, kw:kw + W, :].reshape(TH * W, Cin_p)
            d = jnp.dot(tap, w_ref[kh * 3 + kw],
                        preferred_element_type=jnp.float32)
            acc = d if acc is None else acc + d               # (TH*W, Cout_p)

    # bf16 writeback of the activation (halves the HBM traffic of both passes);
    # BN statistics below are taken from the f32 accumulator, so only the
    # normalize input is bf16-quantized.
    y_ref[...] = acc.reshape(1, TH, W, Cout_p).astype(y_ref.dtype)

    # Per-tile BatchNorm partial statistics, written directly (no stack/concat).
    ssum = jnp.sum(acc, axis=0, keepdims=True).reshape(1, 1, 1, Cout_p)
    ssq = jnp.sum(acc * acc, axis=0, keepdims=True).reshape(1, 1, 1, Cout_p)
    stats_ref[:, :, 0:1, :] = ssum
    stats_ref[:, :, 1:2, :] = ssq


def _bn_relu_kernel(y_ref, scale_ref, shift_ref, o_ref):
    # Lane-dense VPU pass: y*scale + shift (per-channel, rsqrt hoisted to the
    # wrapper), then ReLU.  y arrives as bf16, math in f32.
    y = y_ref[...].astype(jnp.float32)
    o_ref[...] = jnp.maximum(y * scale_ref[...] + shift_ref[...], 0.0)


@functools.partial(jax.jit, static_argnames=("eps", "compute_dtype"))
def conv_bn_relu(x_nchw, w_oihw, gamma, beta, eps=1e-5,
                 compute_dtype=jnp.bfloat16):
    N, Cin, H, W = x_nchw.shape
    Cout = w_oihw.shape[0]

    cin_p = _round_up(Cin, 8)       # sublane-friendly contraction packing
    cout_p = _round_up(Cout, 128)   # lane-dense output stores (unmasked vst)

    vlim = _vmem_limit_bytes()
    budget = vlim // 3              # rough per-pass budget for the big blocks

    # Pass-1 tile: target M = th*W >= 256 (fills the 256-wide v6e/v7x MXU);
    # ~8 B per (row-position, Cout_p) elem (bf16 y double-buffered + f32 acc).
    th = _pick_tile_h(H, W, cout_p, min_m=256, bytes_per_elem=8,
                      budget_bytes=budget)
    ht = H // th
    # Pass-2 tile: purely elementwise -> want >= 512 sublanes per step;
    # ~12 B per elem (bf16 in + f32 out, both double-buffered).
    th2 = _pick_tile_h(H, W, cout_p, min_m=512, bytes_per_elem=12,
                       budget_bytes=budget)
    ht2 = H // th2

    # Single fused layout-prep pass (transpose + SAME halo pad + channel pad +
    # bf16 cast fuse into one HBM read/write under jit).
    x = jnp.transpose(x_nchw, (0, 2, 3, 1))                       # NHWC
    x = jnp.pad(x, ((0, 0), (1, 1), (1, 1), (0, cin_p - Cin)))
    x = x.astype(compute_dtype)                                   # (N,H+2,W+2,Cin_p)

    # Weights: OIHW -> (tap, Cin_p, Cout_p), zero-padded channels.
    w = jnp.transpose(w_oihw, (2, 3, 1, 0))                       # (3,3,Cin,Cout)
    w = jnp.pad(w, ((0, 0), (0, 0), (0, cin_p - Cin), (0, cout_p - Cout)))
    w = w.reshape(9, cin_p, cout_p).astype(compute_dtype)

    # ---- Pass 1: conv + per-(n, h-tile) BN partial statistics --------------
    conv_y, stats = pl.pallas_call(
        _conv3x3_stats_kernel,
        out_shape=(
            jax.ShapeDtypeStruct((N, H, W, cout_p), compute_dtype),
            jax.ShapeDtypeStruct((N, ht, 2, cout_p), jnp.float32),
        ),
        grid=(N, ht),
        in_specs=[
            # Full padded image per batch element (block index constant over
            # the h-tile axis -> DMA'd once per n); halo sliced in-kernel.
            pl.BlockSpec((1, H + 2, W + 2, cin_p), lambda n, i: (n, 0, 0, 0)),
            pl.BlockSpec((9, cin_p, cout_p), lambda n, i: (0, 0, 0)),
        ],
        out_specs=(
            pl.BlockSpec((1, th, W, cout_p), lambda n, i: (n, i, 0, 0)),
            pl.BlockSpec((1, 1, 2, cout_p), lambda n, i: (n, i, 0, 0)),
        ),
        compiler_params=pltpu.CompilerParams(
            dimension_semantics=("parallel", "parallel"),
            vmem_limit_bytes=vlim),
    )(x, w)

    # ---- Tiny cross-(batch, tile) reduction + affine folding (plain JAX) ---
    cnt = jnp.float32(N * H * W)
    ch_sum = jnp.sum(stats[:, :, 0, :], axis=(0, 1))
    ch_sumsq = jnp.sum(stats[:, :, 1, :], axis=(0, 1))
    mean = ch_sum / cnt
    # Biased variance (training-mode BatchNorm2d normalization).  Note:
    # E[x^2]-E[x]^2 in f32 can cancel if |mean| >> std over a very large N*H*W.
    var = jnp.maximum(ch_sumsq / cnt - mean * mean, 0.0)
    inv = jax.lax.rsqrt(var + jnp.float32(eps))
    gamma_p = jnp.pad(gamma.reshape(-1).astype(jnp.float32), (0, cout_p - Cout))
    beta_p = jnp.pad(beta.reshape(-1).astype(jnp.float32), (0, cout_p - Cout))
    scale = (gamma_p * inv).reshape(1, cout_p)        # padded channels -> 0
    shift = (beta_p - mean * gamma_p * inv).reshape(1, cout_p)

    # ---- Pass 2: normalize + ReLU (lane-dense, large tiles, fully parallel) -
    out_nhwc = pl.pallas_call(
        _bn_relu_kernel,
        out_shape=jax.ShapeDtypeStruct((N, H, W, cout_p), jnp.float32),
        grid=(N, ht2),
        in_specs=[
            pl.BlockSpec((1, th2, W, cout_p), lambda n, i: (n, i, 0, 0)),
            pl.BlockSpec((1, cout_p), lambda n, i: (0, 0)),
            pl.BlockSpec((1, cout_p), lambda n, i: (0, 0)),
        ],
        out_specs=pl.BlockSpec((1, th2, W, cout_p), lambda n, i: (n, i, 0, 0)),
        compiler_params=pltpu.CompilerParams(
            dimension_semantics=("parallel", "parallel"),
            vmem_limit_bytes=vlim),
    )(conv_y, scale, shift)

    # Strip channel padding, back to NCHW (PyTorch contract); slice + transpose
    # fuse into one copy under jit.  (If W were a multiple of 128 the kernel
    # could emit NCHW directly with lane-dense stores; not the case here.)
    return jnp.transpose(out_nhwc[:, :, :, :Cout], (0, 3, 1, 2))


def _reference(x_nchw, w_oihw, gamma, beta, eps=1e-5, cast_inputs_to=None,
               store_y_as=None):
    # Pure-JAX reference of the PyTorch forward (training-mode BatchNorm2d).
    x, w = x_nchw, w_oihw
    if cast_inputs_to is not None:
        x = x.astype(cast_inputs_to).astype(jnp.float32)
        w = w.astype(cast_inputs_to).astype(jnp.float32)
    y = jax.lax.conv_general_dilated(
        x, w, window_strides=(1, 1), padding=((1, 1), (1, 1)),
        dimension_numbers=("NCHW", "OIHW", "NCHW"),
        precision=jax.lax.Precision.HIGHEST)
    mean = y.mean(axis=(0, 2, 3), keepdims=True)
    var = y.var(axis=(0, 2, 3), keepdims=True)              # biased variance
    y_store = y if store_y_as is None else y.astype(store_y_as).astype(jnp.float32)
    yhat = (y_store - mean) * jax.lax.rsqrt(var + eps)
    yhat = yhat * gamma.reshape(1, -1, 1, 1) + beta.reshape(1, -1, 1, 1)
    return jnp.maximum(yhat, 0.0)


if __name__ == "__main__":
    key = jax.random.PRNGKey(0)
    k_x, k_w = jax.random.split(key)

    N, Cin, Cout, H, W = 2, 4, 8, 16, 16

    # Input (NCHW, like PyTorch).
    x = jax.random.normal(k_x, (N, Cin, H, W), dtype=jnp.float32)

    # Conv weight: kaiming_normal_(a=1) -> gain 1, std = 1/sqrt(fan_in), no bias.
    fan_in = Cin * 3 * 3
    w = jax.random.normal(k_w, (Cout, Cin, 3, 3), dtype=jnp.float32) / jnp.sqrt(
        jnp.float32(fan_in))

    # BatchNorm2d defaults: gamma = 1, beta = 0, eps = 1e-5.
    gamma = jnp.ones((Cout,), jnp.float32)
    beta = jnp.zeros((Cout,), jnp.float32)

    out = conv_bn_relu(x, w, gamma, beta)
    out = jax.block_until_ready(out)
    assert out.shape == (N, Cout, H, W), out.shape

    # Tighter check vs a reference modeling the kernel's quantization (bf16
    # conv operands, f32 accumulation/statistics, bf16 activation storage).
    ref_q = _reference(x, w, gamma, beta, cast_inputs_to=jnp.bfloat16,
                       store_y_as=jnp.bfloat16)
    err_q = float(jnp.max(jnp.abs(out - ref_q)))
    assert jnp.allclose(out, ref_q, atol=2e-2, rtol=2e-2), err_q

    # Loose check vs pure-f32 PyTorch semantics (slack = bf16 quantization of
    # the conv operands and of the stored pre-BN activation).
    ref_f32 = _reference(x, w, gamma, beta)
    err_f = float(jnp.max(jnp.abs(out - ref_f32)))
    assert jnp.allclose(out, ref_f32, atol=7e-2, rtol=7e-2), err_f

    print("KERNEL_OK")
</pallas_src>

<mosaic_0001>
module attributes {stable_mosaic.version = 11 : i64} {
  func.func @_conv3x3_stats_kernel(%arg0: i32, %arg1: i32, %arg2: memref<1x18x18x8xbf16, #tpu.memory_space<vmem>>, %arg3: memref<9x8x128xbf16, #tpu.memory_space<vmem>>, %arg4: memref<1x16x16x128xbf16, #tpu.memory_space<vmem>>, %arg5: memref<1x1x2x128xf32, #tpu.memory_space<vmem>>) attributes {dimension_semantics = [#tpu.dimension_semantics<parallel>, #tpu.dimension_semantics<parallel>], iteration_bounds = array<i64: 2, 1>, scalar_prefetch = 0 : i64, scratch_operands = 0 : i64, tpu.core_type = #tpu.core_type<tc>, window_params = [{transform_indices = @transform_0, window_bounds = array<i64: 1, 18, 18, 8>}, {pipeline_mode = #tpu.pipeline_mode<synchronous>, transform_indices = @transform_1, window_bounds = array<i64: 9, 8, 128>}, {transform_indices = @transform_2, window_bounds = array<i64: 1, 16, 16, 128>}, {transform_indices = @transform_3, window_bounds = array<i64: 1, 1, 2, 128>}]} {
    %c16_i32 = arith.constant 16 : i32
    %0 = arith.muli %arg1, %c16_i32 : i32
    %1 = tpu.assume_multiple %0, 16 : i32
    %c0_i32 = arith.constant 0 : i32
    %2 = arith.addi %1, %c0_i32 : i32
    %c0 = arith.constant 0 : index
    %3 = arith.index_cast %2 : i32 to index
    %c0_0 = arith.constant 0 : index
    %c0_1 = arith.constant 0 : index
    %4 = vector.load %arg2[%c0, %3, %c0_0, %c0_1] : memref<1x18x18x8xbf16, #tpu.memory_space<vmem>>, vector<1x16x18x8xbf16>
    %5 = vector.shape_cast %4 : vector<1x16x18x8xbf16> to vector<16x18x8xbf16>
    %6 = vector.extract_strided_slice %5 {offsets = [0, 0, 0], sizes = [16, 16, 8], strides = [1, 1, 1]} : vector<16x18x8xbf16> to vector<16x16x8xbf16>
    %7 = vector.shape_cast %6 : vector<16x16x8xbf16> to vector<256x8xbf16>
    %c0_2 = arith.constant 0 : index
    %c0_3 = arith.constant 0 : index
    %c0_4 = arith.constant 0 : index
    %8 = vector.load %arg3[%c0_2, %c0_3, %c0_4] : memref<9x8x128xbf16, #tpu.memory_space<vmem>>, vector<1x8x128xbf16>
    %9 = vector.shape_cast %8 : vector<1x8x128xbf16> to vector<8x128xbf16>
    %cst = arith.constant dense<0.000000e+00> : vector<256x128xf32>
    %10 = tpu.matmul %7, %9, %cst {dimension_numbers = #tpu.dot_dimension_numbers<[1], [0], [0], [1], [0, 0, 1, 1], [], []>} : vector<256x8xbf16>, vector<8x128xbf16>, vector<256x128xf32> -> vector<256x128xf32>
    %11 = vector.extract_strided_slice %5 {offsets = [0, 1, 0], sizes = [16, 16, 8], strides = [1, 1, 1]} : vector<16x18x8xbf16> to vector<16x16x8xbf16>
    %12 = vector.shape_cast %11 : vector<16x16x8xbf16> to vector<256x8xbf16>
    %c1 = arith.constant 1 : index
    %c0_5 = arith.constant 0 : index
    %c0_6 = arith.constant 0 : index
    %13 = vector.load %arg3[%c1, %c0_5, %c0_6] : memref<9x8x128xbf16, #tpu.memory_space<vmem>>, vector<1x8x128xbf16>
    %14 = vector.shape_cast %13 : vector<1x8x128xbf16> to vector<8x128xbf16>
    %cst_7 = arith.constant dense<0.000000e+00> : vector<256x128xf32>
    %15 = tpu.matmul %12, %14, %cst_7 {dimension_numbers = #tpu.dot_dimension_numbers<[1], [0], [0], [1], [0, 0, 1, 1], [], []>} : vector<256x8xbf16>, vector<8x128xbf16>, vector<256x128xf32> -> vector<256x128xf32>
    %16 = arith.addf %10, %15 : vector<256x128xf32>
    %17 = vector.extract_strided_slice %5 {offsets = [0, 2, 0], sizes = [16, 16, 8], strides = [1, 1, 1]} : vector<16x18x8xbf16> to vector<16x16x8xbf16>
    %18 = vector.shape_cast %17 : vector<16x16x8xbf16> to vector<256x8xbf16>
    %c2 = arith.constant 2 : index
    %c0_8 = arith.constant 0 : index
    %c0_9 = arith.constant 0 : index
    %19 = vector.load %arg3[%c2, %c0_8, %c0_9] : memref<9x8x128xbf16, #tpu.memory_space<vmem>>, vector<1x8x128xbf16>
    %20 = vector.shape_cast %19 : vector<1x8x128xbf16> to vector<8x128xbf16>
    %cst_10 = arith.constant dense<0.000000e+00> : vector<256x128xf32>
    %21 = tpu.matmul %18, %20, %cst_10 {dimension_numbers = #tpu.dot_dimension_numbers<[1], [0], [0], [1], [0, 0, 1, 1], [], []>} : vector<256x8xbf16>, vector<8x128xbf16>, vector<256x128xf32> -> vector<256x128xf32>
    %22 = arith.addf %16, %21 : vector<256x128xf32>
    %c1_i32 = arith.constant 1 : i32
    %23 = arith.addi %1, %c1_i32 : i32
    %c0_11 = arith.constant 0 : index
    %24 = arith.index_cast %23 : i32 to index
    %c0_12 = arith.constant 0 : index
    %c0_13 = arith.constant 0 : index
    %25 = vector.load %arg2[%c0_11, %24, %c0_12, %c0_13] : memref<1x18x18x8xbf16, #tpu.memory_space<vmem>>, vector<1x16x18x8xbf16>
    %26 = vector.shape_cast %25 : vector<1x16x18x8xbf16> to vector<16x18x8xbf16>
    %27 = vector.extract_strided_slice %26 {offsets = [0, 0, 0], sizes = [16, 16, 8], strides = [1, 1, 1]} : vector<16x18x8xbf16> to vector<16x16x8xbf16>
    %28 = vector.shape_cast %27 : vector<16x16x8xbf16> to vector<256x8xbf16>
    %c3 = arith.constant 3 : index
    %c0_14 = arith.constant 0 : index
    %c0_15 = arith.constant 0 : index
    %29 = vector.load %arg3[%c3, %c0_14, %c0_15] : memref<9x8x128xbf16, #tpu.memory_space<vmem>>, vector<1x8x128xbf16>
    %30 = vector.shape_cast %29 : vector<1x8x128xbf16> to vector<8x128xbf16>
    %cst_16 = arith.constant dense<0.000000e+00> : vector<256x128xf32>
    %31 = tpu.matmul %28, %30, %cst_16 {dimension_numbers = #tpu.dot_dimension_numbers<[1], [0], [0], [1], [0, 0, 1, 1], [], []>} : vector<256x8xbf16>, vector<8x128xbf16>, vector<256x128xf32> -> vector<256x128xf32>
    %32 = arith.addf %22, %31 : vector<256x128xf32>
    %33 = vector.extract_strided_slice %26 {offsets = [0, 1, 0], sizes = [16, 16, 8], strides = [1, 1, 1]} : vector<16x18x8xbf16> to vector<16x16x8xbf16>
    %34 = vector.shape_cast %33 : vector<16x16x8xbf16> to vector<256x8xbf16>
    %c4 = arith.constant 4 : index
    %c0_17 = arith.constant 0 : index
    %c0_18 = arith.constant 0 : index
    %35 = vector.load %arg3[%c4, %c0_17, %c0_18] : memref<9x8x128xbf16, #tpu.memory_space<vmem>>, vector<1x8x128xbf16>
    %36 = vector.shape_cast %35 : vector<1x8x128xbf16> to vector<8x128xbf16>
    %cst_19 = arith.constant dense<0.000000e+00> : vector<256x128xf32>
    %37 = tpu.matmul %34, %36, %cst_19 {dimension_numbers = #tpu.dot_dimension_numbers<[1], [0], [0], [1], [0, 0, 1, 1], [], []>} : vector<256x8xbf16>, vector<8x128xbf16>, vector<256x128xf32> -> vector<256x128xf32>
    %38 = arith.addf %32, %37 : vector<256x128xf32>
    %39 = vector.extract_strided_slice %26 {offsets = [0, 2, 0], sizes = [16, 16, 8], strides = [1, 1, 1]} : vector<16x18x8xbf16> to vector<16x16x8xbf16>
    %40 = vector.shape_cast %39 : vector<16x16x8xbf16> to vector<256x8xbf16>
    %c5 = arith.constant 5 : index
    %c0_20 = arith.constant 0 : index
    %c0_21 = arith.constant 0 : index
    %41 = vector.load %arg3[%c5, %c0_20, %c0_21] : memref<9x8x128xbf16, #tpu.memory_space<vmem>>, vector<1x8x128xbf16>
    %42 = vector.shape_cast %41 : vector<1x8x128xbf16> to vector<8x128xbf16>
    %cst_22 = arith.constant dense<0.000000e+00> : vector<256x128xf32>
    %43 = tpu.matmul %40, %42, %cst_22 {dimension_numbers = #tpu.dot_dimension_numbers<[1], [0], [0], [1], [0, 0, 1, 1], [], []>} : vector<256x8xbf16>, vector<8x128xbf16>, vector<256x128xf32> -> vector<256x128xf32>
    %44 = arith.addf %38, %43 : vector<256x128xf32>
    %c2_i32 = arith.constant 2 : i32
    %45 = arith.addi %1, %c2_i32 : i32
    %c0_23 = arith.constant 0 : index
    %46 = arith.index_cast %45 : i32 to index
    %c0_24 = arith.constant 0 : index
    %c0_25 = arith.constant 0 : index
    %47 = vector.load %arg2[%c0_23, %46, %c0_24, %c0_25] : memref<1x18x18x8xbf16, #tpu.memory_space<vmem>>, vector<1x16x18x8xbf16>
    %48 = vector.shape_cast %47 : vector<1x16x18x8xbf16> to vector<16x18x8xbf16>
    %49 = vector.extract_strided_slice %48 {offsets = [0, 0, 0], sizes = [16, 16, 8], strides = [1, 1, 1]} : vector<16x18x8xbf16> to vector<16x16x8xbf16>
    %50 = vector.shape_cast %49 : vector<16x16x8xbf16> to vector<256x8xbf16>
    %c6 = arith.constant 6 : index
    %c0_26 = arith.constant 0 : index
    %c0_27 = arith.constant 0 : index
    %51 = vector.load %arg3[%c6, %c0_26, %c0_27] : memref<9x8x128xbf16, #tpu.memory_space<vmem>>, vector<1x8x128xbf16>
    %52 = vector.shape_cast %51 : vector<1x8x128xbf16> to vector<8x128xbf16>
    %cst_28 = arith.constant dense<0.000000e+00> : vector<256x128xf32>
    %53 = tpu.matmul %50, %52, %cst_28 {dimension_numbers = #tpu.dot_dimension_numbers<[1], [0], [0], [1], [0, 0, 1, 1], [], []>} : vector<256x8xbf16>, vector<8x128xbf16>, vector<256x128xf32> -> vector<256x128xf32>
    %54 = arith.addf %44, %53 : vector<256x128xf32>
    %55 = vector.extract_strided_slice %48 {offsets = [0, 1, 0], sizes = [16, 16, 8], strides = [1, 1, 1]} : vector<16x18x8xbf16> to vector<16x16x8xbf16>
    %56 = vector.shape_cast %55 : vector<16x16x8xbf16> to vector<256x8xbf16>
    %c7 = arith.constant 7 : index
    %c0_29 = arith.constant 0 : index
    %c0_30 = arith.constant 0 : index
    %57 = vector.load %arg3[%c7, %c0_29, %c0_30] : memref<9x8x128xbf16, #tpu.memory_space<vmem>>, vector<1x8x128xbf16>
    %58 = vector.shape_cast %57 : vector<1x8x128xbf16> to vector<8x128xbf16>
    %cst_31 = arith.constant dense<0.000000e+00> : vector<256x128xf32>
    %59 = tpu.matmul %56, %58, %cst_31 {dimension_numbers = #tpu.dot_dimension_numbers<[1], [0], [0], [1], [0, 0, 1, 1], [], []>} : vector<256x8xbf16>, vector<8x128xbf16>, vector<256x128xf32> -> vector<256x128xf32>
    %60 = arith.addf %54, %59 : vector<256x128xf32>
    %61 = vector.extract_strided_slice %48 {offsets = [0, 2, 0], sizes = [16, 16, 8], strides = [1, 1, 1]} : vector<16x18x8xbf16> to vector<16x16x8xbf16>
    %62 = vector.shape_cast %61 : vector<16x16x8xbf16> to vector<256x8xbf16>
    %c8 = arith.constant 8 : index
    %c0_32 = arith.constant 0 : index
    %c0_33 = arith.constant 0 : index
    %63 = vector.load %arg3[%c8, %c0_32, %c0_33] : memref<9x8x128xbf16, #tpu.memory_space<vmem>>, vector<1x8x128xbf16>
    %64 = vector.shape_cast %63 : vector<1x8x128xbf16> to vector<8x128xbf16>
    %cst_34 = arith.constant dense<0.000000e+00> : vector<256x128xf32>
    %65 = tpu.matmul %62, %64, %cst_34 {dimension_numbers = #tpu.dot_dimension_numbers<[1], [0], [0], [1], [0, 0, 1, 1], [], []>} : vector<256x8xbf16>, vector<8x128xbf16>, vector<256x128xf32> -> vector<256x128xf32>
    %66 = arith.addf %60, %65 : vector<256x128xf32>
    %67 = vector.shape_cast %66 : vector<256x128xf32> to vector<1x16x16x128xf32>
    %68 = arith.truncf %67 : vector<1x16x16x128xf32> to vector<1x16x16x128xbf16>
    %c0_35 = arith.constant 0 : index
    %c0_36 = arith.constant 0 : index
    %c0_37 = arith.constant 0 : index
    %c0_38 = arith.constant 0 : index
    %69 = vector.load %arg4[%c0_35, %c0_36, %c0_37, %c0_38] : memref<1x16x16x128xbf16, #tpu.memory_space<vmem>>, vector<1x16x16x128xbf16>
    tpu.vector_store %arg4[%c0_35, %c0_36, %c0_37, %c0_38], %68 {strides = array<i32>} : memref<1x16x16x128xbf16, #tpu.memory_space<vmem>>, vector<1x16x16x128xbf16>,
    %cst_39 = arith.constant dense<0.000000e+00> : vector<128xf32>
    %70 = vector.multi_reduction <add>, %66, %cst_39 [0] : vector<256x128xf32> to vector<128xf32>
    %71 = vector.shape_cast %70 : vector<128xf32> to vector<1x128xf32>
    %72 = vector.shape_cast %71 : vector<1x128xf32> to vector<1x1x1x128xf32>
    %73 = arith.mulf %66, %66 : vector<256x128xf32>
    %cst_40 = arith.constant dense<0.000000e+00> : vector<128xf32>
    %74 = vector.multi_reduction <add>, %73, %cst_40 [0] : vector<256x128xf32> to vector<128xf32>
    %75 = vector.shape_cast %74 : vector<128xf32> to vector<1x128xf32>
    %76 = vector.shape_cast %75 : vector<1x128xf32> to vector<1x1x1x128xf32>
    %c0_41 = arith.constant 0 : index
    %c0_42 = arith.constant 0 : index
    %c0_43 = arith.constant 0 : index
    %c0_44 = arith.constant 0 : index
    %77 = vector.load %arg5[%c0_41, %c0_42, %c0_43, %c0_44] : memref<1x1x2x128xf32, #tpu.memory_space<vmem>>, vector<1x1x1x128xf32>
    tpu.vector_store %arg5[%c0_41, %c0_42, %c0_43, %c0_44], %72 {strides = array<i32>} : memref<1x1x2x128xf32, #tpu.memory_space<vmem>>, vector<1x1x1x128xf32>,
    %c0_45 = arith.constant 0 : index
    %c0_46 = arith.constant 0 : index
    %c1_47 = arith.constant 1 : index
    %c0_48 = arith.constant 0 : index
    %78 = vector.load %arg5[%c0_45, %c0_46, %c1_47, %c0_48] : memref<1x1x2x128xf32, #tpu.memory_space<vmem>>, vector<1x1x1x128xf32>
    tpu.vector_store %arg5[%c0_45, %c0_46, %c1_47, %c0_48], %76 {strides = array<i32>} : memref<1x1x2x128xf32, #tpu.memory_space<vmem>>, vector<1x1x1x128xf32>,
    return
  }
  func.func @transform_0(%arg0: i32, %arg1: i32) -> (i32, i32, i32, i32) {
    %c0_i32 = arith.constant 0 : i32
    %c0_i32_0 = arith.constant 0 : i32
    %c0_i32_1 = arith.constant 0 : i32
    %c0_i32_2 = arith.constant 0 : i32
    return %arg0, %c0_i32, %c0_i32_0, %c0_i32_1 : i32, i32, i32, i32
  }
  func.func @transform_1(%arg0: i32, %arg1: i32) -> (i32, i32, i32) {
    %c0_i32 = arith.constant 0 : i32
    %c0_i32_0 = arith.constant 0 : i32
    %c0_i32_1 = arith.constant 0 : i32
    %c0_i32_2 = arith.constant 0 : i32
    return %c0_i32, %c0_i32_0, %c0_i32_1 : i32, i32, i32
  }
  func.func @transform_2(%arg0: i32, %arg1: i32) -> (i32, i32, i32, i32) {
    %c0_i32 = arith.constant 0 : i32
    %c0_i32_0 = arith.constant 0 : i32
    %c0_i32_1 = arith.constant 0 : i32
    return %arg0, %arg1, %c0_i32, %c0_i32_0 : i32, i32, i32, i32
  }
  func.func @transform_3(%arg0: i32, %arg1: i32) -> (i32, i32, i32, i32) {
    %c0_i32 = arith.constant 0 : i32
    %c0_i32_0 = arith.constant 0 : i32
    %c0_i32_1 = arith.constant 0 : i32
    return %arg0, %arg1, %c0_i32, %c0_i32_0 : i32, i32, i32, i32
  }
}

module attributes {stable_mosaic.version = 11 : i64} {
  func.func @_bn_relu_kernel(%arg0: i32, %arg1: i32, %arg2: memref<1x16x16x128xbf16, #tpu.memory_space<vmem>>, %arg3: memref<1x128xf32, #tpu.memory_space<vmem>>, %arg4: memref<1x128xf32, #tpu.memory_space<vmem>>, %arg5: memref<1x16x16x128xf32, #tpu.memory_space<vmem>>) attributes {dimension_semantics = [#tpu.dimension_semantics<parallel>, #tpu.dimension_semantics<parallel>], iteration_bounds = array<i64: 2, 1>, scalar_prefetch = 0 : i64, scratch_operands = 0 : i64, tpu.core_type = #tpu.core_type<tc>, window_params = [{transform_indices = @transform_0, window_bounds = array<i64: 1, 16, 16, 128>}, {pipeline_mode = #tpu.pipeline_mode<synchronous>, transform_indices = @transform_1, window_bounds = array<i64: 1, 128>}, {pipeline_mode = #tpu.pipeline_mode<synchronous>, transform_indices = @transform_2, window_bounds = array<i64: 1, 128>}, {transform_indices = @transform_3, window_bounds = array<i64: 1, 16, 16, 128>}]} {
    %c0 = arith.constant 0 : index
    %c0_0 = arith.constant 0 : index
    %c0_1 = arith.constant 0 : index
    %c0_2 = arith.constant 0 : index
    %0 = vector.load %arg2[%c0, %c0_0, %c0_1, %c0_2] : memref<1x16x16x128xbf16, #tpu.memory_space<vmem>>, vector<1x16x16x128xbf16>
    %1 = arith.extf %0 : vector<1x16x16x128xbf16> to vector<1x16x16x128xf32>
    %c0_3 = arith.constant 0 : index
    %c0_4 = arith.constant 0 : index
    %2 = vector.load %arg3[%c0_3, %c0_4] : memref<1x128xf32, #tpu.memory_space<vmem>>, vector<1x128xf32>
    %3 = vector.shape_cast %2 : vector<1x128xf32> to vector<1x1x1x128xf32>
    %4 = vector.broadcast %3 : vector<1x1x1x128xf32> to vector<1x16x16x128xf32>
    %5 = arith.mulf %1, %4 : vector<1x16x16x128xf32>
    %c0_5 = arith.constant 0 : index
    %c0_6 = arith.constant 0 : index
    %6 = vector.load %arg4[%c0_5, %c0_6] : memref<1x128xf32, #tpu.memory_space<vmem>>, vector<1x128xf32>
    %7 = vector.shape_cast %6 : vector<1x128xf32> to vector<1x1x1x128xf32>
    %8 = vector.broadcast %7 : vector<1x1x1x128xf32> to vector<1x16x16x128xf32>
    %9 = arith.addf %5, %8 : vector<1x16x16x128xf32>
    %cst = arith.constant 0.000000e+00 : f32
    %10 = vector.broadcast %cst : f32 to vector<1x16x16x128xf32>
    %11 = arith.maximumf %9, %10 : vector<1x16x16x128xf32>
    %c0_7 = arith.constant 0 : index
    %c0_8 = arith.constant 0 : index
    %c0_9 = arith.constant 0 : index
    %c0_10 = arith.constant 0 : index
    %12 = vector.load %arg5[%c0_7, %c0_8, %c0_9, %c0_10] : memref<1x16x16x128xf32, #tpu.memory_space<vmem>>, vector<1x16x16x128xf32>
    tpu.vector_store %arg5[%c0_7, %c0_8, %c0_9, %c0_10], %11 {strides = array<i32>} : memref<1x16x16x128xf32, #tpu.memory_space<vmem>>, vector<1x16x16x128xf32>,
    return
  }
  func.func @transform_0(%arg0: i32, %arg1: i32) -> (i32, i32, i32, i32) {
    %c0_i32 = arith.constant 0 : i32
    %c0_i32_0 = arith.constant 0 : i32
    %c0_i32_1 = arith.constant 0 : i32
    return %arg0, %arg1, %c0_i32, %c0_i32_0 : i32, i32, i32, i32
  }
  func.func @transform_1(%arg0: i32, %arg1: i32) -> (i32, i32) {
    %c0_i32 = arith.constant 0 : i32
    %c0_i32_0 = arith.constant 0 : i32
    %c0_i32_1 = arith.constant 0 : i32
    return %c0_i32, %c0_i32_0 : i32, i32
  }
  func.func @transform_2(%arg0: i32, %arg1: i32) -> (i32, i32) {
    %c0_i32 = arith.constant 0 : i32
    %c0_i32_0 = arith.constant 0 : i32
    %c0_i32_1 = arith.constant 0 : i32
    return %c0_i32, %c0_i32_0 : i32, i32
  }
  func.func @transform_3(%arg0: i32, %arg1: i32) -> (i32, i32, i32, i32) {
    %c0_i32 = arith.constant 0 : i32
    %c0_i32_0 = arith.constant 0 : i32
    %c0_i32_1 = arith.constant 0 : i32
    return %arg0, %arg1, %c0_i32, %c0_i32_0 : i32, i32, i32, i32
  }
}

</mosaic_0001>

<llo_original>
// kernel: conv_bn_relu.3
$region0: #{conv_bn_relu.3}
  #allocation0 [shape = 'u32[]', space=smem, size = 0x4, offset = 0x4, fixed_abs, tag = 'smem constant byte address 0x4 - core index']
  #allocation1 [shape = 'u32[144,128]{1,0:T(1,128)}', space=vmem, size = 0x12000, scoped, tag = 'internal scratch']
  %s0 = inlined_call_operand.vmem [shape: bf16[2,16,16,128], index: 0, kind: input, shape index: {}]
  %s1 = inlined_call_operand.vmem [shape: f32[1,128], index: 1, kind: input, shape index: {}]
  %s2 = inlined_call_operand.vmem [shape: f32[1,128], index: 2, kind: input, shape index: {}]
  %s3 = inlined_call_operand.vmem [shape: f32[2,16,16,128], index: 3, kind: output, shape index: {}]
  %s4 = sld [smem:[#allocation0]]
  $region45: #{conv_bn_relu.3} parent=0
    _
  %s6 = ssub.s32 1, %s4
  %s7 = scalar_select 0, %s6, %s4
  loop: start=0, step=1, limit=4
  $region2: #{conv_bn_relu.3} parent=0 // loop_pre_header
    _
  $region3: #{conv_bn_relu.3} parent=0 // loop_header
    %s9 = sphi 0, %s13
    %p10 = scmp.ge.s32.totalorder %s9, 4
    %s16 = sphi 0, %s28
    %s17 = sphi 0, %s24
    %s18 = sphi 0, %s16
    %s19 = sphi 0, %s17
    %s20 = sphi 0, %s18
    %s21 = sphi 0, %s19
    %s33 = sphi 0, %s35
    %s36 = sphi 0, %s33
    %s37 = sphi 0, %s36
    %s53 = sphi 0, %s37
    %s57 = sphi 0, %s57
    %s59 = sphi 0, %s57
    %s60 = sphi 0, %s59
    %s74 = sphi 0, %s60
    %s78 = sphi 0, %s78
    %s80 = sphi 0, %s78
    %s81 = sphi 0, %s80
    %s95 = sphi 0, %s81
    %s103 = sphi 0, %s105
    %s106 = sphi 0, %s103
    %s107 = sphi 0, %s106
    %s123 = sphi 0, %s107
  $region4: #{conv_bn_relu.3} parent=0 // loop_header_branch
    %12 = sbr.rel (%p10) target = $region8
  $region5: #{conv_bn_relu.3} parent=0 // loop_body
    %s14 = ssub.s32 %s9, 1
    %s15 = ssub.s32 %s9, 2
    %s22 = sadd.s32 1, %s17
    %p23 = scmp.ge.s32.totalorder %s22, 1
    %s24 = scalar_select %p23, 0, %s22
    %s25 = sadd.s32 1, %s16
    %s26 = scalar_select %p23, %s25, %s16
    %p27 = scmp.ge.s32.totalorder %s26, 2
    %s28 = scalar_select %p27, 0, %s26
    %s29 = ssub.s32 %s16, %s28
    %s30 = ssub.s32 %s17, %s24
    %s31 = sor.u32 %s29, %s30
    %p32 = scmp.eq.s32.totalorder %s31, 0
    %s34 = sadd.s32 %s33, 1
    %s35 = scalar_select %p32, %s33, %s34
    %p38 = pneg %p32
    %p39 = scmp.eq.s32.totalorder %s9, 1
    %p40 = por %p38, %p39
    %p41 = scmp.ne.s32.totalorder %s33, %s36
    %p42 = scmp.eq.s32.totalorder %s9, 0
    %p43 = por %p41, %p42
    %p44 = scmp.ne.s32.totalorder %s33, %s36
    %p45 = scmp.eq.s32.totalorder %s14, 1
    %p46 = por %p44, %p45
    %p47 = scmp.ne.s32.totalorder %s36, %s37
    %p48 = scmp.eq.s32.totalorder %s14, 0
    %p49 = por %p47, %p48
    %p50 = scmp.ne.s32.totalorder %s36, %s37
    %p51 = scmp.eq.s32.totalorder %s15, 1
    %p52 = por %p50, %p51
    %p54 = scmp.ne.s32.totalorder %s37, %s53
    %p55 = scmp.eq.s32.totalorder %s15, 0
    %p56 = por %p54, %p55
    %s58 = sadd.s32 %s57, 1
    %p61 = scmp.eq.s32.totalorder %s9, 1
    %p62 = scmp.ne.s32.totalorder %s57, %s59
    %p63 = scmp.eq.s32.totalorder %s9, 0
    %p64 = por %p62, %p63
    %p65 = scmp.ne.s32.totalorder %s57, %s59
    %p66 = scmp.eq.s32.totalorder %s14, 1
    %p67 = por %p65, %p66
    %p68 = scmp.ne.s32.totalorder %s59, %s60
    %p69 = scmp.eq.s32.totalorder %s14, 0
    %p70 = por %p68, %p69
    %p71 = scmp.ne.s32.totalorder %s59, %s60
    %p72 = scmp.eq.s32.totalorder %s15, 1
    %p73 = por %p71, %p72
    %p75 = scmp.ne.s32.totalorder %s60, %s74
    %p76 = scmp.eq.s32.totalorder %s15, 0
    %p77 = por %p75, %p76
    %s79 = sadd.s32 %s78, 1
    %p82 = scmp.eq.s32.totalorder %s9, 1
    %p83 = scmp.ne.s32.totalorder %s78, %s80
    %p84 = scmp.eq.s32.totalorder %s9, 0
    %p85 = por %p83, %p84
    %p86 = scmp.ne.s32.totalorder %s78, %s80
    %p87 = scmp.eq.s32.totalorder %s14, 1
    %p88 = por %p86, %p87
    %p89 = scmp.ne.s32.totalorder %s80, %s81
    %p90 = scmp.eq.s32.totalorder %s14, 0
    %p91 = por %p89, %p90
    %p92 = scmp.ne.s32.totalorder %s80, %s81
    %p93 = scmp.eq.s32.totalorder %s15, 1
    %p94 = por %p92, %p93
    %p96 = scmp.ne.s32.totalorder %s81, %s95
    %p97 = scmp.eq.s32.totalorder %s15, 0
    %p98 = por %p96, %p97
    %s99 = ssub.s32 %s16, %s28
    %s100 = ssub.s32 %s17, %s24
    %s101 = sor.u32 %s99, %s100
    %p102 = scmp.eq.s32.totalorder %s101, 0
    %s104 = sadd.s32 %s103, 1
    %s105 = scalar_select %p102, %s103, %s104
    %p108 = pneg %p102
    %p109 = scmp.eq.s32.totalorder %s9, 1
    %p110 = por %p108, %p109
    %p111 = scmp.ne.s32.totalorder %s103, %s106
    %p112 = scmp.eq.s32.totalorder %s9, 0
    %p113 = por %p111, %p112
    %p114 = scmp.ne.s32.totalorder %s103, %s106
    %p115 = scmp.eq.s32.totalorder %s14, 1
    %p116 = por %p114, %p115
    %p117 = scmp.ne.s32.totalorder %s106, %s107
    %p118 = scmp.eq.s32.totalorder %s14, 0
    %p119 = por %p117, %p118
    %p120 = scmp.ne.s32.totalorder %s106, %s107
    %p121 = scmp.eq.s32.totalorder %s15, 1
    %p122 = por %p120, %p121
    %p124 = scmp.ne.s32.totalorder %s107, %s123
    %p125 = scmp.eq.s32.totalorder %s15, 0
    %p126 = por %p124, %p125
    %p127 = scmp.le.s32.totalorder 1, %s9
    %p128 = scmp.lt.s32.totalorder %s9, 3
    %p129 = pnand %p127, %p128
    %p130 = pneg %p129
    // Predicated region
    $region9: #{conv_bn_relu.3} parent=5 // pred_check
      _
    $region10: #{conv_bn_relu.3} parent=5 // pred_check_branch
      %132 = sbr.rel (%p129) target = $region12
    $region11: #{conv_bn_relu.3} parent=5 // pred_region
      %s133 = ssub.s32 %s9, 1
      // Predicated region
      $region13: #{conv_bn_relu.3} parent=11 // pred_check
        %p134 = pneg %p70
      $region14: #{conv_bn_relu.3} parent=11 // pred_check_branch
        %136 = sbr.rel (%p134) target = $region16
      $region15: #{conv_bn_relu.3} parent=11 // pred_region
        _
      $region16: #{conv_bn_relu.3} parent=11 // pred_fallthru
        _
      // Predicated region
      $region17: #{conv_bn_relu.3} parent=11 // pred_check
        %p137 = pneg %p91
      $region18: #{conv_bn_relu.3} parent=11 // pred_check_branch
        %139 = sbr.rel (%p137) target = $region20
      $region19: #{conv_bn_relu.3} parent=11 // pred_region
        _
      $region20: #{conv_bn_relu.3} parent=11 // pred_fallthru
        _
    $region12: #{conv_bn_relu.3} parent=5 // pred_fallthru
      _
    %p140 = scmp.lt.s32.totalorder %s9, 2
    // Predicated region
    $region21: #{conv_bn_relu.3} parent=5 // pred_check
      %p141 = pneg %p140
    $region22: #{conv_bn_relu.3} parent=5 // pred_check_branch
      %143 = sbr.rel (%p141) target = $region24
    $region23: #{conv_bn_relu.3} parent=5 // pred_region
      // Predicated region
      $region25: #{conv_bn_relu.3} parent=23 // pred_check
        %p144 = pneg %p43
      $region26: #{conv_bn_relu.3} parent=23 // pred_check_branch
        %146 = sbr.rel (%p144) target = $region28
      $region27: #{conv_bn_relu.3} parent=23 // pred_region
        %s147 = smul.u32 16, %s17
        %p148 = scmp.lt.s32.totalorder %s16, 1
        %s149 = scalar_select %p148, %s16, 1
        %p150 = scmp.lt.s32.totalorder %s147, 15
        %s151 = scalar_select %p150, %s147, 15
        %s152 = smul.addr %s151, 2
        %s153 = smul.addr %s149, 32
        %s154 = sadd.s32 %s152, %s153
        %s155 = smul.addr %s154, 4
        %s156 = scalar_lea.vmem %s0, %s155
        %s157 = smul.u32 16, %s17
      $region28: #{conv_bn_relu.3} parent=23 // pred_fallthru
        _
    $region24: #{conv_bn_relu.3} parent=5 // pred_fallthru
      _
    %p158 = scmp.le.s32.totalorder 1, %s9
    %p159 = scmp.lt.s32.totalorder %s9, 3
    %p160 = pnand %p158, %p159
    %p161 = pneg %p160
    // Predicated region
    $region29: #{conv_bn_relu.3} parent=5 // pred_check
      _
    $region30: #{conv_bn_relu.3} parent=5 // pred_check_branch
      %163 = sbr.rel (%p160) target = $region32
    $region31: #{conv_bn_relu.3} parent=5 // pred_region
      %s164 = ssub.s32 %s9, 1
      %s165 = smul.u32 16, %s19
      %p166 = scmp.lt.s32.totalorder %s18, 1
      %s167 = scalar_select %p166, %s18, 1
      %p168 = scmp.lt.s32.totalorder %s165, 15
      %s169 = scalar_select %p168, %s165, 15
      %s170 = smul.addr %s169, 2
      %s171 = smul.addr %s167, 32
      %s172 = sadd.s32 %s170, %s171
      %s173 = smul.addr %s172, 4
      %s174 = scalar_lea.vmem %s0, %s173
      %p175 = pneg %p49
      %p176 = pneg %p46
      %p177 = pneg %p70
      %p178 = pneg %p67
      %p179 = pneg %p91
      %p180 = pneg %p88
      %p181 = pneg %p119
      %p182 = pneg %p116
      %s183 = smul.u32 16, %s19
      %p184 = scmp.lt.s32.totalorder %s18, 1
      %s185 = scalar_select %p184, %s18, 1
      %p186 = scmp.lt.s32.totalorder %s183, 15
      %s187 = scalar_select %p186, %s183, 15
      %s188 = smul.addr %s187, 2
      %s189 = smul.addr %s185, 32
      %s190 = sadd.s32 %s188, %s189
      %s191 = smul.addr %s190, 8
      %s192 = scalar_lea.vmem %s3, %s191
      %s193 = smul.u32 16, %s19
      %p194 = scmp.lt.s32.totalorder %s18, 1
      %s195 = scalar_select %p194, %s18, 1
      %p196 = scmp.lt.s32.totalorder %s193, 15
      %s197 = scalar_select %p196, %s193, 15
      %s198 = smul.addr %s197, 2
      %s199 = smul.addr %s195, 32
      %s200 = sadd.s32 %s198, %s199
      %s201 = smul.addr %s200, 4
      %s202 = scalar_lea.vmem %s0, %s201
      %s203 = smul.u32 16, %s19
      %s204 = smul.u32 16, %s19
      %p205 = scmp.lt.s32.totalorder %s18, 1
      %s206 = scalar_select %p205, %s18, 1
      %p207 = scmp.lt.s32.totalorder %s204, 15
      %s208 = scalar_select %p207, %s204, 15
      %s209 = smul.addr %s208, 2
      %s210 = smul.addr %s206, 32
      %s211 = sadd.s32 %s209, %s210
      %s212 = smul.addr %s211, 8
      %s213 = scalar_lea.vmem %s3, %s212
      %s214 = smul.u32 16, %s19
      %v215 = vld [vmem:[%s202] sm:$0xf]
      %v216 = vld [vmem:[%s202 + $0x4] sm:$0xf]
      %v217 = vld [vmem:[%s202 + $0x8] sm:$0xf]
      %v218 = vld [vmem:[%s202 + $0xc] sm:$0xf]
      %v219 = vld [vmem:[%s202 + $0x10] sm:$0xf]
      %v220 = vld [vmem:[%s202 + $0x14] sm:$0xf]
      %v221 = vld [vmem:[%s202 + $0x18] sm:$0xf]
      %v222 = vld [vmem:[%s202 + $0x1c] sm:$0xf]
      %v223 = vld [vmem:[%s202 + $0x20] sm:$0xf]
      %v224 = vld [vmem:[%s202 + $0x24] sm:$0xf]
      %v225 = vld [vmem:[%s202 + $0x28] sm:$0xf]
      %v226 = vld [vmem:[%s202 + $0x2c] sm:$0xf]
      %v227 = vld [vmem:[%s202 + $0x30] sm:$0xf]
      %v228 = vld [vmem:[%s202 + $0x34] sm:$0xf]
      %v229 = vld [vmem:[%s202 + $0x38] sm:$0xf]
      %v230 = vld [vmem:[%s202 + $0x3c] sm:$0xf]
      %v231 = vld [vmem:[%s202 + $0x40] sm:$0xf]
      %v232 = vld [vmem:[%s202 + $0x44] sm:$0xf]
      %v233 = vld [vmem:[%s202 + $0x48] sm:$0xf]
      %v234 = vld [vmem:[%s202 + $0x4c] sm:$0xf]
      %v235 = vld [vmem:[%s202 + $0x50] sm:$0xf]
      %v236 = vld [vmem:[%s202 + $0x54] sm:$0xf]
      %v237 = vld [vmem:[%s202 + $0x58] sm:$0xf]
      %v238 = vld [vmem:[%s202 + $0x5c] sm:$0xf]
      %v239 = vld [vmem:[%s202 + $0x60] sm:$0xf]
      %v240 = vld [vmem:[%s202 + $0x64] sm:$0xf]
      %v241 = vld [vmem:[%s202 + $0x68] sm:$0xf]
      %v242 = vld [vmem:[%s202 + $0x6c] sm:$0xf]
      %v243 = vld [vmem:[%s202 + $0x70] sm:$0xf]
      %v244 = vld [vmem:[%s202 + $0x74] sm:$0xf]
      %v245 = vld [vmem:[%s202 + $0x78] sm:$0xf]
      %v246 = vld [vmem:[%s202 + $0x7c] sm:$0xf]
      %v247 = vunpack.c.l.bf16 %v215
      %v248 = vunpack.c.l.bf16 %v216
      %v249 = vunpack.c.l.bf16 %v217
      %v250 = vunpack.c.l.bf16 %v218
      %v251 = vunpack.c.l.bf16 %v219
      %v252 = vunpack.c.l.bf16 %v220
      %v253 = vunpack.c.l.bf16 %v221
      %v254 = vunpack.c.l.bf16 %v222
      %v255 = vunpack.c.l.bf16 %v223
      %v256 = vunpack.c.l.bf16 %v224
      %v257 = vunpack.c.l.bf16 %v225
      %v258 = vunpack.c.l.bf16 %v226
      %v259 = vunpack.c.l.bf16 %v227
      %v260 = vunpack.c.l.bf16 %v228
      %v261 = vunpack.c.l.bf16 %v229
      %v262 = vunpack.c.l.bf16 %v230
      %v263 = vunpack.c.l.bf16 %v231
      %v264 = vunpack.c.l.bf16 %v232
      %v265 = vunpack.c.l.bf16 %v233
      %v266 = vunpack.c.l.bf16 %v234
      %v267 = vunpack.c.l.bf16 %v235
      %v268 = vunpack.c.l.bf16 %v236
      %v269 = vunpack.c.l.bf16 %v237
      %v270 = vunpack.c.l.bf16 %v238
      %v271 = vunpack.c.l.bf16 %v239
      %v272 = vunpack.c.l.bf16 %v240
      %v273 = vunpack.c.l.bf16 %v241
      %v274 = vunpack.c.l.bf16 %v242
      %v275 = vunpack.c.l.bf16 %v243
      %v276 = vunpack.c.l.bf16 %v244
      %v277 = vunpack.c.l.bf16 %v245
      %v278 = vunpack.c.l.bf16 %v246
      %v279 = vld [vmem:[%s1] sm:$0x1]
      %v281 = vlaneseq
      %v282 = vshrl.u32 %v281, 7
      %v283 = vsub.s32 0, %v282
      %v284 = vrot.slane %v279, %v283
      %v286 = vmul.f32 %v247, %v284
      %v287 = vmul.f32 %v248, %v284
      %v288 = vmul.f32 %v249, %v284
      %v289 = vmul.f32 %v250, %v284
      %v290 = vmul.f32 %v251, %v284
      %v291 = vmul.f32 %v252, %v284
      %v292 = vmul.f32 %v253, %v284
      %v293 = vmul.f32 %v254, %v284
      %v294 = vmul.f32 %v255, %v284
      %v295 = vmul.f32 %v256, %v284
      %v296 = vmul.f32 %v257, %v284
      %v297 = vmul.f32 %v258, %v284
      %v298 = vmul.f32 %v259, %v284
      %v299 = vmul.f32 %v260, %v284
      %v300 = vmul.f32 %v261, %v284
      %v301 = vmul.f32 %v262, %v284
      %v302 = vmul.f32 %v263, %v284
      %v303 = vmul.f32 %v264, %v284
      %v304 = vmul.f32 %v265, %v284
      %v305 = vmul.f32 %v266, %v284
      %v306 = vmul.f32 %v267, %v284
      %v307 = vmul.f32 %v268, %v284
      %v308 = vmul.f32 %v269, %v284
      %v309 = vmul.f32 %v270, %v284
      %v310 = vmul.f32 %v271, %v284
      %v311 = vmul.f32 %v272, %v284
      %v312 = vmul.f32 %v273, %v284
      %v313 = vmul.f32 %v274, %v284
      %v314 = vmul.f32 %v275, %v284
      %v315 = vmul.f32 %v276, %v284
      %v316 = vmul.f32 %v277, %v284
      %v317 = vmul.f32 %v278, %v284
      %v318 = vld [vmem:[%s2] sm:$0x1]
      %v320 = vlaneseq
      %v321 = vshrl.u32 %v320, 7
      %v322 = vsub.s32 0, %v321
      %v323 = vrot.slane %v318, %v322
      %v325 = vadd.f32 %v286, %v323
      %v326 = vadd.f32 %v287, %v323
      %v327 = vadd.f32 %v288, %v323
      %v328 = vadd.f32 %v289, %v323
      %v329 = vadd.f32 %v290, %v323
      %v330 = vadd.f32 %v291, %v323
      %v331 = vadd.f32 %v292, %v323
      %v332 = vadd.f32 %v293, %v323
      %v333 = vadd.f32 %v294, %v323
      %v334 = vadd.f32 %v295, %v323
      %v335 = vadd.f32 %v296, %v323
      %v336 = vadd.f32 %v297, %v323
      %v337 = vadd.f32 %v298, %v323
      %v338 = vadd.f32 %v299, %v323
      %v339 = vadd.f32 %v300, %v323
      %v340 = vadd.f32 %v301, %v323
      %v341 = vadd.f32 %v302, %v323
      %v342 = vadd.f32 %v303, %v323
      %v343 = vadd.f32 %v304, %v323
      %v344 = vadd.f32 %v305, %v323
      %v345 = vadd.f32 %v306, %v323
      %v346 = vadd.f32 %v307, %v323
      %v347 = vadd.f32 %v308, %v323
      %v348 = vadd.f32 %v309, %v323
      %v349 = vadd.f32 %v310, %v323
      %v350 = vadd.f32 %v311, %v323
      %v351 = vadd.f32 %v312, %v323
      %v352 = vadd.f32 %v313, %v323
      %v353 = vadd.f32 %v314, %v323
      %v354 = vadd.f32 %v315, %v323
      %v355 = vadd.f32 %v316, %v323
      %v356 = vadd.f32 %v317, %v323
      %v357 = vmax.f32 %v325, 0.0
      %v358 = vmax.f32 %v326, 0.0
      %v359 = vmax.f32 %v327, 0.0
      %v360 = vmax.f32 %v328, 0.0
      %v361 = vmax.f32 %v329, 0.0
      %v362 = vmax.f32 %v330, 0.0
      %v363 = vmax.f32 %v331, 0.0
      %v364 = vmax.f32 %v332, 0.0
      %v365 = vmax.f32 %v333, 0.0
      %v366 = vmax.f32 %v334, 0.0
      %v367 = vmax.f32 %v335, 0.0
      %v368 = vmax.f32 %v336, 0.0
      %v369 = vmax.f32 %v337, 0.0
      %v370 = vmax.f32 %v338, 0.0
      %v371 = vmax.f32 %v339, 0.0
      %v372 = vmax.f32 %v340, 0.0
      %v373 = vmax.f32 %v341, 0.0
      %v374 = vmax.f32 %v342, 0.0
      %v375 = vmax.f32 %v343, 0.0
      %v376 = vmax.f32 %v344, 0.0
      %v377 = vmax.f32 %v345, 0.0
      %v378 = vmax.f32 %v346, 0.0
      %v379 = vmax.f32 %v347, 0.0
      %v380 = vmax.f32 %v348, 0.0
      %v381 = vmax.f32 %v349, 0.0
      %v382 = vmax.f32 %v350, 0.0
      %v383 = vmax.f32 %v351, 0.0
      %v384 = vmax.f32 %v352, 0.0
      %v385 = vmax.f32 %v353, 0.0
      %v386 = vmax.f32 %v354, 0.0
      %v387 = vmax.f32 %v355, 0.0
      %v388 = vmax.f32 %v356, 0.0
      %389 = vst [vmem:[%s213] sm:$0xff] %v357
      %390 = vst [vmem:[%s213 + $0x8] sm:$0xff] %v358
      %391 = vst [vmem:[%s213 + $0x10] sm:$0xff] %v359
      %392 = vst [vmem:[%s213 + $0x18] sm:$0xff] %v360
      %393 = vst [vmem:[%s213 + $0x20] sm:$0xff] %v361
      %394 = vst [vmem:[%s213 + $0x28] sm:$0xff] %v362
      %395 = vst [vmem:[%s213 + $0x30] sm:$0xff] %v363
      %396 = vst [vmem:[%s213 + $0x38] sm:$0xff] %v364
      %397 = vst [vmem:[%s213 + $0x40] sm:$0xff] %v365
      %398 = vst [vmem:[%s213 + $0x48] sm:$0xff] %v366
      %399 = vst [vmem:[%s213 + $0x50] sm:$0xff] %v367
      %400 = vst [vmem:[%s213 + $0x58] sm:$0xff] %v368
      %401 = vst [vmem:[%s213 + $0x60] sm:$0xff] %v369
      %402 = vst [vmem:[%s213 + $0x68] sm:$0xff] %v370
      %403 = vst [vmem:[%s213 + $0x70] sm:$0xff] %v371
      %404 = vst [vmem:[%s213 + $0x78] sm:$0xff] %v372
      %405 = vst [vmem:[%s213 + $0x80] sm:$0xff] %v373
      %406 = vst [vmem:[%s213 + $0x88] sm:$0xff] %v374
      %407 = vst [vmem:[%s213 + $0x90] sm:$0xff] %v375
      %408 = vst [vmem:[%s213 + $0x98] sm:$0xff] %v376
      %409 = vst [vmem:[%s213 + $0xa0] sm:$0xff] %v377
      %410 = vst [vmem:[%s213 + $0xa8] sm:$0xff] %v378
      %411 = vst [vmem:[%s213 + $0xb0] sm:$0xff] %v379
      %412 = vst [vmem:[%s213 + $0xb8] sm:$0xff] %v380
      %413 = vst [vmem:[%s213 + $0xc0] sm:$0xff] %v381
      %414 = vst [vmem:[%s213 + $0xc8] sm:$0xff] %v382
      %415 = vst [vmem:[%s213 + $0xd0] sm:$0xff] %v383
      %416 = vst [vmem:[%s213 + $0xd8] sm:$0xff] %v384
      %417 = vst [vmem:[%s213 + $0xe0] sm:$0xff] %v385
      %418 = vst [vmem:[%s213 + $0xe8] sm:$0xff] %v386
      %419 = vst [vmem:[%s213 + $0xf0] sm:$0xff] %v387
      %420 = vst [vmem:[%s213 + $0xf8] sm:$0xff] %v388
      %s421 = smul.u32 16, %s19
      %p422 = scmp.lt.s32.totalorder %s18, 1
      %s423 = scalar_select %p422, %s18, 1
      %p424 = scmp.lt.s32.totalorder %s421, 15
      %s425 = scalar_select %p424, %s421, 15
      %s426 = smul.addr %s425, 2
      %s427 = smul.addr %s423, 32
      %s428 = sadd.s32 %s426, %s427
      %s429 = smul.addr %s428, 8
      %s430 = scalar_lea.vmem %s3, %s429
      // Predicated region
      $region33: #{conv_bn_relu.3} parent=31 // pred_check
        %p431 = pneg %p116
      $region34: #{conv_bn_relu.3} parent=31 // pred_check_branch
        %433 = sbr.rel (%p431) target = $region36
      $region35: #{conv_bn_relu.3} parent=31 // pred_region
        %s434 = smul.u32 16, %s19
      $region36: #{conv_bn_relu.3} parent=31 // pred_fallthru
        _
    $region32: #{conv_bn_relu.3} parent=5 // pred_fallthru
      _
    %p435 = scmp.le.s32.totalorder 2, %s9
    // Predicated region
    $region37: #{conv_bn_relu.3} parent=5 // pred_check
      %p436 = pneg %p435
    $region38: #{conv_bn_relu.3} parent=5 // pred_check_branch
      %438 = sbr.rel (%p436) target = $region40
    $region39: #{conv_bn_relu.3} parent=5 // pred_region
      %s439 = ssub.s32 %s9, 2
      // Predicated region
      $region41: #{conv_bn_relu.3} parent=39 // pred_check
        %p440 = pneg %p122
      $region42: #{conv_bn_relu.3} parent=39 // pred_check_branch
        %442 = sbr.rel (%p440) target = $region44
      $region43: #{conv_bn_relu.3} parent=39 // pred_region
        %s443 = smul.u32 16, %s21
        %p444 = scmp.lt.s32.totalorder %s20, 1
        %s445 = scalar_select %p444, %s20, 1
        %p446 = scmp.lt.s32.totalorder %s443, 15
        %s447 = scalar_select %p446, %s443, 15
        %s448 = smul.addr %s447, 2
        %s449 = smul.addr %s445, 32
        %s450 = sadd.s32 %s448, %s449
        %s451 = smul.addr %s450, 8
        %s452 = scalar_lea.vmem %s3, %s451
      $region44: #{conv_bn_relu.3} parent=39 // pred_fallthru
        _
    $region40: #{conv_bn_relu.3} parent=5 // pred_fallthru
      _
  $region6: #{conv_bn_relu.3} parent=0 // loop_footer
    %s13 = sadd.s32 1, %s9
  $region7: #{conv_bn_relu.3} parent=0 // loop_footer_branch
    %8 = sbr.rel target = $region3
  $region8: #{conv_bn_relu.3} parent=0 // loop_exit
    _

// kernel: conv_bn_relu.2
$region0: #{conv_bn_relu.2}
  #allocation0 [shape = 'u32[]', space=smem, size = 0x4, offset = 0x4, fixed_abs, tag = 'smem constant byte address 0x4 - core index']
  #allocation1 [shape = 'u32[144,128]{1,0:T(1,128)}', space=vmem, size = 0x12000, scoped, tag = 'internal scratch']
  %s0 = inlined_call_operand.vmem [shape: bf16[2,18,18,8], index: 0, kind: input, shape index: {}]
  %s1 = inlined_call_operand.vmem [shape: bf16[9,8,128], index: 1, kind: input, shape index: {}]
  %s2 = inlined_call_operand.vmem [shape: bf16[2,16,16,128], index: 2, kind: output, shape index: {0}]
  %s3 = inlined_call_operand.vmem [shape: f32[2,1,2,128], index: 3, kind: output, shape index: {1}]
  %4 = xla_tuple %s2, %s3
  %s5 = sld [smem:[#allocation0]]
  $region49: #{conv_bn_relu.2} parent=0
    _
  %s7 = ssub.s32 1, %s5
  %s8 = scalar_select 0, %s7, %s5
  loop: start=0, step=1, limit=4
  $region2: #{conv_bn_relu.2} parent=0 // loop_pre_header
    _
  $region3: #{conv_bn_relu.2} parent=0 // loop_header
    %s10 = sphi 0, %s14
    %p11 = scmp.ge.s32.totalorder %s10, 4
    %s17 = sphi 0, %s29
    %s18 = sphi 0, %s25
    %s19 = sphi 0, %s17
    %s20 = sphi 0, %s18
    %s21 = sphi 0, %s19
    %s22 = sphi 0, %s20
    %s32 = sphi 0, %s34
    %s35 = sphi 0, %s32
    %s36 = sphi 0, %s35
    %s52 = sphi 0, %s36
    %s56 = sphi 0, %s56
    %s58 = sphi 0, %s56
    %s59 = sphi 0, %s58
    %s73 = sphi 0, %s59
    %s81 = sphi 0, %s83
    %s84 = sphi 0, %s81
    %s85 = sphi 0, %s84
    %s101 = sphi 0, %s85
    %s109 = sphi 0, %s111
    %s112 = sphi 0, %s109
    %s113 = sphi 0, %s112
    %s129 = sphi 0, %s113
  $region4: #{conv_bn_relu.2} parent=0 // loop_header_branch
    %13 = sbr.rel (%p11) target = $region8
  $region5: #{conv_bn_relu.2} parent=0 // loop_body
    %s15 = ssub.s32 %s10, 1
    %s16 = ssub.s32 %s10, 2
    %s23 = sadd.s32 1, %s18
    %p24 = scmp.ge.s32.totalorder %s23, 1
    %s25 = scalar_select %p24, 0, %s23
    %s26 = sadd.s32 1, %s17
    %s27 = scalar_select %p24, %s26, %s17
    %p28 = scmp.ge.s32.totalorder %s27, 2
    %s29 = scalar_select %p28, 0, %s27
    %s30 = ssub.s32 %s17, %s29
    %p31 = scmp.eq.s32.totalorder %s30, 0
    %s33 = sadd.s32 %s32, 1
    %s34 = scalar_select %p31, %s32, %s33
    %p37 = pneg %p31
    %p38 = scmp.eq.s32.totalorder %s10, 1
    %p39 = por %p37, %p38
    %p40 = scmp.ne.s32.totalorder %s32, %s35
    %p41 = scmp.eq.s32.totalorder %s10, 0
    %p42 = por %p40, %p41
    %p43 = scmp.ne.s32.totalorder %s32, %s35
    %p44 = scmp.eq.s32.totalorder %s15, 1
    %p45 = por %p43, %p44
    %p46 = scmp.ne.s32.totalorder %s35, %s36
    %p47 = scmp.eq.s32.totalorder %s15, 0
    %p48 = por %p46, %p47
    %p49 = scmp.ne.s32.totalorder %s35, %s36
    %p50 = scmp.eq.s32.totalorder %s16, 1
    %p51 = por %p49, %p50
    %p53 = scmp.ne.s32.totalorder %s36, %s52
    %p54 = scmp.eq.s32.totalorder %s16, 0
    %p55 = por %p53, %p54
    %s57 = sadd.s32 %s56, 1
    %p60 = scmp.eq.s32.totalorder %s10, 1
    %p61 = scmp.ne.s32.totalorder %s56, %s58
    %p62 = scmp.eq.s32.totalorder %s10, 0
    %p63 = por %p61, %p62
    %p64 = scmp.ne.s32.totalorder %s56, %s58
    %p65 = scmp.eq.s32.totalorder %s15, 1
    %p66 = por %p64, %p65
    %p67 = scmp.ne.s32.totalorder %s58, %s59
    %p68 = scmp.eq.s32.totalorder %s15, 0
    %p69 = por %p67, %p68
    %p70 = scmp.ne.s32.totalorder %s58, %s59
    %p71 = scmp.eq.s32.totalorder %s16, 1
    %p72 = por %p70, %p71
    %p74 = scmp.ne.s32.totalorder %s59, %s73
    %p75 = scmp.eq.s32.totalorder %s16, 0
    %p76 = por %p74, %p75
    %s77 = ssub.s32 %s17, %s29
    %s78 = ssub.s32 %s18, %s25
    %s79 = sor.u32 %s77, %s78
    %p80 = scmp.eq.s32.totalorder %s79, 0
    %s82 = sadd.s32 %s81, 1
    %s83 = scalar_select %p80, %s81, %s82
    %p86 = pneg %p80
    %p87 = scmp.eq.s32.totalorder %s10, 1
    %p88 = por %p86, %p87
    %p89 = scmp.ne.s32.totalorder %s81, %s84
    %p90 = scmp.eq.s32.totalorder %s10, 0
    %p91 = por %p89, %p90
    %p92 = scmp.ne.s32.totalorder %s81, %s84
    %p93 = scmp.eq.s32.totalorder %s15, 1
    %p94 = por %p92, %p93
    %p95 = scmp.ne.s32.totalorder %s84, %s85
    %p96 = scmp.eq.s32.totalorder %s15, 0
    %p97 = por %p95, %p96
    %p98 = scmp.ne.s32.totalorder %s84, %s85
    %p99 = scmp.eq.s32.totalorder %s16, 1
    %p100 = por %p98, %p99
    %p102 = scmp.ne.s32.totalorder %s85, %s101
    %p103 = scmp.eq.s32.totalorder %s16, 0
    %p104 = por %p102, %p103
    %s105 = ssub.s32 %s17, %s29
    %s106 = ssub.s32 %s18, %s25
    %s107 = sor.u32 %s105, %s106
    %p108 = scmp.eq.s32.totalorder %s107, 0
    %s110 = sadd.s32 %s109, 1
    %s111 = scalar_select %p108, %s109, %s110
    %p114 = pneg %p108
    %p115 = scmp.eq.s32.totalorder %s10, 1
    %p116 = por %p114, %p115
    %p117 = scmp.ne.s32.totalorder %s109, %s112
    %p118 = scmp.eq.s32.totalorder %s10, 0
    %p119 = por %p117, %p118
    %p120 = scmp.ne.s32.totalorder %s109, %s112
    %p121 = scmp.eq.s32.totalorder %s15, 1
    %p122 = por %p120, %p121
    %p123 = scmp.ne.s32.totalorder %s112, %s113
    %p124 = scmp.eq.s32.totalorder %s15, 0
    %p125 = por %p123, %p124
    %p126 = scmp.ne.s32.totalorder %s112, %s113
    %p127 = scmp.eq.s32.totalorder %s16, 1
    %p128 = por %p126, %p127
    %p130 = scmp.ne.s32.totalorder %s113, %s129
    %p131 = scmp.eq.s32.totalorder %s16, 0
    %p132 = por %p130, %p131
    %p133 = scmp.le.s32.totalorder 1, %s10
    %p134 = scmp.lt.s32.totalorder %s10, 3
    %p135 = pnand %p133, %p134
    %p136 = pneg %p135
    // Predicated region
    $region9: #{conv_bn_relu.2} parent=5 // pred_check
      _
    $region10: #{conv_bn_relu.2} parent=5 // pred_check_branch
      %138 = sbr.rel (%p135) target = $region12
    $region11: #{conv_bn_relu.2} parent=5 // pred_region
      %s139 = ssub.s32 %s10, 1
      // Predicated region
      $region13: #{conv_bn_relu.2} parent=11 // pred_check
        %p140 = pneg %p69
      $region14: #{conv_bn_relu.2} parent=11 // pred_check_branch
        %142 = sbr.rel (%p140) target = $region16
      $region15: #{conv_bn_relu.2} parent=11 // pred_region
        _
      $region16: #{conv_bn_relu.2} parent=11 // pred_fallthru
        _
    $region12: #{conv_bn_relu.2} parent=5 // pred_fallthru
      _
    %p143 = scmp.lt.s32.totalorder %s10, 2
    // Predicated region
    $region17: #{conv_bn_relu.2} parent=5 // pred_check
      %p144 = pneg %p143
    $region18: #{conv_bn_relu.2} parent=5 // pred_check_branch
      %146 = sbr.rel (%p144) target = $region20
    $region19: #{conv_bn_relu.2} parent=5 // pred_region
      // Predicated region
      $region21: #{conv_bn_relu.2} parent=19 // pred_check
        %p147 = pneg %p42
      $region22: #{conv_bn_relu.2} parent=19 // pred_check_branch
        %149 = sbr.rel (%p147) target = $region24
      $region23: #{conv_bn_relu.2} parent=19 // pred_region
        %p150 = scmp.lt.s32.totalorder %s17, 1
        %s151 = scalar_select %p150, %s17, 1
        %s152 = smul.addr %s151, 54
        %s153 = smul.addr %s152, 4
        %s154 = scalar_lea.vmem %s0, %s153
      $region24: #{conv_bn_relu.2} parent=19 // pred_fallthru
        _
    $region20: #{conv_bn_relu.2} parent=5 // pred_fallthru
      _
    %p155 = scmp.le.s32.totalorder 1, %s10
    %p156 = scmp.lt.s32.totalorder %s10, 3
    %p157 = pnand %p155, %p156
    %p158 = pneg %p157
    // Predicated region
    $region25: #{conv_bn_relu.2} parent=5 // pred_check
      _
    $region26: #{conv_bn_relu.2} parent=5 // pred_check_branch
      %160 = sbr.rel (%p157) target = $region28
    $region27: #{conv_bn_relu.2} parent=5 // pred_region
      %s161 = ssub.s32 %s10, 1
      %p162 = scmp.lt.s32.totalorder %s19, 1
      %s163 = scalar_select %p162, %s19, 1
      %s164 = smul.addr %s163, 54
      %s165 = smul.addr %s164, 4
      %s166 = scalar_lea.vmem %s0, %s165
      %p167 = pneg %p48
      %p168 = pneg %p45
      %p169 = pneg %p69
      %p170 = pneg %p66
      %p171 = pneg %p97
      %p172 = pneg %p94
      %s173 = smul.u32 16, %s20
      %p174 = scmp.lt.s32.totalorder %s19, 1
      %s175 = scalar_select %p174, %s19, 1
      %p176 = scmp.lt.s32.totalorder %s173, 15
      %s177 = scalar_select %p176, %s173, 15
      %s178 = smul.addr %s177, 2
      %s179 = smul.addr %s175, 32
      %s180 = sadd.s32 %s178, %s179
      %s181 = smul.addr %s180, 4
      %s182 = scalar_lea.vmem %s2, %s181
      %p183 = pneg %p125
      %p184 = pneg %p122
      %p185 = scmp.lt.s32.totalorder %s19, 1
      %s186 = scalar_select %p185, %s19, 1
      %p187 = scmp.lt.s32.totalorder %s20, 0
      %s188 = scalar_select %p187, %s20, 0
      %s189 = sadd.s32 %s188, %s186
      %s190 = smul.addr %s189, 2
      %s191 = scalar_lea.vmem %s3, %s190
      %p192 = scmp.lt.s32.totalorder %s19, 1
      %s193 = scalar_select %p192, %s19, 1
      %s194 = smul.addr %s193, 54
      %s195 = smul.addr %s194, 4
      %s196 = scalar_lea.vmem %s0, %s195
      %s197 = smul.u32 16, %s20
      %p198 = scmp.lt.s32.totalorder %s19, 1
      %s199 = scalar_select %p198, %s19, 1
      %p200 = scmp.lt.s32.totalorder %s197, 15
      %s201 = scalar_select %p200, %s197, 15
      %s202 = smul.addr %s201, 2
      %s203 = smul.addr %s199, 32
      %s204 = sadd.s32 %s202, %s203
      %s205 = smul.addr %s204, 4
      %s206 = scalar_lea.vmem %s2, %s205
      %s207 = smul.u32 16, %s20
      %p208 = scmp.lt.s32.totalorder %s19, 1
      %s209 = scalar_select %p208, %s19, 1
      %p210 = scmp.lt.s32.totalorder %s20, 0
      %s211 = scalar_select %p210, %s20, 0
      %s212 = sadd.s32 %s211, %s209
      %s213 = smul.addr %s212, 2
      %s214 = scalar_lea.vmem %s3, %s213
      %s216 = smul.u32 %s20, 16
      %s217 = smul.u32 %s216, 3
      %s218 = smul.addr %s217, 4
      %s219 = scalar_lea.vmem %s196, %s218
      %v220 = vld [vmem:[%s219] sm:$0xf]
      %v221 = vld [vmem:[%s219 + $0x4] sm:$0xf]
      %v222 = vld [vmem:[%s219 + $0x8] sm:$0x1]
      %v223 = vld [vmem:[%s219 + $0xc] sm:$0xf]
      %v224 = vld [vmem:[%s219 + $0x10] sm:$0xf]
      %v225 = vld [vmem:[%s219 + $0x14] sm:$0x1]
      %v226 = vld [vmem:[%s219 + $0x18] sm:$0xf]
      %v227 = vld [vmem:[%s219 + $0x1c] sm:$0xf]
      %v228 = vld [vmem:[%s219 + $0x20] sm:$0x1]
      %v229 = vld [vmem:[%s219 + $0x24] sm:$0xf]
      %v230 = vld [vmem:[%s219 + $0x28] sm:$0xf]
      %v231 = vld [vmem:[%s219 + $0x2c] sm:$0x1]
      %v232 = vld [vmem:[%s219 + $0x30] sm:$0xf]
      %v233 = vld [vmem:[%s219 + $0x34] sm:$0xf]
      %v234 = vld [vmem:[%s219 + $0x38] sm:$0x1]
      %v235 = vld [vmem:[%s219 + $0x3c] sm:$0xf]
      %v236 = vld [vmem:[%s219 + $0x40] sm:$0xf]
      %v237 = vld [vmem:[%s219 + $0x44] sm:$0x1]
      %v238 = vld [vmem:[%s219 + $0x48] sm:$0xf]
      %v239 = vld [vmem:[%s219 + $0x4c] sm:$0xf]
      %v240 = vld [vmem:[%s219 + $0x50] sm:$0x1]
      %v241 = vld [vmem:[%s219 + $0x54] sm:$0xf]
      %v242 = vld [vmem:[%s219 + $0x58] sm:$0xf]
      %v243 = vld [vmem:[%s219 + $0x5c] sm:$0x1]
      %v244 = vld [vmem:[%s219 + $0x60] sm:$0xf]
      %v245 = vld [vmem:[%s219 + $0x64] sm:$0xf]
      %v246 = vld [vmem:[%s219 + $0x68] sm:$0x1]
      %v247 = vld [vmem:[%s219 + $0x6c] sm:$0xf]
      %v248 = vld [vmem:[%s219 + $0x70] sm:$0xf]
      %v249 = vld [vmem:[%s219 + $0x74] sm:$0x1]
      %v250 = vld [vmem:[%s219 + $0x78] sm:$0xf]
      %v251 = vld [vmem:[%s219 + $0x7c] sm:$0xf]
      %v252 = vld [vmem:[%s219 + $0x80] sm:$0x1]
      %v253 = vld [vmem:[%s219 + $0x84] sm:$0xf]
      %v254 = vld [vmem:[%s219 + $0x88] sm:$0xf]
      %v255 = vld [vmem:[%s219 + $0x8c] sm:$0x1]
      %v256 = vld [vmem:[%s219 + $0x90] sm:$0xf]
      %v257 = vld [vmem:[%s219 + $0x94] sm:$0xf]
      %v258 = vld [vmem:[%s219 + $0x98] sm:$0x1]
      %v259 = vld [vmem:[%s219 + $0x9c] sm:$0xf]
      %v260 = vld [vmem:[%s219 + $0xa0] sm:$0xf]
      %v261 = vld [vmem:[%s219 + $0xa4] sm:$0x1]
      %v262 = vld [vmem:[%s219 + $0xa8] sm:$0xf]
      %v263 = vld [vmem:[%s219 + $0xac] sm:$0xf]
      %v264 = vld [vmem:[%s219 + $0xb0] sm:$0x1]
      %v265 = vld [vmem:[%s219 + $0xb4] sm:$0xf]
      %v266 = vld [vmem:[%s219 + $0xb8] sm:$0xf]
      %v267 = vld [vmem:[%s219 + $0xbc] sm:$0x1]
      %v268 = vld [vmem:[%s1] sm:$0xf]
      %vm269 = vsmask.f32 3328
      %vm270 = vsmask.f32 7440
      %vm271 = vmor %vm269, %vm270
      %v273 = vshrl.u32 %v220, 16
      %v275 = vrot.slane %v273, 4
      %v276 = vshll.u32 %v220, 16
      %v278 = vrot.slane %v276, 5
      %v279 = vor.u32 %v275, %v278
      %v280 = vrot.slane %v279, 4
      %v282 = vshll.u32 %v221, 16
      %v284 = vrot.slane %v282, 5
      %v285 = vsel %vm271, %v280, %v284
      %v286 = vshrl.u32 %v221, 16
      %v288 = vrot.slane %v286, 4
      %v289 = vor.u32 %v288, %v284
      %v290 = vrot.slane %v289, 4
      %v292 = vshll.u32 %v222, 16
      %v294 = vrot.slane %v292, 5
      %v295 = vsel %vm271, %v290, %v294
      %v297 = vshrl.u32 %v223, 16
      %v299 = vrot.slane %v297, 4
      %v300 = vshll.u32 %v223, 16
      %v302 = vrot.slane %v300, 5
      %v303 = vor.u32 %v299, %v302
      %v304 = vrot.slane %v303, 4
      %v306 = vshll.u32 %v224, 16
      %v308 = vrot.slane %v306, 5
      %v309 = vsel %vm271, %v304, %v308
      %v310 = vshrl.u32 %v224, 16
      %v312 = vrot.slane %v310, 4
      %v313 = vor.u32 %v312, %v308
      %v314 = vrot.slane %v313, 4
      %v316 = vshll.u32 %v225, 16
      %v318 = vrot.slane %v316, 5
      %v319 = vsel %vm271, %v314, %v318
      %v321 = vshrl.u32 %v226, 16
      %v323 = vrot.slane %v321, 4
      %v324 = vshll.u32 %v226, 16
      %v326 = vrot.slane %v324, 5
      %v327 = vor.u32 %v323, %v326
      %v328 = vrot.slane %v327, 4
      %v330 = vshll.u32 %v227, 16
      %v332 = vrot.slane %v330, 5
      %v333 = vsel %vm271, %v328, %v332
      %v334 = vshrl.u32 %v227, 16
      %v336 = vrot.slane %v334, 4
      %v337 = vor.u32 %v336, %v332
      %v338 = vrot.slane %v337, 4
      %v340 = vshll.u32 %v228, 16
      %v342 = vrot.slane %v340, 5
      %v343 = vsel %vm271, %v338, %v342
      %v345 = vshrl.u32 %v229, 16
      %v347 = vrot.slane %v345, 4
      %v348 = vshll.u32 %v229, 16
      %v350 = vrot.slane %v348, 5
      %v351 = vor.u32 %v347, %v350
      %v352 = vrot.slane %v351, 4
      %v354 = vshll.u32 %v230, 16
      %v356 = vrot.slane %v354, 5
      %v357 = vsel %vm271, %v352, %v356
      %v358 = vshrl.u32 %v230, 16
      %v360 = vrot.slane %v358, 4
      %v361 = vor.u32 %v360, %v356
      %v362 = vrot.slane %v361, 4
      %v364 = vshll.u32 %v231, 16
      %v366 = vrot.slane %v364, 5
      %v367 = vsel %vm271, %v362, %v366
      %v369 = vshrl.u32 %v232, 16
      %v371 = vrot.slane %v369, 4
      %v372 = vshll.u32 %v232, 16
      %v374 = vrot.slane %v372, 5
      %v375 = vor.u32 %v371, %v374
      %v376 = vrot.slane %v375, 4
      %v378 = vshll.u32 %v233, 16
      %v380 = vrot.slane %v378, 5
      %v381 = vsel %vm271, %v376, %v380
      %v382 = vshrl.u32 %v233, 16
      %v384 = vrot.slane %v382, 4
      %v385 = vor.u32 %v384, %v380
      %v386 = vrot.slane %v385, 4
      %v388 = vshll.u32 %v234, 16
      %v390 = vrot.slane %v388, 5
      %v391 = vsel %vm271, %v386, %v390
      %v393 = vshrl.u32 %v235, 16
      %v395 = vrot.slane %v393, 4
      %v396 = vshll.u32 %v235, 16
      %v398 = vrot.slane %v396, 5
      %v399 = vor.u32 %v395, %v398
      %v400 = vrot.slane %v399, 4
      %v402 = vshll.u32 %v236, 16
      %v404 = vrot.slane %v402, 5
      %v405 = vsel %vm271, %v400, %v404
      %v406 = vshrl.u32 %v236, 16
      %v408 = vrot.slane %v406, 4
      %v409 = vor.u32 %v408, %v404
      %v410 = vrot.slane %v409, 4
      %v412 = vshll.u32 %v237, 16
      %v414 = vrot.slane %v412, 5
      %v415 = vsel %vm271, %v410, %v414
      %v417 = vshrl.u32 %v238, 16
      %v419 = vrot.slane %v417, 4
      %v420 = vshll.u32 %v238, 16
      %v422 = vrot.slane %v420, 5
      %v423 = vor.u32 %v419, %v422
      %v424 = vrot.slane %v423, 4
      %v426 = vshll.u32 %v239, 16
      %v428 = vrot.slane %v426, 5
      %v429 = vsel %vm271, %v424, %v428
      %v430 = vshrl.u32 %v239, 16
      %v432 = vrot.slane %v430, 4
      %v433 = vor.u32 %v432, %v428
      %v434 = vrot.slane %v433, 4
      %v436 = vshll.u32 %v240, 16
      %v438 = vrot.slane %v436, 5
      %v439 = vsel %vm271, %v434, %v438
      %v441 = vshrl.u32 %v241, 16
      %v443 = vrot.slane %v441, 4
      %v444 = vshll.u32 %v241, 16
      %v446 = vrot.slane %v444, 5
      %v447 = vor.u32 %v443, %v446
      %v448 = vrot.slane %v447, 4
      %v450 = vshll.u32 %v242, 16
      %v452 = vrot.slane %v450, 5
      %v453 = vsel %vm271, %v448, %v452
      %v454 = vshrl.u32 %v242, 16
      %v456 = vrot.slane %v454, 4
      %v457 = vor.u32 %v456, %v452
      %v458 = vrot.slane %v457, 4
      %v460 = vshll.u32 %v243, 16
      %v462 = vrot.slane %v460, 5
      %v463 = vsel %vm271, %v458, %v462
      %v465 = vshrl.u32 %v244, 16
      %v467 = vrot.slane %v465, 4
      %v468 = vshll.u32 %v244, 16
      %v470 = vrot.slane %v468, 5
      %v471 = vor.u32 %v467, %v470
      %v472 = vrot.slane %v471, 4
      %v474 = vshll.u32 %v245, 16
      %v476 = vrot.slane %v474, 5
      %v477 = vsel %vm271, %v472, %v476
      %v478 = vshrl.u32 %v245, 16
      %v480 = vrot.slane %v478, 4
      %v481 = vor.u32 %v480, %v476
      %v482 = vrot.slane %v481, 4
      %v484 = vshll.u32 %v246, 16
      %v486 = vrot.slane %v484, 5
      %v487 = vsel %vm271, %v482, %v486
      %v489 = vshrl.u32 %v247, 16
      %v491 = vrot.slane %v489, 4
      %v492 = vshll.u32 %v247, 16
      %v494 = vrot.slane %v492, 5
      %v495 = vor.u32 %v491, %v494
      %v496 = vrot.slane %v495, 4
      %v498 = vshll.u32 %v248, 16
      %v500 = vrot.slane %v498, 5
      %v501 = vsel %vm271, %v496, %v500
      %v502 = vshrl.u32 %v248, 16
      %v504 = vrot.slane %v502, 4
      %v505 = vor.u32 %v504, %v500
      %v506 = vrot.slane %v505, 4
      %v508 = vshll.u32 %v249, 16
      %v510 = vrot.slane %v508, 5
      %v511 = vsel %vm271, %v506, %v510
      %v513 = vshrl.u32 %v250, 16
      %v515 = vrot.slane %v513, 4
      %v516 = vshll.u32 %v250, 16
      %v518 = vrot.slane %v516, 5
      %v519 = vor.u32 %v515, %v518
      %v520 = vrot.slane %v519, 4
      %v522 = vshll.u32 %v251, 16
      %v524 = vrot.slane %v522, 5
      %v525 = vsel %vm271, %v520, %v524
      %v526 = vshrl.u32 %v251, 16
      %v528 = vrot.slane %v526, 4
      %v529 = vor.u32 %v528, %v524
      %v530 = vrot.slane %v529, 4
      %v532 = vshll.u32 %v252, 16
      %v534 = vrot.slane %v532, 5
      %v535 = vsel %vm271, %v530, %v534
      %v537 = vshrl.u32 %v253, 16
      %v539 = vrot.slane %v537, 4
      %v540 = vshll.u32 %v253, 16
      %v542 = vrot.slane %v540, 5
      %v543 = vor.u32 %v539, %v542
      %v544 = vrot.slane %v543, 4
      %v546 = vshll.u32 %v254, 16
      %v548 = vrot.slane %v546, 5
      %v549 = vsel %vm271, %v544, %v548
      %v550 = vshrl.u32 %v254, 16
      %v552 = vrot.slane %v550, 4
      %v553 = vor.u32 %v552, %v548
      %v554 = vrot.slane %v553, 4
      %v556 = vshll.u32 %v255, 16
      %v558 = vrot.slane %v556, 5
      %v559 = vsel %vm271, %v554, %v558
      %v561 = vshrl.u32 %v256, 16
      %v563 = vrot.slane %v561, 4
      %v564 = vshll.u32 %v256, 16
      %v566 = vrot.slane %v564, 5
      %v567 = vor.u32 %v563, %v566
      %v568 = vrot.slane %v567, 4
      %v570 = vshll.u32 %v257, 16
      %v572 = vrot.slane %v570, 5
      %v573 = vsel %vm271, %v568, %v572
      %v574 = vshrl.u32 %v257, 16
      %v576 = vrot.slane %v574, 4
      %v577 = vor.u32 %v576, %v572
      %v578 = vrot.slane %v577, 4
      %v580 = vshll.u32 %v258, 16
      %v582 = vrot.slane %v580, 5
      %v583 = vsel %vm271, %v578, %v582
      %v585 = vshrl.u32 %v259, 16
      %v587 = vrot.slane %v585, 4
      %v588 = vshll.u32 %v259, 16
      %v590 = vrot.slane %v588, 5
      %v591 = vor.u32 %v587, %v590
      %v592 = vrot.slane %v591, 4
      %v594 = vshll.u32 %v260, 16
      %v596 = vrot.slane %v594, 5
      %v597 = vsel %vm271, %v592, %v596
      %v598 = vshrl.u32 %v260, 16
      %v600 = vrot.slane %v598, 4
      %v601 = vor.u32 %v600, %v596
      %v602 = vrot.slane %v601, 4
      %v604 = vshll.u32 %v261, 16
      %v606 = vrot.slane %v604, 5
      %v607 = vsel %vm271, %v602, %v606
      %v609 = vshrl.u32 %v262, 16
      %v611 = vrot.slane %v609, 4
      %v612 = vshll.u32 %v262, 16
      %v614 = vrot.slane %v612, 5
      %v615 = vor.u32 %v611, %v614
      %v616 = vrot.slane %v615, 4
      %v618 = vshll.u32 %v263, 16
      %v620 = vrot.slane %v618, 5
      %v621 = vsel %vm271, %v616, %v620
      %v622 = vshrl.u32 %v263, 16
      %v624 = vrot.slane %v622, 4
      %v625 = vor.u32 %v624, %v620
      %v626 = vrot.slane %v625, 4
      %v628 = vshll.u32 %v264, 16
      %v630 = vrot.slane %v628, 5
      %v631 = vsel %vm271, %v626, %v630
      %v633 = vshrl.u32 %v265, 16
      %v635 = vrot.slane %v633, 4
      %v636 = vshll.u32 %v265, 16
      %v638 = vrot.slane %v636, 5
      %v639 = vor.u32 %v635, %v638
      %v640 = vrot.slane %v639, 4
      %v642 = vshll.u32 %v266, 16
      %v644 = vrot.slane %v642, 5
      %v645 = vsel %vm271, %v640, %v644
      %v646 = vshrl.u32 %v266, 16
      %v648 = vrot.slane %v646, 4
      %v649 = vor.u32 %v648, %v644
      %v650 = vrot.slane %v649, 4
      %v652 = vshll.u32 %v267, 16
      %v654 = vrot.slane %v652, 5
      %v655 = vsel %vm271, %v650, %v654
      %s656 = scalar_lea.vmem %s1, 4
      %v657 = vld [vmem:[%s656] sm:$0xf]
      %v658 = vunpack.c.l.b16 %v285
      %v659 = vunpack.c.l.b16 %v295
      %v660 = vunpack.c.l.b16 %v309
      %v661 = vunpack.c.l.b16 %v319
      %v662 = vunpack.c.l.b16 %v333
      %v663 = vunpack.c.l.b16 %v343
      %v664 = vunpack.c.l.b16 %v357
      %v665 = vunpack.c.l.b16 %v367
      %v666 = vunpack.c.l.b16 %v381
      %v667 = vunpack.c.l.b16 %v391
      %v668 = vunpack.c.l.b16 %v405
      %v669 = vunpack.c.l.b16 %v415
      %v670 = vunpack.c.l.b16 %v429
      %v671 = vunpack.c.l.b16 %v439
      %v672 = vunpack.c.l.b16 %v453
      %v673 = vunpack.c.l.b16 %v463
      %v674 = vunpack.c.l.b16 %v477
      %v675 = vunpack.c.l.b16 %v487
      %v676 = vunpack.c.l.b16 %v501
      %v677 = vunpack.c.l.b16 %v511
      %v678 = vunpack.c.l.b16 %v525
      %v679 = vunpack.c.l.b16 %v535
      %v680 = vunpack.c.l.b16 %v549
      %v681 = vunpack.c.l.b16 %v559
      %v682 = vunpack.c.l.b16 %v573
      %v683 = vunpack.c.l.b16 %v583
      %v684 = vunpack.c.l.b16 %v597
      %v685 = vunpack.c.l.b16 %v607
      %v686 = vunpack.c.l.b16 %v621
      %v687 = vunpack.c.l.b16 %v631
      %v688 = vunpack.c.l.b16 %v645
      %v689 = vunpack.c.l.b16 %v655
      %v690 = vpack.c.b16 %v659, %v658
      %v691 = vpack.c.b16 %v661, %v660
      %v692 = vpack.c.b16 %v663, %v662
      %v693 = vpack.c.b16 %v665, %v664
      %v694 = vpack.c.b16 %v667, %v666
      %v695 = vpack.c.b16 %v669, %v668
      %v696 = vpack.c.b16 %v671, %v670
      %v697 = vpack.c.b16 %v673, %v672
      %v698 = vpack.c.b16 %v675, %v674
      %v699 = vpack.c.b16 %v677, %v676
      %v700 = vpack.c.b16 %v679, %v678
      %v701 = vpack.c.b16 %v681, %v680
      %v702 = vpack.c.b16 %v683, %v682
      %v703 = vpack.c.b16 %v685, %v684
      %v704 = vpack.c.b16 %v687, %v686
      %v705 = vpack.c.b16 %v689, %v688
      %vm706 = vcmask 64512
      %v708 = vsel %vm706, %v690, 0
      %v711 = vsel %vm706, %v691, 0
      %v714 = vsel %vm706, %v692, 0
      %v717 = vsel %vm706, %v693, 0
      %v720 = vsel %vm706, %v694, 0
      %v723 = vsel %vm706, %v695, 0
      %v726 = vsel %vm706, %v696, 0
      %v729 = vsel %vm706, %v697, 0
      %v732 = vsel %vm706, %v698, 0
      %v735 = vsel %vm706, %v699, 0
      %v738 = vsel %vm706, %v700, 0
      %v741 = vsel %vm706, %v701, 0
      %v744 = vsel %vm706, %v702, 0
      %v747 = vsel %vm706, %v703, 0
      %v750 = vsel %vm706, %v704, 0
      %v753 = vsel %vm706, %v705, 0
      %vm755 = vcmask 1043456
      %v757 = vsel %vm755, %v657, 0
      %759 = vmatprep.subr.bf16.mxu0 0
      %760 = vmatpush1.bf16.msra.mxu0 %v757
      %761 = vmatprep.subr.bf16.mxu0 0
      %762 = vmatpush1.bf16.msra.mxu0 0
      %763 = vmatprep.subr.bf16.mxu0 0
      %764 = vmatpush1.bf16.msra.mxu0 0
      %765 = vmatprep.subr.bf16.mxu0 0
      %766 = vmatpush1.bf16.msra.mxu0 0
      %767 = vmatprep.subr.bf16.mxu0 0
      %768 = vmatpush1.bf16.msra.mxu0 0
      %769 = vmatprep.subr.bf16.mxu0 0
      %770 = vmatpush1.bf16.msra.mxu0 0
      %771 = vmatprep.subr.bf16.mxu0 0
      %772 = vmatpush1.bf16.msra.mxu0 0
      %773 = vmatprep.subr.bf16.mxu0 0
      %774 = vmatpush1.bf16.msra.mxu0 0
      %775 = vmatprep.subr.bf16.mxu0 0
      %776 = vmatpush1.bf16.msra.mxu0 0
      %777 = vmatprep.subr.bf16.mxu0 0
      %778 = vmatpush1.bf16.msra.mxu0 0
      %779 = vmatprep.subr.bf16.mxu0 0
      %780 = vmatpush1.bf16.msra.mxu0 0
      %781 = vmatprep.subr.bf16.mxu0 0
      %782 = vmatpush1.bf16.msra.mxu0 0
      %783 = vmatprep.subr.bf16.mxu0 0
      %784 = vmatpush1.bf16.msra.mxu0 0
      %785 = vmatprep.subr.bf16.mxu0 0
      %786 = vmatpush1.bf16.msra.mxu0 0
      %787 = vmatprep.subr.bf16.mxu0 0
      %788 = vmatpush1.bf16.msra.mxu0 0
      %789 = vmatprep.subr.bf16.mxu0 0
      %790 = vmatpush1.bf16.msra.mxu0 0
      %791 = vmatprep.mubr.bf16.mxu0 0
      %792 = vmatmul.mubr.bf16.gmra.mrb[0].mxu0 %v708
      %v793 = vpop.f32.mrb[0].mxu0
      %v794 = vadd.f32 0.0, %v793
      %v795 = vpop.f32.mrb[0].mxu0
      %v796 = vpop.f32.mrb[0].mxu0
      %v797 = vadd.f32 0.0, %v796
      %v798 = vpop.f32.mrb[0].mxu0
      %799 = vmatprep.mubr.bf16.mxu0 0
      %800 = vmatmul.mubr.bf16.gmra.mrb[0].mxu0 %v711
      %v801 = vpop.f32.mrb[0].mxu0
      %v802 = vadd.f32 0.0, %v801
      %v803 = vpop.f32.mrb[0].mxu0
      %v804 = vpop.f32.mrb[0].mxu0
      %v805 = vadd.f32 0.0, %v804
      %v806 = vpop.f32.mrb[0].mxu0
      %807 = vmatprep.mubr.bf16.mxu0 0
      %808 = vmatmul.mubr.bf16.gmra.mrb[0].mxu0 %v714
      %v809 = vpop.f32.mrb[0].mxu0
      %v810 = vadd.f32 0.0, %v809
      %v811 = vpop.f32.mrb[0].mxu0
      %v812 = vpop.f32.mrb[0].mxu0
      %v813 = vadd.f32 0.0, %v812
      %v814 = vpop.f32.mrb[0].mxu0
      %815 = vmatprep.mubr.bf16.mxu0 0
      %816 = vmatmul.mubr.bf16.gmra.mrb[0].mxu0 %v717
      %v817 = vpop.f32.mrb[0].mxu0
      %v818 = vadd.f32 0.0, %v817
      %v819 = vpop.f32.mrb[0].mxu0
      %v820 = vpop.f32.mrb[0].mxu0
      %v821 = vadd.f32 0.0, %v820
      %v822 = vpop.f32.mrb[0].mxu0
      %823 = vmatprep.mubr.bf16.mxu0 0
      %824 = vmatmul.mubr.bf16.gmra.mrb[0].mxu0 %v720
      %v825 = vpop.f32.mrb[0].mxu0
      %v826 = vadd.f32 0.0, %v825
      %v827 = vpop.f32.mrb[0].mxu0
      %v828 = vpop.f32.mrb[0].mxu0
      %v829 = vadd.f32 0.0, %v828
      %v830 = vpop.f32.mrb[0].mxu0
      %831 = vmatprep.mubr.bf16.mxu0 0
      %832 = vmatmul.mubr.bf16.gmra.mrb[0].mxu0 %v723
      %v833 = vpop.f32.mrb[0].mxu0
      %v834 = vadd.f32 0.0, %v833
      %v835 = vpop.f32.mrb[0].mxu0
      %v836 = vpop.f32.mrb[0].mxu0
      %v837 = vadd.f32 0.0, %v836
      %v838 = vpop.f32.mrb[0].mxu0
      %839 = vmatprep.mubr.bf16.mxu0 0
      %840 = vmatmul.mubr.bf16.gmra.mrb[0].mxu0 %v726
      %v841 = vpop.f32.mrb[0].mxu0
      %v842 = vadd.f32 0.0, %v841
      %v843 = vpop.f32.mrb[0].mxu0
      %v844 = vpop.f32.mrb[0].mxu0
      %v845 = vadd.f32 0.0, %v844
      %v846 = vpop.f32.mrb[0].mxu0
      %847 = vmatprep.mubr.bf16.mxu0 0
      %848 = vmatmul.mubr.bf16.gmra.mrb[0].mxu0 %v729
      %v849 = vpop.f32.mrb[0].mxu0
      %v850 = vadd.f32 0.0, %v849
      %v851 = vpop.f32.mrb[0].mxu0
      %v852 = vpop.f32.mrb[0].mxu0
      %v853 = vadd.f32 0.0, %v852
      %v854 = vpop.f32.mrb[0].mxu0
      %855 = vmatprep.mubr.bf16.mxu0 0
      %856 = vmatmul.mubr.bf16.gmra.mrb[0].mxu0 %v732
      %v857 = vpop.f32.mrb[0].mxu0
      %v858 = vadd.f32 0.0, %v857
      %v859 = vpop.f32.mrb[0].mxu0
      %v860 = vpop.f32.mrb[0].mxu0
      %v861 = vadd.f32 0.0, %v860
      %v862 = vpop.f32.mrb[0].mxu0
      %863 = vmatprep.mubr.bf16.mxu0 0
      %864 = vmatmul.mubr.bf16.gmra.mrb[0].mxu0 %v735
      %v865 = vpop.f32.mrb[0].mxu0
      %v866 = vadd.f32 0.0, %v865
      %v867 = vpop.f32.mrb[0].mxu0
      %v868 = vpop.f32.mrb[0].mxu0
      %v869 = vadd.f32 0.0, %v868
      %v870 = vpop.f32.mrb[0].mxu0
      %871 = vmatprep.mubr.bf16.mxu0 0
      %872 = vmatmul.mubr.bf16.gmra.mrb[0].mxu0 %v738
      %v873 = vpop.f32.mrb[0].mxu0
      %v874 = vadd.f32 0.0, %v873
      %v875 = vpop.f32.mrb[0].mxu0
      %v876 = vpop.f32.mrb[0].mxu0
      %v877 = vadd.f32 0.0, %v876
      %v878 = vpop.f32.mrb[0].mxu0
      %879 = vmatprep.mubr.bf16.mxu0 0
      %880 = vmatmul.mubr.bf16.gmra.mrb[0].mxu0 %v741
      %v881 = vpop.f32.mrb[0].mxu0
      %v882 = vadd.f32 0.0, %v881
      %v883 = vpop.f32.mrb[0].mxu0
      %v884 = vpop.f32.mrb[0].mxu0
      %v885 = vadd.f32 0.0, %v884
      %v886 = vpop.f32.mrb[0].mxu0
      %887 = vmatprep.mubr.bf16.mxu0 0
      %888 = vmatmul.mubr.bf16.gmra.mrb[0].mxu0 %v744
      %v889 = vpop.f32.mrb[0].mxu0
      %v890 = vadd.f32 0.0, %v889
      %v891 = vpop.f32.mrb[0].mxu0
      %v892 = vpop.f32.mrb[0].mxu0
      %v893 = vadd.f32 0.0, %v892
      %v894 = vpop.f32.mrb[0].mxu0
      %895 = vmatprep.mubr.bf16.mxu0 0
      %896 = vmatmul.mubr.bf16.gmra.mrb[0].mxu0 %v747
      %v897 = vpop.f32.mrb[0].mxu0
      %v898 = vadd.f32 0.0, %v897
      %v899 = vpop.f32.mrb[0].mxu0
      %v900 = vpop.f32.mrb[0].mxu0
      %v901 = vadd.f32 0.0, %v900
      %v902 = vpop.f32.mrb[0].mxu0
      %903 = vmatprep.mubr.bf16.mxu0 0
      %904 = vmatmul.mubr.bf16.gmra.mrb[0].mxu0 %v750
      %v905 = vpop.f32.mrb[0].mxu0
      %v906 = vadd.f32 0.0, %v905
      %v907 = vpop.f32.mrb[0].mxu0
      %v908 = vpop.f32.mrb[0].mxu0
      %v909 = vadd.f32 0.0, %v908
      %v910 = vpop.f32.mrb[0].mxu0
      %911 = vmatprep.mubr.bf16.mxu0 0
      %912 = vmatmul.mubr.bf16.gmra.mrb[0].mxu0 %v753
      %v913 = vpop.f32.mrb[0].mxu0
      %v914 = vadd.f32 0.0, %v913
      %v915 = vpop.f32.mrb[0].mxu0
      %v916 = vpop.f32.mrb[0].mxu0
      %v917 = vadd.f32 0.0, %v916
      %v918 = vpop.f32.mrb[0].mxu0
      %919 = vdwg.mxu0
      %v952 = vunpack.c.l.b16 %v220
      %v953 = vunpack.c.l.b16 %v221
      %v954 = vunpack.c.l.b16 %v223
      %v955 = vunpack.c.l.b16 %v224
      %v956 = vunpack.c.l.b16 %v226
      %v957 = vunpack.c.l.b16 %v227
      %v958 = vunpack.c.l.b16 %v229
      %v959 = vunpack.c.l.b16 %v230
      %v960 = vunpack.c.l.b16 %v232
      %v961 = vunpack.c.l.b16 %v233
      %v962 = vunpack.c.l.b16 %v235
      %v963 = vunpack.c.l.b16 %v236
      %v964 = vunpack.c.l.b16 %v238
      %v965 = vunpack.c.l.b16 %v239
      %v966 = vunpack.c.l.b16 %v241
      %v967 = vunpack.c.l.b16 %v242
      %v968 = vunpack.c.l.b16 %v244
      %v969 = vunpack.c.l.b16 %v245
      %v970 = vunpack.c.l.b16 %v247
      %v971 = vunpack.c.l.b16 %v248
      %v972 = vunpack.c.l.b16 %v250
      %v973 = vunpack.c.l.b16 %v251
      %v974 = vunpack.c.l.b16 %v253
      %v975 = vunpack.c.l.b16 %v254
      %v976 = vunpack.c.l.b16 %v256
      %v977 = vunpack.c.l.b16 %v257
      %v978 = vunpack.c.l.b16 %v259
      %v979 = vunpack.c.l.b16 %v260
      %v980 = vunpack.c.l.b16 %v262
      %v981 = vunpack.c.l.b16 %v263
      %v982 = vunpack.c.l.b16 %v265
      %v983 = vunpack.c.l.b16 %v266
      %v984 = vpack.c.b16 %v953, %v952
      %v985 = vpack.c.b16 %v955, %v954
      %v986 = vpack.c.b16 %v957, %v956
      %v987 = vpack.c.b16 %v959, %v958
      %v988 = vpack.c.b16 %v961, %v960
      %v989 = vpack.c.b16 %v963, %v962
      %v990 = vpack.c.b16 %v965, %v964
      %v991 = vpack.c.b16 %v967, %v966
      %v992 = vpack.c.b16 %v969, %v968
      %v993 = vpack.c.b16 %v971, %v970
      %v994 = vpack.c.b16 %v973, %v972
      %v995 = vpack.c.b16 %v975, %v974
      %v996 = vpack.c.b16 %v977, %v976
      %v997 = vpack.c.b16 %v979, %v978
      %v998 = vpack.c.b16 %v981, %v980
      %v999 = vpack.c.b16 %v983, %v982
      %v1001 = vsel %vm706, %v984, 0
      %v1004 = vsel %vm706, %v985, 0
      %v1007 = vsel %vm706, %v986, 0
      %v1010 = vsel %vm706, %v987, 0
      %v1013 = vsel %vm706, %v988, 0
      %v1016 = vsel %vm706, %v989, 0
      %v1019 = vsel %vm706, %v990, 0
      %v1022 = vsel %vm706, %v991, 0
      %v1025 = vsel %vm706, %v992, 0
      %v1028 = vsel %vm706, %v993, 0
      %v1031 = vsel %vm706, %v994, 0
      %v1034 = vsel %vm706, %v995, 0
      %v1037 = vsel %vm706, %v996, 0
      %v1040 = vsel %vm706, %v997, 0
      %v1043 = vsel %vm706, %v998, 0
      %v1046 = vsel %vm706, %v999, 0
      %v1049 = vsel %vm755, %v268, 0
      %1051 = vmatprep.subr.bf16.mxu0 0
      %1052 = vmatpush1.bf16.msra.mxu0 %v1049
      %1053 = vmatprep.subr.bf16.mxu0 0
      %1054 = vmatpush1.bf16.msra.mxu0 0
      %1055 = vmatprep.subr.bf16.mxu0 0
      %1056 = vmatpush1.bf16.msra.mxu0 0
      %1057 = vmatprep.subr.bf16.mxu0 0
      %1058 = vmatpush1.bf16.msra.mxu0 0
      %1059 = vmatprep.subr.bf16.mxu0 0
      %1060 = vmatpush1.bf16.msra.mxu0 0
      %1061 = vmatprep.subr.bf16.mxu0 0
      %1062 = vmatpush1.bf16.msra.mxu0 0
      %1063 = vmatprep.subr.bf16.mxu0 0
      %1064 = vmatpush1.bf16.msra.mxu0 0
      %1065 = vmatprep.subr.bf16.mxu0 0
      %1066 = vmatpush1.bf16.msra.mxu0 0
      %1067 = vmatprep.subr.bf16.mxu0 0
      %1068 = vmatpush1.bf16.msra.mxu0 0
      %1069 = vmatprep.subr.bf16.mxu0 0
      %1070 = vmatpush1.bf16.msra.mxu0 0
      %1071 = vmatprep.subr.bf16.mxu0 0
      %1072 = vmatpush1.bf16.msra.mxu0 0
      %1073 = vmatprep.subr.bf16.mxu0 0
      %1074 = vmatpush1.bf16.msra.mxu0 0
      %1075 = vmatprep.subr.bf16.mxu0 0
      %1076 = vmatpush1.bf16.msra.mxu0 0
      %1077 = vmatprep.subr.bf16.mxu0 0
      %1078 = vmatpush1.bf16.msra.mxu0 0
      %1079 = vmatprep.subr.bf16.mxu0 0
      %1080 = vmatpush1.bf16.msra.mxu0 0
      %1081 = vmatprep.subr.bf16.mxu0 0
      %1082 = vmatpush1.bf16.msra.mxu0 0
      %1083 = vmatprep.mubr.bf16.mxu0 0
      %1084 = vmatmul.mubr.bf16.gmra.mrb[0].mxu0 %v1001
      %v1085 = vpop.f32.mrb[0].mxu0
      %v1086 = vadd.f32 %v794, %v1085
      %v1087 = vpop.f32.mrb[0].mxu0
      %v1088 = vpop.f32.mrb[0].mxu0
      %v1089 = vadd.f32 %v797, %v1088
      %v1090 = vpop.f32.mrb[0].mxu0
      %1091 = vmatprep.mubr.bf16.mxu0 0
      %1092 = vmatmul.mubr.bf16.gmra.mrb[0].mxu0 %v1004
      %v1093 = vpop.f32.mrb[0].mxu0
      %v1094 = vadd.f32 %v802, %v1093
      %v1095 = vpop.f32.mrb[0].mxu0
      %v1096 = vpop.f32.mrb[0].mxu0
      %v1097 = vadd.f32 %v805, %v1096
      %v1098 = vpop.f32.mrb[0].mxu0
      %1099 = vmatprep.mubr.bf16.mxu0 0
      %1100 = vmatmul.mubr.bf16.gmra.mrb[0].mxu0 %v1007
      %v1101 = vpop.f32.mrb[0].mxu0
      %v1102 = vadd.f32 %v810, %v1101
      %v1103 = vpop.f32.mrb[0].mxu0
      %v1104 = vpop.f32.mrb[0].mxu0
      %v1105 = vadd.f32 %v813, %v1104
      %v1106 = vpop.f32.mrb[0].mxu0
      %1107 = vmatprep.mubr.bf16.mxu0 0
      %1108 = vmatmul.mubr.bf16.gmra.mrb[0].mxu0 %v1010
      %v1109 = vpop.f32.mrb[0].mxu0
      %v1110 = vadd.f32 %v818, %v1109
      %v1111 = vpop.f32.mrb[0].mxu0
      %v1112 = vpop.f32.mrb[0].mxu0
      %v1113 = vadd.f32 %v821, %v1112
      %v1114 = vpop.f32.mrb[0].mxu0
      %1115 = vmatprep.mubr.bf16.mxu0 0
      %1116 = vmatmul.mubr.bf16.gmra.mrb[0].mxu0 %v1013
      %v1117 = vpop.f32.mrb[0].mxu0
      %v1118 = vadd.f32 %v826, %v1117
      %v1119 = vpop.f32.mrb[0].mxu0
      %v1120 = vpop.f32.mrb[0].mxu0
      %v1121 = vadd.f32 %v829, %v1120
      %v1122 = vpop.f32.mrb[0].mxu0
      %1123 = vmatprep.mubr.bf16.mxu0 0
      %1124 = vmatmul.mubr.bf16.gmra.mrb[0].mxu0 %v1016
      %v1125 = vpop.f32.mrb[0].mxu0
      %v1126 = vadd.f32 %v834, %v1125
      %v1127 = vpop.f32.mrb[0].mxu0
      %v1128 = vpop.f32.mrb[0].mxu0
      %v1129 = vadd.f32 %v837, %v1128
      %v1130 = vpop.f32.mrb[0].mxu0
      %1131 = vmatprep.mubr.bf16.mxu0 0
      %1132 = vmatmul.mubr.bf16.gmra.mrb[0].mxu0 %v1019
      %v1133 = vpop.f32.mrb[0].mxu0
      %v1134 = vadd.f32 %v842, %v1133
      %v1135 = vpop.f32.mrb[0].mxu0
      %v1136 = vpop.f32.mrb[0].mxu0
      %v1137 = vadd.f32 %v845, %v1136
      %v1138 = vpop.f32.mrb[0].mxu0
      %1139 = vmatprep.mubr.bf16.mxu0 0
      %1140 = vmatmul.mubr.bf16.gmra.mrb[0].mxu0 %v1022
      %v1141 = vpop.f32.mrb[0].mxu0
      %v1142 = vadd.f32 %v850, %v1141
      %v1143 = vpop.f32.mrb[0].mxu0
      %v1144 = vpop.f32.mrb[0].mxu0
      %v1145 = vadd.f32 %v853, %v1144
      %v1146 = vpop.f32.mrb[0].mxu0
      %1147 = vmatprep.mubr.bf16.mxu0 0
      %1148 = vmatmul.mubr.bf16.gmra.mrb[0].mxu0 %v1025
      %v1149 = vpop.f32.mrb[0].mxu0
      %v1150 = vadd.f32 %v858, %v1149
      %v1151 = vpop.f32.mrb[0].mxu0
      %v1152 = vpop.f32.mrb[0].mxu0
      %v1153 = vadd.f32 %v861, %v1152
      %v1154 = vpop.f32.mrb[0].mxu0
      %1155 = vmatprep.mubr.bf16.mxu0 0
      %1156 = vmatmul.mubr.bf16.gmra.mrb[0].mxu0 %v1028
      %v1157 = vpop.f32.mrb[0].mxu0
      %v1158 = vadd.f32 %v866, %v1157
      %v1159 = vpop.f32.mrb[0].mxu0
      %v1160 = vpop.f32.mrb[0].mxu0
      %v1161 = vadd.f32 %v869, %v1160
      %v1162 = vpop.f32.mrb[0].mxu0
      %1163 = vmatprep.mubr.bf16.mxu0 0
      %1164 = vmatmul.mubr.bf16.gmra.mrb[0].mxu0 %v1031
      %v1165 = vpop.f32.mrb[0].mxu0
      %v1166 = vadd.f32 %v874, %v1165
      %v1167 = vpop.f32.mrb[0].mxu0
      %v1168 = vpop.f32.mrb[0].mxu0
      %v1169 = vadd.f32 %v877, %v1168
      %v1170 = vpop.f32.mrb[0].mxu0
      %1171 = vmatprep.mubr.bf16.mxu0 0
      %1172 = vmatmul.mubr.bf16.gmra.mrb[0].mxu0 %v1034
      %v1173 = vpop.f32.mrb[0].mxu0
      %v1174 = vadd.f32 %v882, %v1173
      %v1175 = vpop.f32.mrb[0].mxu0
      %v1176 = vpop.f32.mrb[0].mxu0
      %v1177 = vadd.f32 %v885, %v1176
      %v1178 = vpop.f32.mrb[0].mxu0
      %1179 = vmatprep.mubr.bf16.mxu0 0
      %1180 = vmatmul.mubr.bf16.gmra.mrb[0].mxu0 %v1037
      %v1181 = vpop.f32.mrb[0].mxu0
      %v1182 = vadd.f32 %v890, %v1181
      %v1183 = vpop.f32.mrb[0].mxu0
      %v1184 = vpop.f32.mrb[0].mxu0
      %v1185 = vadd.f32 %v893, %v1184
      %v1186 = vpop.f32.mrb[0].mxu0
      %1187 = vmatprep.mubr.bf16.mxu0 0
      %1188 = vmatmul.mubr.bf16.gmra.mrb[0].mxu0 %v1040
      %v1189 = vpop.f32.mrb[0].mxu0
      %v1190 = vadd.f32 %v898, %v1189
      %v1191 = vpop.f32.mrb[0].mxu0
      %v1192 = vpop.f32.mrb[0].mxu0
      %v1193 = vadd.f32 %v901, %v1192
      %v1194 = vpop.f32.mrb[0].mxu0
      %1195 = vmatprep.mubr.bf16.mxu0 0
      %1196 = vmatmul.mubr.bf16.gmra.mrb[0].mxu0 %v1043
      %v1197 = vpop.f32.mrb[0].mxu0
      %v1198 = vadd.f32 %v906, %v1197
      %v1199 = vpop.f32.mrb[0].mxu0
      %v1200 = vpop.f32.mrb[0].mxu0
      %v1201 = vadd.f32 %v909, %v1200
      %v1202 = vpop.f32.mrb[0].mxu0
      %1203 = vmatprep.mubr.bf16.mxu0 0
      %1204 = vmatmul.mubr.bf16.gmra.mrb[0].mxu0 %v1046
      %v1205 = vpop.f32.mrb[0].mxu0
      %v1206 = vadd.f32 %v914, %v1205
      %v1207 = vpop.f32.mrb[0].mxu0
      %v1208 = vpop.f32.mrb[0].mxu0
      %v1209 = vadd.f32 %v917, %v1208
      %v1210 = vpop.f32.mrb[0].mxu0
      %1211 = vdwg.mxu0
      %vm1228 = vcmask 1042432
      %vm1229 = vcmask 1046532
      %vm1230 = vmor %vm1228, %vm1229
      %v1231 = vrot.slane %v220, 5
      %v1232 = vrot.slane %v1231, 4
      %v1233 = vrot.slane %v221, 5
      %v1234 = vsel %vm1230, %v1232, %v1233
      %v1235 = vrot.slane %v1233, 4
      %v1236 = vrot.slane %v222, 5
      %v1237 = vsel %vm1230, %v1235, %v1236
      %v1238 = vrot.slane %v223, 5
      %v1239 = vrot.slane %v1238, 4
      %v1240 = vrot.slane %v224, 5
      %v1241 = vsel %vm1230, %v1239, %v1240
      %v1242 = vrot.slane %v1240, 4
      %v1243 = vrot.slane %v225, 5
      %v1244 = vsel %vm1230, %v1242, %v1243
      %v1245 = vrot.slane %v226, 5
      %v1246 = vrot.slane %v1245, 4
      %v1247 = vrot.slane %v227, 5
      %v1248 = vsel %vm1230, %v1246, %v1247
      %v1249 = vrot.slane %v1247, 4
      %v1250 = vrot.slane %v228, 5
      %v1251 = vsel %vm1230, %v1249, %v1250
      %v1252 = vrot.slane %v229, 5
      %v1253 = vrot.slane %v1252, 4
      %v1254 = vrot.slane %v230, 5
      %v1255 = vsel %vm1230, %v1253, %v1254
      %v1256 = vrot.slane %v1254, 4
      %v1257 = vrot.slane %v231, 5
      %v1258 = vsel %vm1230, %v1256, %v1257
      %v1259 = vrot.slane %v232, 5
      %v1260 = vrot.slane %v1259, 4
      %v1261 = vrot.slane %v233, 5
      %v1262 = vsel %vm1230, %v1260, %v1261
      %v1263 = vrot.slane %v1261, 4
      %v1264 = vrot.slane %v234, 5
      %v1265 = vsel %vm1230, %v1263, %v1264
      %v1266 = vrot.slane %v235, 5
      %v1267 = vrot.slane %v1266, 4
      %v1268 = vrot.slane %v236, 5
      %v1269 = vsel %vm1230, %v1267, %v1268
      %v1270 = vrot.slane %v1268, 4
      %v1271 = vrot.slane %v237, 5
      %v1272 = vsel %vm1230, %v1270, %v1271
      %v1273 = vrot.slane %v238, 5
      %v1274 = vrot.slane %v1273, 4
      %v1275 = vrot.slane %v239, 5
      %v1276 = vsel %vm1230, %v1274, %v1275
      %v1277 = vrot.slane %v1275, 4
      %v1278 = vrot.slane %v240, 5
      %v1279 = vsel %vm1230, %v1277, %v1278
      %v1280 = vrot.slane %v241, 5
      %v1281 = vrot.slane %v1280, 4
      %v1282 = vrot.slane %v242, 5
      %v1283 = vsel %vm1230, %v1281, %v1282
      %v1284 = vrot.slane %v1282, 4
      %v1285 = vrot.slane %v243, 5
      %v1286 = vsel %vm1230, %v1284, %v1285
      %v1287 = vrot.slane %v244, 5
      %v1288 = vrot.slane %v1287, 4
      %v1289 = vrot.slane %v245, 5
      %v1290 = vsel %vm1230, %v1288, %v1289
      %v1291 = vrot.slane %v1289, 4
      %v1292 = vrot.slane %v246, 5
      %v1293 = vsel %vm1230, %v1291, %v1292
      %v1294 = vrot.slane %v247, 5
      %v1295 = vrot.slane %v1294, 4
      %v1296 = vrot.slane %v248, 5
      %v1297 = vsel %vm1230, %v1295, %v1296
      %v1298 = vrot.slane %v1296, 4
      %v1299 = vrot.slane %v249, 5
      %v1300 = vsel %vm1230, %v1298, %v1299
      %v1301 = vrot.slane %v250, 5
      %v1302 = vrot.slane %v1301, 4
      %v1303 = vrot.slane %v251, 5
      %v1304 = vsel %vm1230, %v1302, %v1303
      %v1305 = vrot.slane %v1303, 4
      %v1306 = vrot.slane %v252, 5
      %v1307 = vsel %vm1230, %v1305, %v1306
      %v1308 = vrot.slane %v253, 5
      %v1309 = vrot.slane %v1308, 4
      %v1310 = vrot.slane %v254, 5
      %v1311 = vsel %vm1230, %v1309, %v1310
      %v1312 = vrot.slane %v1310, 4
      %v1313 = vrot.slane %v255, 5
      %v1314 = vsel %vm1230, %v1312, %v1313
      %v1315 = vrot.slane %v256, 5
      %v1316 = vrot.slane %v1315, 4
      %v1317 = vrot.slane %v257, 5
      %v1318 = vsel %vm1230, %v1316, %v1317
      %v1319 = vrot.slane %v1317, 4
      %v1320 = vrot.slane %v258, 5
      %v1321 = vsel %vm1230, %v1319, %v1320
      %v1322 = vrot.slane %v259, 5
      %v1323 = vrot.slane %v1322, 4
      %v1324 = vrot.slane %v260, 5
      %v1325 = vsel %vm1230, %v1323, %v1324
      %v1326 = vrot.slane %v1324, 4
      %v1327 = vrot.slane %v261, 5
      %v1328 = vsel %vm1230, %v1326, %v1327
      %v1329 = vrot.slane %v262, 5
      %v1330 = vrot.slane %v1329, 4
      %v1331 = vrot.slane %v263, 5
      %v1332 = vsel %vm1230, %v1330, %v1331
      %v1333 = vrot.slane %v1331, 4
      %v1334 = vrot.slane %v264, 5
      %v1335 = vsel %vm1230, %v1333, %v1334
      %v1336 = vrot.slane %v265, 5
      %v1337 = vrot.slane %v1336, 4
      %v1338 = vrot.slane %v266, 5
      %v1339 = vsel %vm1230, %v1337, %v1338
      %v1340 = vrot.slane %v1338, 4
      %v1341 = vrot.slane %v267, 5
      %v1342 = vsel %vm1230, %v1340, %v1341
      %s1343 = scalar_lea.vmem %s1, 8
      %v1344 = vld [vmem:[%s1343] sm:$0xf]
      %v1345 = vunpack.c.l.b16 %v1234
      %v1346 = vunpack.c.l.b16 %v1237
      %v1347 = vunpack.c.l.b16 %v1241
      %v1348 = vunpack.c.l.b16 %v1244
      %v1349 = vunpack.c.l.b16 %v1248
      %v1350 = vunpack.c.l.b16 %v1251
      %v1351 = vunpack.c.l.b16 %v1255
      %v1352 = vunpack.c.l.b16 %v1258
      %v1353 = vunpack.c.l.b16 %v1262
      %v1354 = vunpack.c.l.b16 %v1265
      %v1355 = vunpack.c.l.b16 %v1269
      %v1356 = vunpack.c.l.b16 %v1272
      %v1357 = vunpack.c.l.b16 %v1276
      %v1358 = vunpack.c.l.b16 %v1279
      %v1359 = vunpack.c.l.b16 %v1283
      %v1360 = vunpack.c.l.b16 %v1286
      %v1361 = vunpack.c.l.b16 %v1290
      %v1362 = vunpack.c.l.b16 %v1293
      %v1363 = vunpack.c.l.b16 %v1297
      %v1364 = vunpack.c.l.b16 %v1300
      %v1365 = vunpack.c.l.b16 %v1304
      %v1366 = vunpack.c.l.b16 %v1307
      %v1367 = vunpack.c.l.b16 %v1311
      %v1368 = vunpack.c.l.b16 %v1314
      %v1369 = vunpack.c.l.b16 %v1318
      %v1370 = vunpack.c.l.b16 %v1321
      %v1371 = vunpack.c.l.b16 %v1325
      %v1372 = vunpack.c.l.b16 %v1328
      %v1373 = vunpack.c.l.b16 %v1332
      %v1374 = vunpack.c.l.b16 %v1335
      %v1375 = vunpack.c.l.b16 %v1339
      %v1376 = vunpack.c.l.b16 %v1342
      %v1377 = vpack.c.b16 %v1346, %v1345
      %v1378 = vpack.c.b16 %v1348, %v1347
      %v1379 = vpack.c.b16 %v1350, %v1349
      %v1380 = vpack.c.b16 %v1352, %v1351
      %v1381 = vpack.c.b16 %v1354, %v1353
      %v1382 = vpack.c.b16 %v1356, %v1355
      %v1383 = vpack.c.b16 %v1358, %v1357
      %v1384 = vpack.c.b16 %v1360, %v1359
      %v1385 = vpack.c.b16 %v1362, %v1361
      %v1386 = vpack.c.b16 %v1364, %v1363
      %v1387 = vpack.c.b16 %v1366, %v1365
      %v1388 = vpack.c.b16 %v1368, %v1367
      %v1389 = vpack.c.b16 %v1370, %v1369
      %v1390 = vpack.c.b16 %v1372, %v1371
      %v1391 = vpack.c.b16 %v1374, %v1373
      %v1392 = vpack.c.b16 %v1376, %v1375
      %v1394 = vsel %vm706, %v1377, 0
      %v1397 = vsel %vm706, %v1378, 0
      %v1400 = vsel %vm706, %v1379, 0
      %v1403 = vsel %vm706, %v1380, 0
      %v1406 = vsel %vm706, %v1381, 0
      %v1409 = vsel %vm706, %v1382, 0
      %v1412 = vsel %vm706, %v1383, 0
      %v1415 = vsel %vm706, %v1384, 0
      %v1418 = vsel %vm706, %v1385, 0
      %v1421 = vsel %vm706, %v1386, 0
      %v1424 = vsel %vm706, %v1387, 0
      %v1427 = vsel %vm706, %v1388, 0
      %v1430 = vsel %vm706, %v1389, 0
      %v1433 = vsel %vm706, %v1390, 0
      %v1436 = vsel %vm706, %v1391, 0
      %v1439 = vsel %vm706, %v1392, 0
      %v1442 = vsel %vm755, %v1344, 0
      %1444 = vmatprep.subr.bf16.mxu0 0
      %1445 = vmatpush1.bf16.msra.mxu0 %v1442
      %1446 = vmatprep.subr.bf16.mxu0 0
      %1447 = vmatpush1.bf16.msra.mxu0 0
      %1448 = vmatprep.subr.bf16.mxu0 0
      %1449 = vmatpush1.bf16.msra.mxu0 0
      %1450 = vmatprep.subr.bf16.mxu0 0
      %1451 = vmatpush1.bf16.msra.mxu0 0
      %1452 = vmatprep.subr.bf16.mxu0 0
      %1453 = vmatpush1.bf16.msra.mxu0 0
      %1454 = vmatprep.subr.bf16.mxu0 0
      %1455 = vmatpush1.bf16.msra.mxu0 0
      %1456 = vmatprep.subr.bf16.mxu0 0
      %1457 = vmatpush1.bf16.msra.mxu0 0
      %1458 = vmatprep.subr.bf16.mxu0 0
      %1459 = vmatpush1.bf16.msra.mxu0 0
      %1460 = vmatprep.subr.bf16.mxu0 0
      %1461 = vmatpush1.bf16.msra.mxu0 0
      %1462 = vmatprep.subr.bf16.mxu0 0
      %1463 = vmatpush1.bf16.msra.mxu0 0
      %1464 = vmatprep.subr.bf16.mxu0 0
      %1465 = vmatpush1.bf16.msra.mxu0 0
      %1466 = vmatprep.subr.bf16.mxu0 0
      %1467 = vmatpush1.bf16.msra.mxu0 0
      %1468 = vmatprep.subr.bf16.mxu0 0
      %1469 = vmatpush1.bf16.msra.mxu0 0
      %1470 = vmatprep.subr.bf16.mxu0 0
      %1471 = vmatpush1.bf16.msra.mxu0 0
      %1472 = vmatprep.subr.bf16.mxu0 0
      %1473 = vmatpush1.bf16.msra.mxu0 0
      %1474 = vmatprep.subr.bf16.mxu0 0
      %1475 = vmatpush1.bf16.msra.mxu0 0
      %1476 = vmatprep.mubr.bf16.mxu0 0
      %1477 = vmatmul.mubr.bf16.gmra.mrb[0].mxu0 %v1394
      %v1478 = vpop.f32.mrb[0].mxu0
      %v1479 = vadd.f32 0.0, %v1478
      %v1480 = vpop.f32.mrb[0].mxu0
      %v1481 = vpop.f32.mrb[0].mxu0
      %v1482 = vadd.f32 0.0, %v1481
      %v1483 = vpop.f32.mrb[0].mxu0
      %1484 = vmatprep.mubr.bf16.mxu0 0
      %1485 = vmatmul.mubr.bf16.gmra.mrb[0].mxu0 %v1397
      %v1486 = vpop.f32.mrb[0].mxu0
      %v1487 = vadd.f32 0.0, %v1486
      %v1488 = vpop.f32.mrb[0].mxu0
      %v1489 = vpop.f32.mrb[0].mxu0
      %v1490 = vadd.f32 0.0, %v1489
      %v1491 = vpop.f32.mrb[0].mxu0
      %1492 = vmatprep.mubr.bf16.mxu0 0
      %1493 = vmatmul.mubr.bf16.gmra.mrb[0].mxu0 %v1400
      %v1494 = vpop.f32.mrb[0].mxu0
      %v1495 = vadd.f32 0.0, %v1494
      %v1496 = vpop.f32.mrb[0].mxu0
      %v1497 = vpop.f32.mrb[0].mxu0
      %v1498 = vadd.f32 0.0, %v1497
      %v1499 = vpop.f32.mrb[0].mxu0
      %1500 = vmatprep.mubr.bf16.mxu0 0
      %1501 = vmatmul.mubr.bf16.gmra.mrb[0].mxu0 %v1403
      %v1502 = vpop.f32.mrb[0].mxu0
      %v1503 = vadd.f32 0.0, %v1502
      %v1504 = vpop.f32.mrb[0].mxu0
      %v1505 = vpop.f32.mrb[0].mxu0
      %v1506 = vadd.f32 0.0, %v1505
      %v1507 = vpop.f32.mrb[0].mxu0
      %1508 = vmatprep.mubr.bf16.mxu0 0
      %1509 = vmatmul.mubr.bf16.gmra.mrb[0].mxu0 %v1406
      %v1510 = vpop.f32.mrb[0].mxu0
      %v1511 = vadd.f32 0.0, %v1510
      %v1512 = vpop.f32.mrb[0].mxu0
      %v1513 = vpop.f32.mrb[0].mxu0
      %v1514 = vadd.f32 0.0, %v1513
      %v1515 = vpop.f32.mrb[0].mxu0
      %1516 = vmatprep.mubr.bf16.mxu0 0
      %1517 = vmatmul.mubr.bf16.gmra.mrb[0].mxu0 %v1409
      %v1518 = vpop.f32.mrb[0].mxu0
      %v1519 = vadd.f32 0.0, %v1518
      %v1520 = vpop.f32.mrb[0].mxu0
      %v1521 = vpop.f32.mrb[0].mxu0
      %v1522 = vadd.f32 0.0, %v1521
      %v1523 = vpop.f32.mrb[0].mxu0
      %1524 = vmatprep.mubr.bf16.mxu0 0
      %1525 = vmatmul.mubr.bf16.gmra.mrb[0].mxu0 %v1412
      %v1526 = vpop.f32.mrb[0].mxu0
      %v1527 = vadd.f32 0.0, %v1526
      %v1528 = vpop.f32.mrb[0].mxu0
      %v1529 = vpop.f32.mrb[0].mxu0
      %v1530 = vadd.f32 0.0, %v1529
      %v1531 = vpop.f32.mrb[0].mxu0
      %1532 = vmatprep.mubr.bf16.mxu0 0
      %1533 = vmatmul.mubr.bf16.gmra.mrb[0].mxu0 %v1415
      %v1534 = vpop.f32.mrb[0].mxu0
      %v1535 = vadd.f32 0.0, %v1534
      %v1536 = vpop.f32.mrb[0].mxu0
      %v1537 = vpop.f32.mrb[0].mxu0
      %v1538 = vadd.f32 0.0, %v1537
      %v1539 = vpop.f32.mrb[0].mxu0
      %1540 = vmatprep.mubr.bf16.mxu0 0
      %1541 = vmatmul.mubr.bf16.gmra.mrb[0].mxu0 %v1418
      %v1542 = vpop.f32.mrb[0].mxu0
      %v1543 = vadd.f32 0.0, %v1542
      %v1544 = vpop.f32.mrb[0].mxu0
      %v1545 = vpop.f32.mrb[0].mxu0
      %v1546 = vadd.f32 0.0, %v1545
      %v1547 = vpop.f32.mrb[0].mxu0
      %1548 = vmatprep.mubr.bf16.mxu0 0
      %1549 = vmatmul.mubr.bf16.gmra.mrb[0].mxu0 %v1421
      %v1550 = vpop.f32.mrb[0].mxu0
      %v1551 = vadd.f32 0.0, %v1550
      %v1552 = vpop.f32.mrb[0].mxu0
      %v1553 = vpop.f32.mrb[0].mxu0
      %v1554 = vadd.f32 0.0, %v1553
      %v1555 = vpop.f32.mrb[0].mxu0
      %1556 = vmatprep.mubr.bf16.mxu0 0
      %1557 = vmatmul.mubr.bf16.gmra.mrb[0].mxu0 %v1424
      %v1558 = vpop.f32.mrb[0].mxu0
      %v1559 = vadd.f32 0.0, %v1558
      %v1560 = vpop.f32.mrb[0].mxu0
      %v1561 = vpop.f32.mrb[0].mxu0
      %v1562 = vadd.f32 0.0, %v1561
      %v1563 = vpop.f32.mrb[0].mxu0
      %1564 = vmatprep.mubr.bf16.mxu0 0
      %1565 = vmatmul.mubr.bf16.gmra.mrb[0].mxu0 %v1427
      %v1566 = vpop.f32.mrb[0].mxu0
      %v1567 = vadd.f32 0.0, %v1566
      %v1568 = vpop.f32.mrb[0].mxu0
      %v1569 = vpop.f32.mrb[0].mxu0
      %v1570 = vadd.f32 0.0, %v1569
      %v1571 = vpop.f32.mrb[0].mxu0
      %1572 = vmatprep.mubr.bf16.mxu0 0
      %1573 = vmatmul.mubr.bf16.gmra.mrb[0].mxu0 %v1430
      %v1574 = vpop.f32.mrb[0].mxu0
      %v1575 = vadd.f32 0.0, %v1574
      %v1576 = vpop.f32.mrb[0].mxu0
      %v1577 = vpop.f32.mrb[0].mxu0
      %v1578 = vadd.f32 0.0, %v1577
      %v1579 = vpop.f32.mrb[0].mxu0
      %1580 = vmatprep.mubr.bf16.mxu0 0
      %1581 = vmatmul.mubr.bf16.gmra.mrb[0].mxu0 %v1433
      %v1582 = vpop.f32.mrb[0].mxu0
      %v1583 = vadd.f32 0.0, %v1582
      %v1584 = vpop.f32.mrb[0].mxu0
      %v1585 = vpop.f32.mrb[0].mxu0
      %v1586 = vadd.f32 0.0, %v1585
      %v1587 = vpop.f32.mrb[0].mxu0
      %1588 = vmatprep.mubr.bf16.mxu0 0
      %1589 = vmatmul.mubr.bf16.gmra.mrb[0].mxu0 %v1436
      %v1590 = vpop.f32.mrb[0].mxu0
      %v1591 = vadd.f32 0.0, %v1590
      %v1592 = vpop.f32.mrb[0].mxu0
      %v1593 = vpop.f32.mrb[0].mxu0
      %v1594 = vadd.f32 0.0, %v1593
      %v1595 = vpop.f32.mrb[0].mxu0
      %1596 = vmatprep.mubr.bf16.mxu0 0
      %1597 = vmatmul.mubr.bf16.gmra.mrb[0].mxu0 %v1439
      %v1598 = vpop.f32.mrb[0].mxu0
      %v1599 = vadd.f32 0.0, %v1598
      %v1600 = vpop.f32.mrb[0].mxu0
      %v1601 = vpop.f32.mrb[0].mxu0
      %v1602 = vadd.f32 0.0, %v1601
      %v1603 = vpop.f32.mrb[0].mxu0
      %1604 = vdwg.mxu0
      %v1605 = vadd.f32 %v1086, %v1479
      %v1606 = vadd.f32 %v1089, %v1482
      %v1607 = vadd.f32 %v1094, %v1487
      %v1608 = vadd.f32 %v1097, %v1490
      %v1609 = vadd.f32 %v1102, %v1495
      %v1610 = vadd.f32 %v1105, %v1498
      %v1611 = vadd.f32 %v1110, %v1503
      %v1612 = vadd.f32 %v1113, %v1506
      %v1613 = vadd.f32 %v1118, %v1511
      %v1614 = vadd.f32 %v1121, %v1514
      %v1615 = vadd.f32 %v1126, %v1519
      %v1616 = vadd.f32 %v1129, %v1522
      %v1617 = vadd.f32 %v1134, %v1527
      %v1618 = vadd.f32 %v1137, %v1530
      %v1619 = vadd.f32 %v1142, %v1535
      %v1620 = vadd.f32 %v1145, %v1538
      %v1621 = vadd.f32 %v1150, %v1543
      %v1622 = vadd.f32 %v1153, %v1546
      %v1623 = vadd.f32 %v1158, %v1551
      %v1624 = vadd.f32 %v1161, %v1554
      %v1625 = vadd.f32 %v1166, %v1559
      %v1626 = vadd.f32 %v1169, %v1562
      %v1627 = vadd.f32 %v1174, %v1567
      %v1628 = vadd.f32 %v1177, %v1570
      %v1629 = vadd.f32 %v1182, %v1575
      %v1630 = vadd.f32 %v1185, %v1578
      %v1631 = vadd.f32 %v1190, %v1583
      %v1632 = vadd.f32 %v1193, %v1586
      %v1633 = vadd.f32 %v1198, %v1591
      %v1634 = vadd.f32 %v1201, %v1594
      %v1635 = vadd.f32 %v1206, %v1599
      %v1636 = vadd.f32 %v1209, %v1602
      %s1637 = sadd.s32 %s216, 1
      %s1638 = smul.u32 %s1637, 3
      %s1639 = smul.addr %s1638, 4
      %s1640 = scalar_lea.vmem %s196, %s1639
      %v1641 = vld [vmem:[%s1640] sm:$0xf]
      %v1642 = vld [vmem:[%s1640 + $0x4] sm:$0xf]
      %v1643 = vld [vmem:[%s1640 + $0x8] sm:$0x1]
      %v1644 = vld [vmem:[%s1640 + $0xc] sm:$0xf]
      %v1645 = vld [vmem:[%s1640 + $0x10] sm:$0xf]
      %v1646 = vld [vmem:[%s1640 + $0x14] sm:$0x1]
      %v1647 = vld [vmem:[%s1640 + $0x18] sm:$0xf]
      %v1648 = vld [vmem:[%s1640 + $0x1c] sm:$0xf]
      %v1649 = vld [vmem:[%s1640 + $0x20] sm:$0x1]
      %v1650 = vld [vmem:[%s1640 + $0x24] sm:$0xf]
      %v1651 = vld [vmem:[%s1640 + $0x28] sm:$0xf]
      %v1652 = vld [vmem:[%s1640 + $0x2c] sm:$0x1]
      %v1653 = vld [vmem:[%s1640 + $0x30] sm:$0xf]
      %v1654 = vld [vmem:[%s1640 + $0x34] sm:$0xf]
      %v1655 = vld [vmem:[%s1640 + $0x38] sm:$0x1]
      %v1656 = vld [vmem:[%s1640 + $0x3c] sm:$0xf]
      %v1657 = vld [vmem:[%s1640 + $0x40] sm:$0xf]
      %v1658 = vld [vmem:[%s1640 + $0x44] sm:$0x1]
      %v1659 = vld [vmem:[%s1640 + $0x48] sm:$0xf]
      %v1660 = vld [vmem:[%s1640 + $0x4c] sm:$0xf]
      %v1661 = vld [vmem:[%s1640 + $0x50] sm:$0x1]
      %v1662 = vld [vmem:[%s1640 + $0x54] sm:$0xf]
      %v1663 = vld [vmem:[%s1640 + $0x58] sm:$0xf]
      %v1664 = vld [vmem:[%s1640 + $0x5c] sm:$0x1]
      %v1665 = vld [vmem:[%s1640 + $0x60] sm:$0xf]
      %v1666 = vld [vmem:[%s1640 + $0x64] sm:$0xf]
      %v1667 = vld [vmem:[%s1640 + $0x68] sm:$0x1]
      %v1668 = vld [vmem:[%s1640 + $0x6c] sm:$0xf]
      %v1669 = vld [vmem:[%s1640 + $0x70] sm:$0xf]
      %v1670 = vld [vmem:[%s1640 + $0x74] sm:$0x1]
      %v1671 = vld [vmem:[%s1640 + $0x78] sm:$0xf]
      %v1672 = vld [vmem:[%s1640 + $0x7c] sm:$0xf]
      %v1673 = vld [vmem:[%s1640 + $0x80] sm:$0x1]
      %v1674 = vld [vmem:[%s1640 + $0x84] sm:$0xf]
      %v1675 = vld [vmem:[%s1640 + $0x88] sm:$0xf]
      %v1676 = vld [vmem:[%s1640 + $0x8c] sm:$0x1]
      %v1677 = vld [vmem:[%s1640 + $0x90] sm:$0xf]
      %v1678 = vld [vmem:[%s1640 + $0x94] sm:$0xf]
      %v1679 = vld [vmem:[%s1640 + $0x98] sm:$0x1]
      %v1680 = vld [vmem:[%s1640 + $0x9c] sm:$0xf]
      %v1681 = vld [vmem:[%s1640 + $0xa0] sm:$0xf]
      %v1682 = vld [vmem:[%s1640 + $0xa4] sm:$0x1]
      %v1683 = vld [vmem:[%s1640 + $0xa8] sm:$0xf]
      %v1684 = vld [vmem:[%s1640 + $0xac] sm:$0xf]
      %v1685 = vld [vmem:[%s1640 + $0xb0] sm:$0x1]
      %v1686 = vld [vmem:[%s1640 + $0xb4] sm:$0xf]
      %v1687 = vld [vmem:[%s1640 + $0xb8] sm:$0xf]
      %v1688 = vld [vmem:[%s1640 + $0xbc] sm:$0x1]
      %s1689 = scalar_lea.vmem %s1, 12
      %v1690 = vld [vmem:[%s1689] sm:$0xf]
      %v1723 = vunpack.c.l.b16 %v1641
      %v1724 = vunpack.c.l.b16 %v1642
      %v1725 = vunpack.c.l.b16 %v1644
      %v1726 = vunpack.c.l.b16 %v1645
      %v1727 = vunpack.c.l.b16 %v1647
      %v1728 = vunpack.c.l.b16 %v1648
      %v1729 = vunpack.c.l.b16 %v1650
      %v1730 = vunpack.c.l.b16 %v1651
      %v1731 = vunpack.c.l.b16 %v1653
      %v1732 = vunpack.c.l.b16 %v1654
      %v1733 = vunpack.c.l.b16 %v1656
      %v1734 = vunpack.c.l.b16 %v1657
      %v1735 = vunpack.c.l.b16 %v1659
      %v1736 = vunpack.c.l.b16 %v1660
      %v1737 = vunpack.c.l.b16 %v1662
      %v1738 = vunpack.c.l.b16 %v1663
      %v1739 = vunpack.c.l.b16 %v1665
      %v1740 = vunpack.c.l.b16 %v1666
      %v1741 = vunpack.c.l.b16 %v1668
      %v1742 = vunpack.c.l.b16 %v1669
      %v1743 = vunpack.c.l.b16 %v1671
      %v1744 = vunpack.c.l.b16 %v1672
      %v1745 = vunpack.c.l.b16 %v1674
      %v1746 = vunpack.c.l.b16 %v1675
      %v1747 = vunpack.c.l.b16 %v1677
      %v1748 = vunpack.c.l.b16 %v1678
      %v1749 = vunpack.c.l.b16 %v1680
      %v1750 = vunpack.c.l.b16 %v1681
      %v1751 = vunpack.c.l.b16 %v1683
      %v1752 = vunpack.c.l.b16 %v1684
      %v1753 = vunpack.c.l.b16 %v1686
      %v1754 = vunpack.c.l.b16 %v1687
      %v1755 = vpack.c.b16 %v1724, %v1723
      %v1756 = vpack.c.b16 %v1726, %v1725
      %v1757 = vpack.c.b16 %v1728, %v1727
      %v1758 = vpack.c.b16 %v1730, %v1729
      %v1759 = vpack.c.b16 %v1732, %v1731
      %v1760 = vpack.c.b16 %v1734, %v1733
      %v1761 = vpack.c.b16 %v1736, %v1735
      %v1762 = vpack.c.b16 %v1738, %v1737
      %v1763 = vpack.c.b16 %v1740, %v1739
      %v1764 = vpack.c.b16 %v1742, %v1741
      %v1765 = vpack.c.b16 %v1744, %v1743
      %v1766 = vpack.c.b16 %v1746, %v1745
      %v1767 = vpack.c.b16 %v1748, %v1747
      %v1768 = vpack.c.b16 %v1750, %v1749
      %v1769 = vpack.c.b16 %v1752, %v1751
      %v1770 = vpack.c.b16 %v1754, %v1753
      %v1772 = vsel %vm706, %v1755, 0
      %v1775 = vsel %vm706, %v1756, 0
      %v1778 = vsel %vm706, %v1757, 0
      %v1781 = vsel %vm706, %v1758, 0
      %v1784 = vsel %vm706, %v1759, 0
      %v1787 = vsel %vm706, %v1760, 0
      %v1790 = vsel %vm706, %v1761, 0
      %v1793 = vsel %vm706, %v1762, 0
      %v1796 = vsel %vm706, %v1763, 0
      %v1799 = vsel %vm706, %v1764, 0
      %v1802 = vsel %vm706, %v1765, 0
      %v1805 = vsel %vm706, %v1766, 0
      %v1808 = vsel %vm706, %v1767, 0
      %v1811 = vsel %vm706, %v1768, 0
      %v1814 = vsel %vm706, %v1769, 0
      %v1817 = vsel %vm706, %v1770, 0
      %v1820 = vsel %vm755, %v1690, 0
      %1822 = vmatprep.subr.bf16.mxu0 0
      %1823 = vmatpush1.bf16.msra.mxu0 %v1820
      %1824 = vmatprep.subr.bf16.mxu0 0
      %1825 = vmatpush1.bf16.msra.mxu0 0
      %1826 = vmatprep.subr.bf16.mxu0 0
      %1827 = vmatpush1.bf16.msra.mxu0 0
      %1828 = vmatprep.subr.bf16.mxu0 0
      %1829 = vmatpush1.bf16.msra.mxu0 0
      %1830 = vmatprep.subr.bf16.mxu0 0
      %1831 = vmatpush1.bf16.msra.mxu0 0
      %1832 = vmatprep.subr.bf16.mxu0 0
      %1833 = vmatpush1.bf16.msra.mxu0 0
      %1834 = vmatprep.subr.bf16.mxu0 0
      %1835 = vmatpush1.bf16.msra.mxu0 0
      %1836 = vmatprep.subr.bf16.mxu0 0
      %1837 = vmatpush1.bf16.msra.mxu0 0
      %1838 = vmatprep.subr.bf16.mxu0 0
      %1839 = vmatpush1.bf16.msra.mxu0 0
      %1840 = vmatprep.subr.bf16.mxu0 0
      %1841 = vmatpush1.bf16.msra.mxu0 0
      %1842 = vmatprep.subr.bf16.mxu0 0
      %1843 = vmatpush1.bf16.msra.mxu0 0
      %1844 = vmatprep.subr.bf16.mxu0 0
      %1845 = vmatpush1.bf16.msra.mxu0 0
      %1846 = vmatprep.subr.bf16.mxu0 0
      %1847 = vmatpush1.bf16.msra.mxu0 0
      %1848 = vmatprep.subr.bf16.mxu0 0
      %1849 = vmatpush1.bf16.msra.mxu0 0
      %1850 = vmatprep.subr.bf16.mxu0 0
      %1851 = vmatpush1.bf16.msra.mxu0 0
      %1852 = vmatprep.subr.bf16.mxu0 0
      %1853 = vmatpush1.bf16.msra.mxu0 0
      %1854 = vmatprep.mubr.bf16.mxu0 0
      %1855 = vmatmul.mubr.bf16.gmra.mrb[0].mxu0 %v1772
      %v1856 = vpop.f32.mrb[0].mxu0
      %v1857 = vadd.f32 0.0, %v1856
      %v1858 = vpop.f32.mrb[0].mxu0
      %v1859 = vpop.f32.mrb[0].mxu0
      %v1860 = vadd.f32 0.0, %v1859
      %v1861 = vpop.f32.mrb[0].mxu0
      %1862 = vmatprep.mubr.bf16.mxu0 0
      %1863 = vmatmul.mubr.bf16.gmra.mrb[0].mxu0 %v1775
      %v1864 = vpop.f32.mrb[0].mxu0
      %v1865 = vadd.f32 0.0, %v1864
      %v1866 = vpop.f32.mrb[0].mxu0
      %v1867 = vpop.f32.mrb[0].mxu0
      %v1868 = vadd.f32 0.0, %v1867
      %v1869 = vpop.f32.mrb[0].mxu0
      %1870 = vmatprep.mubr.bf16.mxu0 0
      %1871 = vmatmul.mubr.bf16.gmra.mrb[0].mxu0 %v1778
      %v1872 = vpop.f32.mrb[0].mxu0
      %v1873 = vadd.f32 0.0, %v1872
      %v1874 = vpop.f32.mrb[0].mxu0
      %v1875 = vpop.f32.mrb[0].mxu0
      %v1876 = vadd.f32 0.0, %v1875
      %v1877 = vpop.f32.mrb[0].mxu0
      %1878 = vmatprep.mubr.bf16.mxu0 0
      %1879 = vmatmul.mubr.bf16.gmra.mrb[0].mxu0 %v1781
      %v1880 = vpop.f32.mrb[0].mxu0
      %v1881 = vadd.f32 0.0, %v1880
      %v1882 = vpop.f32.mrb[0].mxu0
      %v1883 = vpop.f32.mrb[0].mxu0
      %v1884 = vadd.f32 0.0, %v1883
      %v1885 = vpop.f32.mrb[0].mxu0
      %1886 = vmatprep.mubr.bf16.mxu0 0
      %1887 = vmatmul.mubr.bf16.gmra.mrb[0].mxu0 %v1784
      %v1888 = vpop.f32.mrb[0].mxu0
      %v1889 = vadd.f32 0.0, %v1888
      %v1890 = vpop.f32.mrb[0].mxu0
      %v1891 = vpop.f32.mrb[0].mxu0
      %v1892 = vadd.f32 0.0, %v1891
      %v1893 = vpop.f32.mrb[0].mxu0
      %1894 = vmatprep.mubr.bf16.mxu0 0
      %1895 = vmatmul.mubr.bf16.gmra.mrb[0].mxu0 %v1787
      %v1896 = vpop.f32.mrb[0].mxu0
      %v1897 = vadd.f32 0.0, %v1896
      %v1898 = vpop.f32.mrb[0].mxu0
      %v1899 = vpop.f32.mrb[0].mxu0
      %v1900 = vadd.f32 0.0, %v1899
      %v1901 = vpop.f32.mrb[0].mxu0
      %1902 = vmatprep.mubr.bf16.mxu0 0
      %1903 = vmatmul.mubr.bf16.gmra.mrb[0].mxu0 %v1790
      %v1904 = vpop.f32.mrb[0].mxu0
      %v1905 = vadd.f32 0.0, %v1904
      %v1906 = vpop.f32.mrb[0].mxu0
      %v1907 = vpop.f32.mrb[0].mxu0
      %v1908 = vadd.f32 0.0, %v1907
      %v1909 = vpop.f32.mrb[0].mxu0
      %1910 = vmatprep.mubr.bf16.mxu0 0
      %1911 = vmatmul.mubr.bf16.gmra.mrb[0].mxu0 %v1793
      %v1912 = vpop.f32.mrb[0].mxu0
      %v1913 = vadd.f32 0.0, %v1912
      %v1914 = vpop.f32.mrb[0].mxu0
      %v1915 = vpop.f32.mrb[0].mxu0
      %v1916 = vadd.f32 0.0, %v1915
      %v1917 = vpop.f32.mrb[0].mxu0
      %1918 = vmatprep.mubr.bf16.mxu0 0
      %1919 = vmatmul.mubr.bf16.gmra.mrb[0].mxu0 %v1796
      %v1920 = vpop.f32.mrb[0].mxu0
      %v1921 = vadd.f32 0.0, %v1920
      %v1922 = vpop.f32.mrb[0].mxu0
      %v1923 = vpop.f32.mrb[0].mxu0
      %v1924 = vadd.f32 0.0, %v1923
      %v1925 = vpop.f32.mrb[0].mxu0
      %1926 = vmatprep.mubr.bf16.mxu0 0
      %1927 = vmatmul.mubr.bf16.gmra.mrb[0].mxu0 %v1799
      %v1928 = vpop.f32.mrb[0].mxu0
      %v1929 = vadd.f32 0.0, %v1928
      %v1930 = vpop.f32.mrb[0].mxu0
      %v1931 = vpop.f32.mrb[0].mxu0
      %v1932 = vadd.f32 0.0, %v1931
      %v1933 = vpop.f32.mrb[0].mxu0
      %1934 = vmatprep.mubr.bf16.mxu0 0
      %1935 = vmatmul.mubr.bf16.gmra.mrb[0].mxu0 %v1802
      %v1936 = vpop.f32.mrb[0].mxu0
      %v1937 = vadd.f32 0.0, %v1936
      %v1938 = vpop.f32.mrb[0].mxu0
      %v1939 = vpop.f32.mrb[0].mxu0
      %v1940 = vadd.f32 0.0, %v1939
      %v1941 = vpop.f32.mrb[0].mxu0
      %1942 = vmatprep.mubr.bf16.mxu0 0
      %1943 = vmatmul.mubr.bf16.gmra.mrb[0].mxu0 %v1805
      %v1944 = vpop.f32.mrb[0].mxu0
      %v1945 = vadd.f32 0.0, %v1944
      %v1946 = vpop.f32.mrb[0].mxu0
      %v1947 = vpop.f32.mrb[0].mxu0
      %v1948 = vadd.f32 0.0, %v1947
      %v1949 = vpop.f32.mrb[0].mxu0
      %1950 = vmatprep.mubr.bf16.mxu0 0
      %1951 = vmatmul.mubr.bf16.gmra.mrb[0].mxu0 %v1808
      %v1952 = vpop.f32.mrb[0].mxu0
      %v1953 = vadd.f32 0.0, %v1952
      %v1954 = vpop.f32.mrb[0].mxu0
      %v1955 = vpop.f32.mrb[0].mxu0
      %v1956 = vadd.f32 0.0, %v1955
      %v1957 = vpop.f32.mrb[0].mxu0
      %1958 = vmatprep.mubr.bf16.mxu0 0
      %1959 = vmatmul.mubr.bf16.gmra.mrb[0].mxu0 %v1811
      %v1960 = vpop.f32.mrb[0].mxu0
      %v1961 = vadd.f32 0.0, %v1960
      %v1962 = vpop.f32.mrb[0].mxu0
      %v1963 = vpop.f32.mrb[0].mxu0
      %v1964 = vadd.f32 0.0, %v1963
      %v1965 = vpop.f32.mrb[0].mxu0
      %1966 = vmatprep.mubr.bf16.mxu0 0
      %1967 = vmatmul.mubr.bf16.gmra.mrb[0].mxu0 %v1814
      %v1968 = vpop.f32.mrb[0].mxu0
      %v1969 = vadd.f32 0.0, %v1968
      %v1970 = vpop.f32.mrb[0].mxu0
      %v1971 = vpop.f32.mrb[0].mxu0
      %v1972 = vadd.f32 0.0, %v1971
      %v1973 = vpop.f32.mrb[0].mxu0
      %1974 = vmatprep.mubr.bf16.mxu0 0
      %1975 = vmatmul.mubr.bf16.gmra.mrb[0].mxu0 %v1817
      %v1976 = vpop.f32.mrb[0].mxu0
      %v1977 = vadd.f32 0.0, %v1976
      %v1978 = vpop.f32.mrb[0].mxu0
      %v1979 = vpop.f32.mrb[0].mxu0
      %v1980 = vadd.f32 0.0, %v1979
      %v1981 = vpop.f32.mrb[0].mxu0
      %1982 = vdwg.mxu0
      %v1983 = vadd.f32 %v1605, %v1857
      %v1984 = vadd.f32 %v1606, %v1860
      %v1985 = vadd.f32 %v1607, %v1865
      %v1986 = vadd.f32 %v1608, %v1868
      %v1987 = vadd.f32 %v1609, %v1873
      %v1988 = vadd.f32 %v1610, %v1876
      %v1989 = vadd.f32 %v1611, %v1881
      %v1990 = vadd.f32 %v1612, %v1884
      %v1991 = vadd.f32 %v1613, %v1889
      %v1992 = vadd.f32 %v1614, %v1892
      %v1993 = vadd.f32 %v1615, %v1897
      %v1994 = vadd.f32 %v1616, %v1900
      %v1995 = vadd.f32 %v1617, %v1905
      %v1996 = vadd.f32 %v1618, %v1908
      %v1997 = vadd.f32 %v1619, %v1913
      %v1998 = vadd.f32 %v1620, %v1916
      %v1999 = vadd.f32 %v1621, %v1921
      %v2000 = vadd.f32 %v1622, %v1924
      %v2001 = vadd.f32 %v1623, %v1929
      %v2002 = vadd.f32 %v1624, %v1932
      %v2003 = vadd.f32 %v1625, %v1937
      %v2004 = vadd.f32 %v1626, %v1940
      %v2005 = vadd.f32 %v1627, %v1945
      %v2006 = vadd.f32 %v1628, %v1948
      %v2007 = vadd.f32 %v1629, %v1953
      %v2008 = vadd.f32 %v1630, %v1956
      %v2009 = vadd.f32 %v1631, %v1961
      %v2010 = vadd.f32 %v1632, %v1964
      %v2011 = vadd.f32 %v1633, %v1969
      %v2012 = vadd.f32 %v1634, %v1972
      %v2013 = vadd.f32 %v1635, %v1977
      %v2014 = vadd.f32 %v1636, %v1980
      %v2016 = vshrl.u32 %v1641, 16
      %v2018 = vrot.slane %v2016, 4
      %v2019 = vshll.u32 %v1641, 16
      %v2021 = vrot.slane %v2019, 5
      %v2022 = vor.u32 %v2018, %v2021
      %v2023 = vrot.slane %v2022, 4
      %v2025 = vshll.u32 %v1642, 16
      %v2027 = vrot.slane %v2025, 5
      %v2028 = vsel %vm271, %v2023, %v2027
      %v2029 = vshrl.u32 %v1642, 16
      %v2031 = vrot.slane %v2029, 4
      %v2032 = vor.u32 %v2031, %v2027
      %v2033 = vrot.slane %v2032, 4
      %v2035 = vshll.u32 %v1643, 16
      %v2037 = vrot.slane %v2035, 5
      %v2038 = vsel %vm271, %v2033, %v2037
      %v2040 = vshrl.u32 %v1644, 16
      %v2042 = vrot.slane %v2040, 4
      %v2043 = vshll.u32 %v1644, 16
      %v2045 = vrot.slane %v2043, 5
      %v2046 = vor.u32 %v2042, %v2045
      %v2047 = vrot.slane %v2046, 4
      %v2049 = vshll.u32 %v1645, 16
      %v2051 = vrot.slane %v2049, 5
      %v2052 = vsel %vm271, %v2047, %v2051
      %v2053 = vshrl.u32 %v1645, 16
      %v2055 = vrot.slane %v2053, 4
      %v2056 = vor.u32 %v2055, %v2051
      %v2057 = vrot.slane %v2056, 4
      %v2059 = vshll.u32 %v1646, 16
      %v2061 = vrot.slane %v2059, 5
      %v2062 = vsel %vm271, %v2057, %v2061
      %v2064 = vshrl.u32 %v1647, 16
      %v2066 = vrot.slane %v2064, 4
      %v2067 = vshll.u32 %v1647, 16
      %v2069 = vrot.slane %v2067, 5
      %v2070 = vor.u32 %v2066, %v2069
      %v2071 = vrot.slane %v2070, 4
      %v2073 = vshll.u32 %v1648, 16
      %v2075 = vrot.slane %v2073, 5
      %v2076 = vsel %vm271, %v2071, %v2075
      %v2077 = vshrl.u32 %v1648, 16
      %v2079 = vrot.slane %v2077, 4
      %v2080 = vor.u32 %v2079, %v2075
      %v2081 = vrot.slane %v2080, 4
      %v2083 = vshll.u32 %v1649, 16
      %v2085 = vrot.slane %v2083, 5
      %v2086 = vsel %vm271, %v2081, %v2085
      %v2088 = vshrl.u32 %v1650, 16
      %v2090 = vrot.slane %v2088, 4
      %v2091 = vshll.u32 %v1650, 16
      %v2093 = vrot.slane %v2091, 5
      %v2094 = vor.u32 %v2090, %v2093
      %v2095 = vrot.slane %v2094, 4
      %v2097 = vshll.u32 %v1651, 16
      %v2099 = vrot.slane %v2097, 5
      %v2100 = vsel %vm271, %v2095, %v2099
      %v2101 = vshrl.u32 %v1651, 16
      %v2103 = vrot.slane %v2101, 4
      %v2104 = vor.u32 %v2103, %v2099
      %v2105 = vrot.slane %v2104, 4
      %v2107 = vshll.u32 %v1652, 16
      %v2109 = vrot.slane %v2107, 5
      %v2110 = vsel %vm271, %v2105, %v2109
      %v2112 = vshrl.u32 %v1653, 16
      %v2114 = vrot.slane %v2112, 4
      %v2115 = vshll.u32 %v1653, 16
      %v2117 = vrot.slane %v2115, 5
      %v2118 = vor.u32 %v2114, %v2117
      %v2119 = vrot.slane %v2118, 4
      %v2121 = vshll.u32 %v1654, 16
      %v2123 = vrot.slane %v2121, 5
      %v2124 = vsel %vm271, %v2119, %v2123
      %v2125 = vshrl.u32 %v1654, 16
      %v2127 = vrot.slane %v2125, 4
      %v2128 = vor.u32 %v2127, %v2123
      %v2129 = vrot.slane %v2128, 4
      %v2131 = vshll.u32 %v1655, 16
      %v2133 = vrot.slane %v2131, 5
      %v2134 = vsel %vm271, %v2129, %v2133
      %v2136 = vshrl.u32 %v1656, 16
      %v2138 = vrot.slane %v2136, 4
      %v2139 = vshll.u32 %v1656, 16
      %v2141 = vrot.slane %v2139, 5
      %v2142 = vor.u32 %v2138, %v2141
      %v2143 = vrot.slane %v2142, 4
      %v2145 = vshll.u32 %v1657, 16
      %v2147 = vrot.slane %v2145, 5
      %v2148 = vsel %vm271, %v2143, %v2147
      %v2149 = vshrl.u32 %v1657, 16
      %v2151 = vrot.slane %v2149, 4
      %v2152 = vor.u32 %v2151, %v2147
      %v2153 = vrot.slane %v2152, 4
      %v2155 = vshll.u32 %v1658, 16
      %v2157 = vrot.slane %v2155, 5
      %v2158 = vsel %vm271, %v2153, %v2157
      %v2160 = vshrl.u32 %v1659, 16
      %v2162 = vrot.slane %v2160, 4
      %v2163 = vshll.u32 %v1659, 16
      %v2165 = vrot.slane %v2163, 5
      %v2166 = vor.u32 %v2162, %v2165
      %v2167 = vrot.slane %v2166, 4
      %v2169 = vshll.u32 %v1660, 16
      %v2171 = vrot.slane %v2169, 5
      %v2172 = vsel %vm271, %v2167, %v2171
      %v2173 = vshrl.u32 %v1660, 16
      %v2175 = vrot.slane %v2173, 4
      %v2176 = vor.u32 %v2175, %v2171
      %v2177 = vrot.slane %v2176, 4
      %v2179 = vshll.u32 %v1661, 16
      %v2181 = vrot.slane %v2179, 5
      %v2182 = vsel %vm271, %v2177, %v2181
      %v2184 = vshrl.u32 %v1662, 16
      %v2186 = vrot.slane %v2184, 4
      %v2187 = vshll.u32 %v1662, 16
      %v2189 = vrot.slane %v2187, 5
      %v2190 = vor.u32 %v2186, %v2189
      %v2191 = vrot.slane %v2190, 4
      %v2193 = vshll.u32 %v1663, 16
      %v2195 = vrot.slane %v2193, 5
      %v2196 = vsel %vm271, %v2191, %v2195
      %v2197 = vshrl.u32 %v1663, 16
      %v2199 = vrot.slane %v2197, 4
      %v2200 = vor.u32 %v2199, %v2195
      %v2201 = vrot.slane %v2200, 4
      %v2203 = vshll.u32 %v1664, 16
      %v2205 = vrot.slane %v2203, 5
      %v2206 = vsel %vm271, %v2201, %v2205
      %v2208 = vshrl.u32 %v1665, 16
      %v2210 = vrot.slane %v2208, 4
      %v2211 = vshll.u32 %v1665, 16
      %v2213 = vrot.slane %v2211, 5
      %v2214 = vor.u32 %v2210, %v2213
      %v2215 = vrot.slane %v2214, 4
      %v2217 = vshll.u32 %v1666, 16
      %v2219 = vrot.slane %v2217, 5
      %v2220 = vsel %vm271, %v2215, %v2219
      %v2221 = vshrl.u32 %v1666, 16
      %v2223 = vrot.slane %v2221, 4
      %v2224 = vor.u32 %v2223, %v2219
      %v2225 = vrot.slane %v2224, 4
      %v2227 = vshll.u32 %v1667, 16
      %v2229 = vrot.slane %v2227, 5
      %v2230 = vsel %vm271, %v2225, %v2229
      %v2232 = vshrl.u32 %v1668, 16
      %v2234 = vrot.slane %v2232, 4
      %v2235 = vshll.u32 %v1668, 16
      %v2237 = vrot.slane %v2235, 5
      %v2238 = vor.u32 %v2234, %v2237
      %v2239 = vrot.slane %v2238, 4
      %v2241 = vshll.u32 %v1669, 16
      %v2243 = vrot.slane %v2241, 5
      %v2244 = vsel %vm271, %v2239, %v2243
      %v2245 = vshrl.u32 %v1669, 16
      %v2247 = vrot.slane %v2245, 4
      %v2248 = vor.u32 %v2247, %v2243
      %v2249 = vrot.slane %v2248, 4
      %v2251 = vshll.u32 %v1670, 16
      %v2253 = vrot.slane %v2251, 5
      %v2254 = vsel %vm271, %v2249, %v2253
      %v2256 = vshrl.u32 %v1671, 16
      %v2258 = vrot.slane %v2256, 4
      %v2259 = vshll.u32 %v1671, 16
      %v2261 = vrot.slane %v2259, 5
      %v2262 = vor.u32 %v2258, %v2261
      %v2263 = vrot.slane %v2262, 4
      %v2265 = vshll.u32 %v1672, 16
      %v2267 = vrot.slane %v2265, 5
      %v2268 = vsel %vm271, %v2263, %v2267
      %v2269 = vshrl.u32 %v1672, 16
      %v2271 = vrot.slane %v2269, 4
      %v2272 = vor.u32 %v2271, %v2267
      %v2273 = vrot.slane %v2272, 4
      %v2275 = vshll.u32 %v1673, 16
      %v2277 = vrot.slane %v2275, 5
      %v2278 = vsel %vm271, %v2273, %v2277
      %v2280 = vshrl.u32 %v1674, 16
      %v2282 = vrot.slane %v2280, 4
      %v2283 = vshll.u32 %v1674, 16
      %v2285 = vrot.slane %v2283, 5
      %v2286 = vor.u32 %v2282, %v2285
      %v2287 = vrot.slane %v2286, 4
      %v2289 = vshll.u32 %v1675, 16
      %v2291 = vrot.slane %v2289, 5
      %v2292 = vsel %vm271, %v2287, %v2291
      %v2293 = vshrl.u32 %v1675, 16
      %v2295 = vrot.slane %v2293, 4
      %v2296 = vor.u32 %v2295, %v2291
      %v2297 = vrot.slane %v2296, 4
      %v2299 = vshll.u32 %v1676, 16
      %v2301 = vrot.slane %v2299, 5
      %v2302 = vsel %vm271, %v2297, %v2301
      %v2304 = vshrl.u32 %v1677, 16
      %v2306 = vrot.slane %v2304, 4
      %v2307 = vshll.u32 %v1677, 16
      %v2309 = vrot.slane %v2307, 5
      %v2310 = vor.u32 %v2306, %v2309
      %v2311 = vrot.slane %v2310, 4
      %v2313 = vshll.u32 %v1678, 16
      %v2315 = vrot.slane %v2313, 5
      %v2316 = vsel %vm271, %v2311, %v2315
      %v2317 = vshrl.u32 %v1678, 16
      %v2319 = vrot.slane %v2317, 4
      %v2320 = vor.u32 %v2319, %v2315
      %v2321 = vrot.slane %v2320, 4
      %v2323 = vshll.u32 %v1679, 16
      %v2325 = vrot.slane %v2323, 5
      %v2326 = vsel %vm271, %v2321, %v2325
      %v2328 = vshrl.u32 %v1680, 16
      %v2330 = vrot.slane %v2328, 4
      %v2331 = vshll.u32 %v1680, 16
      %v2333 = vrot.slane %v2331, 5
      %v2334 = vor.u32 %v2330, %v2333
      %v2335 = vrot.slane %v2334, 4
      %v2337 = vshll.u32 %v1681, 16
      %v2339 = vrot.slane %v2337, 5
      %v2340 = vsel %vm271, %v2335, %v2339
      %v2341 = vshrl.u32 %v1681, 16
      %v2343 = vrot.slane %v2341, 4
      %v2344 = vor.u32 %v2343, %v2339
      %v2345 = vrot.slane %v2344, 4
      %v2347 = vshll.u32 %v1682, 16
      %v2349 = vrot.slane %v2347, 5
      %v2350 = vsel %vm271, %v2345, %v2349
      %v2352 = vshrl.u32 %v1683, 16
      %v2354 = vrot.slane %v2352, 4
      %v2355 = vshll.u32 %v1683, 16
      %v2357 = vrot.slane %v2355, 5
      %v2358 = vor.u32 %v2354, %v2357
      %v2359 = vrot.slane %v2358, 4
      %v2361 = vshll.u32 %v1684, 16
      %v2363 = vrot.slane %v2361, 5
      %v2364 = vsel %vm271, %v2359, %v2363
      %v2365 = vshrl.u32 %v1684, 16
      %v2367 = vrot.slane %v2365, 4
      %v2368 = vor.u32 %v2367, %v2363
      %v2369 = vrot.slane %v2368, 4
      %v2371 = vshll.u32 %v1685, 16
      %v2373 = vrot.slane %v2371, 5
      %v2374 = vsel %vm271, %v2369, %v2373
      %v2376 = vshrl.u32 %v1686, 16
      %v2378 = vrot.slane %v2376, 4
      %v2379 = vshll.u32 %v1686, 16
      %v2381 = vrot.slane %v2379, 5
      %v2382 = vor.u32 %v2378, %v2381
      %v2383 = vrot.slane %v2382, 4
      %v2385 = vshll.u32 %v1687, 16
      %v2387 = vrot.slane %v2385, 5
      %v2388 = vsel %vm271, %v2383, %v2387
      %v2389 = vshrl.u32 %v1687, 16
      %v2391 = vrot.slane %v2389, 4
      %v2392 = vor.u32 %v2391, %v2387
      %v2393 = vrot.slane %v2392, 4
      %v2395 = vshll.u32 %v1688, 16
      %v2397 = vrot.slane %v2395, 5
      %v2398 = vsel %vm271, %v2393, %v2397
      %s2399 = scalar_lea.vmem %s1, 16
      %v2400 = vld [vmem:[%s2399] sm:$0xf]
      %v2401 = vunpack.c.l.b16 %v2028
      %v2402 = vunpack.c.l.b16 %v2038
      %v2403 = vunpack.c.l.b16 %v2052
      %v2404 = vunpack.c.l.b16 %v2062
      %v2405 = vunpack.c.l.b16 %v2076
      %v2406 = vunpack.c.l.b16 %v2086
      %v2407 = vunpack.c.l.b16 %v2100
      %v2408 = vunpack.c.l.b16 %v2110
      %v2409 = vunpack.c.l.b16 %v2124
      %v2410 = vunpack.c.l.b16 %v2134
      %v2411 = vunpack.c.l.b16 %v2148
      %v2412 = vunpack.c.l.b16 %v2158
      %v2413 = vunpack.c.l.b16 %v2172
      %v2414 = vunpack.c.l.b16 %v2182
      %v2415 = vunpack.c.l.b16 %v2196
      %v2416 = vunpack.c.l.b16 %v2206
      %v2417 = vunpack.c.l.b16 %v2220
      %v2418 = vunpack.c.l.b16 %v2230
      %v2419 = vunpack.c.l.b16 %v2244
      %v2420 = vunpack.c.l.b16 %v2254
      %v2421 = vunpack.c.l.b16 %v2268
      %v2422 = vunpack.c.l.b16 %v2278
      %v2423 = vunpack.c.l.b16 %v2292
      %v2424 = vunpack.c.l.b16 %v2302
      %v2425 = vunpack.c.l.b16 %v2316
      %v2426 = vunpack.c.l.b16 %v2326
      %v2427 = vunpack.c.l.b16 %v2340
      %v2428 = vunpack.c.l.b16 %v2350
      %v2429 = vunpack.c.l.b16 %v2364
      %v2430 = vunpack.c.l.b16 %v2374
      %v2431 = vunpack.c.l.b16 %v2388
      %v2432 = vunpack.c.l.b16 %v2398
      %v2433 = vpack.c.b16 %v2402, %v2401
      %v2434 = vpack.c.b16 %v2404, %v2403
      %v2435 = vpack.c.b16 %v2406, %v2405
      %v2436 = vpack.c.b16 %v2408, %v2407
      %v2437 = vpack.c.b16 %v2410, %v2409
      %v2438 = vpack.c.b16 %v2412, %v2411
      %v2439 = vpack.c.b16 %v2414, %v2413
      %v2440 = vpack.c.b16 %v2416, %v2415
      %v2441 = vpack.c.b16 %v2418, %v2417
      %v2442 = vpack.c.b16 %v2420, %v2419
      %v2443 = vpack.c.b16 %v2422, %v2421
      %v2444 = vpack.c.b16 %v2424, %v2423
      %v2445 = vpack.c.b16 %v2426, %v2425
      %v2446 = vpack.c.b16 %v2428, %v2427
      %v2447 = vpack.c.b16 %v2430, %v2429
      %v2448 = vpack.c.b16 %v2432, %v2431
      %v2450 = vsel %vm706, %v2433, 0
      %v2453 = vsel %vm706, %v2434, 0
      %v2456 = vsel %vm706, %v2435, 0
      %v2459 = vsel %vm706, %v2436, 0
      %v2462 = vsel %vm706, %v2437, 0
      %v2465 = vsel %vm706, %v2438, 0
      %v2468 = vsel %vm706, %v2439, 0
      %v2471 = vsel %vm706, %v2440, 0
      %v2474 = vsel %vm706, %v2441, 0
      %v2477 = vsel %vm706, %v2442, 0
      %v2480 = vsel %vm706, %v2443, 0
      %v2483 = vsel %vm706, %v2444, 0
      %v2486 = vsel %vm706, %v2445, 0
      %v2489 = vsel %vm706, %v2446, 0
      %v2492 = vsel %vm706, %v2447, 0
      %v2495 = vsel %vm706, %v2448, 0
      %v2498 = vsel %vm755, %v2400, 0
      %2500 = vmatprep.subr.bf16.mxu0 0
      %2501 = vmatpush1.bf16.msra.mxu0 %v2498
      %2502 = vmatprep.subr.bf16.mxu0 0
      %2503 = vmatpush1.bf16.msra.mxu0 0
      %2504 = vmatprep.subr.bf16.mxu0 0
      %2505 = vmatpush1.bf16.msra.mxu0 0
      %2506 = vmatprep.subr.bf16.mxu0 0
      %2507 = vmatpush1.bf16.msra.mxu0 0
      %2508 = vmatprep.subr.bf16.mxu0 0
      %2509 = vmatpush1.bf16.msra.mxu0 0
      %2510 = vmatprep.subr.bf16.mxu0 0
      %2511 = vmatpush1.bf16.msra.mxu0 0
      %2512 = vmatprep.subr.bf16.mxu0 0
      %2513 = vmatpush1.bf16.msra.mxu0 0
      %2514 = vmatprep.subr.bf16.mxu0 0
      %2515 = vmatpush1.bf16.msra.mxu0 0
      %2516 = vmatprep.subr.bf16.mxu0 0
      %2517 = vmatpush1.bf16.msra.mxu0 0
      %2518 = vmatprep.subr.bf16.mxu0 0
      %2519 = vmatpush1.bf16.msra.mxu0 0
      %2520 = vmatprep.subr.bf16.mxu0 0
      %2521 = vmatpush1.bf16.msra.mxu0 0
      %2522 = vmatprep.subr.bf16.mxu0 0
      %2523 = vmatpush1.bf16.msra.mxu0 0
      %2524 = vmatprep.subr.bf16.mxu0 0
      %2525 = vmatpush1.bf16.msra.mxu0 0
      %2526 = vmatprep.subr.bf16.mxu0 0
      %2527 = vmatpush1.bf16.msra.mxu0 0
      %2528 = vmatprep.subr.bf16.mxu0 0
      %2529 = vmatpush1.bf16.msra.mxu0 0
      %2530 = vmatprep.subr.bf16.mxu0 0
      %2531 = vmatpush1.bf16.msra.mxu0 0
      %2532 = vmatprep.mubr.bf16.mxu0 0
      %2533 = vmatmul.mubr.bf16.gmra.mrb[0].mxu0 %v2450
      %v2534 = vpop.f32.mrb[0].mxu0
      %v2535 = vadd.f32 0.0, %v2534
      %v2536 = vpop.f32.mrb[0].mxu0
      %v2537 = vpop.f32.mrb[0].mxu0
      %v2538 = vadd.f32 0.0, %v2537
      %v2539 = vpop.f32.mrb[0].mxu0
      %2540 = vmatprep.mubr.bf16.mxu0 0
      %2541 = vmatmul.mubr.bf16.gmra.mrb[0].mxu0 %v2453
      %v2542 = vpop.f32.mrb[0].mxu0
      %v2543 = vadd.f32 0.0, %v2542
      %v2544 = vpop.f32.mrb[0].mxu0
      %v2545 = vpop.f32.mrb[0].mxu0
      %v2546 = vadd.f32 0.0, %v2545
      %v2547 = vpop.f32.mrb[0].mxu0
      %2548 = vmatprep.mubr.bf16.mxu0 0
      %2549 = vmatmul.mubr.bf16.gmra.mrb[0].mxu0 %v2456
      %v2550 = vpop.f32.mrb[0].mxu0
      %v2551 = vadd.f32 0.0, %v2550
      %v2552 = vpop.f32.mrb[0].mxu0
      %v2553 = vpop.f32.mrb[0].mxu0
      %v2554 = vadd.f32 0.0, %v2553
      %v2555 = vpop.f32.mrb[0].mxu0
      %2556 = vmatprep.mubr.bf16.mxu0 0
      %2557 = vmatmul.mubr.bf16.gmra.mrb[0].mxu0 %v2459
      %v2558 = vpop.f32.mrb[0].mxu0
      %v2559 = vadd.f32 0.0, %v2558
      %v2560 = vpop.f32.mrb[0].mxu0
      %v2561 = vpop.f32.mrb[0].mxu0
      %v2562 = vadd.f32 0.0, %v2561
      %v2563 = vpop.f32.mrb[0].mxu0
      %2564 = vmatprep.mubr.bf16.mxu0 0
      %2565 = vmatmul.mubr.bf16.gmra.mrb[0].mxu0 %v2462
      %v2566 = vpop.f32.mrb[0].mxu0
      %v2567 = vadd.f32 0.0, %v2566
      %v2568 = vpop.f32.mrb[0].mxu0
      %v2569 = vpop.f32.mrb[0].mxu0
      %v2570 = vadd.f32 0.0, %v2569
      %v2571 = vpop.f32.mrb[0].mxu0
      %2572 = vmatprep.mubr.bf16.mxu0 0
      %2573 = vmatmul.mubr.bf16.gmra.mrb[0].mxu0 %v2465
      %v2574 = vpop.f32.mrb[0].mxu0
      %v2575 = vadd.f32 0.0, %v2574
      %v2576 = vpop.f32.mrb[0].mxu0
      %v2577 = vpop.f32.mrb[0].mxu0
      %v2578 = vadd.f32 0.0, %v2577
      %v2579 = vpop.f32.mrb[0].mxu0
      %2580 = vmatprep.mubr.bf16.mxu0 0
      %2581 = vmatmul.mubr.bf16.gmra.mrb[0].mxu0 %v2468
      %v2582 = vpop.f32.mrb[0].mxu0
      %v2583 = vadd.f32 0.0, %v2582
      %v2584 = vpop.f32.mrb[0].mxu0
      %v2585 = vpop.f32.mrb[0].mxu0
      %v2586 = vadd.f32 0.0, %v2585
      %v2587 = vpop.f32.mrb[0].mxu0
      %2588 = vmatprep.mubr.bf16.mxu0 0
      %2589 = vmatmul.mubr.bf16.gmra.mrb[0].mxu0 %v2471
      %v2590 = vpop.f32.mrb[0].mxu0
      %v2591 = vadd.f32 0.0, %v2590
      %v2592 = vpop.f32.mrb[0].mxu0
      %v2593 = vpop.f32.mrb[0].mxu0
      %v2594 = vadd.f32 0.0, %v2593
      %v2595 = vpop.f32.mrb[0].mxu0
      %2596 = vmatprep.mubr.bf16.mxu0 0
      %2597 = vmatmul.mubr.bf16.gmra.mrb[0].mxu0 %v2474
      %v2598 = vpop.f32.mrb[0].mxu0
      %v2599 = vadd.f32 0.0, %v2598
      %v2600 = vpop.f32.mrb[0].mxu0
      %v2601 = vpop.f32.mrb[0].mxu0
      %v2602 = vadd.f32 0.0, %v2601
      %v2603 = vpop.f32.mrb[0].mxu0
      %2604 = vmatprep.mubr.bf16.mxu0 0
      %2605 = vmatmul.mubr.bf16.gmra.mrb[0].mxu0 %v2477
      %v2606 = vpop.f32.mrb[0].mxu0
      %v2607 = vadd.f32 0.0, %v2606
      %v2608 = vpop.f32.mrb[0].mxu0
      %v2609 = vpop.f32.mrb[0].mxu0
      %v2610 = vadd.f32 0.0, %v2609
      %v2611 = vpop.f32.mrb[0].mxu0
      %2612 = vmatprep.mubr.bf16.mxu0 0
      %2613 = vmatmul.mubr.bf16.gmra.mrb[0].mxu0 %v2480
      %v2614 = vpop.f32.mrb[0].mxu0
      %v2615 = vadd.f32 0.0, %v2614
      %v2616 = vpop.f32.mrb[0].mxu0
      %v2617 = vpop.f32.mrb[0].mxu0
      %v2618 = vadd.f32 0.0, %v2617
      %v2619 = vpop.f32.mrb[0].mxu0
      %2620 = vmatprep.mubr.bf16.mxu0 0
      %2621 = vmatmul.mubr.bf16.gmra.mrb[0].mxu0 %v2483
      %v2622 = vpop.f32.mrb[0].mxu0
      %v2623 = vadd.f32 0.0, %v2622
      %v2624 = vpop.f32.mrb[0].mxu0
      %v2625 = vpop.f32.mrb[0].mxu0
      %v2626 = vadd.f32 0.0, %v2625
      %v2627 = vpop.f32.mrb[0].mxu0
      %2628 = vmatprep.mubr.bf16.mxu0 0
      %2629 = vmatmul.mubr.bf16.gmra.mrb[0].mxu0 %v2486
      %v2630 = vpop.f32.mrb[0].mxu0
      %v2631 = vadd.f32 0.0, %v2630
      %v2632 = vpop.f32.mrb[0].mxu0
      %v2633 = vpop.f32.mrb[0].mxu0
      %v2634 = vadd.f32 0.0, %v2633
      %v2635 = vpop.f32.mrb[0].mxu0
      %2636 = vmatprep.mubr.bf16.mxu0 0
      %2637 = vmatmul.mubr.bf16.gmra.mrb[0].mxu0 %v2489
      %v2638 = vpop.f32.mrb[0].mxu0
      %v2639 = vadd.f32 0.0, %v2638
      %v2640 = vpop.f32.mrb[0].mxu0
      %v2641 = vpop.f32.mrb[0].mxu0
      %v2642 = vadd.f32 0.0, %v2641
      %v2643 = vpop.f32.mrb[0].mxu0
      %2644 = vmatprep.mubr.bf16.mxu0 0
      %2645 = vmatmul.mubr.bf16.gmra.mrb[0].mxu0 %v2492
      %v2646 = vpop.f32.mrb[0].mxu0
      %v2647 = vadd.f32 0.0, %v2646
      %v2648 = vpop.f32.mrb[0].mxu0
      %v2649 = vpop.f32.mrb[0].mxu0
      %v2650 = vadd.f32 0.0, %v2649
      %v2651 = vpop.f32.mrb[0].mxu0
      %2652 = vmatprep.mubr.bf16.mxu0 0
      %2653 = vmatmul.mubr.bf16.gmra.mrb[0].mxu0 %v2495
      %v2654 = vpop.f32.mrb[0].mxu0
      %v2655 = vadd.f32 0.0, %v2654
      %v2656 = vpop.f32.mrb[0].mxu0
      %v2657 = vpop.f32.mrb[0].mxu0
      %v2658 = vadd.f32 0.0, %v2657
      %v2659 = vpop.f32.mrb[0].mxu0
      %2660 = vdwg.mxu0
      %v2661 = vadd.f32 %v1983, %v2535
      %v2662 = vadd.f32 %v1984, %v2538
      %v2663 = vadd.f32 %v1985, %v2543
      %v2664 = vadd.f32 %v1986, %v2546
      %v2665 = vadd.f32 %v1987, %v2551
      %v2666 = vadd.f32 %v1988, %v2554
      %v2667 = vadd.f32 %v1989, %v2559
      %v2668 = vadd.f32 %v1990, %v2562
      %v2669 = vadd.f32 %v1991, %v2567
      %v2670 = vadd.f32 %v1992, %v2570
      %v2671 = vadd.f32 %v1993, %v2575
      %v2672 = vadd.f32 %v1994, %v2578
      %v2673 = vadd.f32 %v1995, %v2583
      %v2674 = vadd.f32 %v1996, %v2586
      %v2675 = vadd.f32 %v1997, %v2591
      %v2676 = vadd.f32 %v1998, %v2594
      %v2677 = vadd.f32 %v1999, %v2599
      %v2678 = vadd.f32 %v2000, %v2602
      %v2679 = vadd.f32 %v2001, %v2607
      %v2680 = vadd.f32 %v2002, %v2610
      %v2681 = vadd.f32 %v2003, %v2615
      %v2682 = vadd.f32 %v2004, %v2618
      %v2683 = vadd.f32 %v2005, %v2623
      %v2684 = vadd.f32 %v2006, %v2626
      %v2685 = vadd.f32 %v2007, %v2631
      %v2686 = vadd.f32 %v2008, %v2634
      %v2687 = vadd.f32 %v2009, %v2639
      %v2688 = vadd.f32 %v2010, %v2642
      %v2689 = vadd.f32 %v2011, %v2647
      %v2690 = vadd.f32 %v2012, %v2650
      %v2691 = vadd.f32 %v2013, %v2655
      %v2692 = vadd.f32 %v2014, %v2658
      %v2709 = vrot.slane %v1641, 5
      %v2710 = vrot.slane %v2709, 4
      %v2711 = vrot.slane %v1642, 5
      %v2712 = vsel %vm1230, %v2710, %v2711
      %v2713 = vrot.slane %v2711, 4
      %v2714 = vrot.slane %v1643, 5
      %v2715 = vsel %vm1230, %v2713, %v2714
      %v2716 = vrot.slane %v1644, 5
      %v2717 = vrot.slane %v2716, 4
      %v2718 = vrot.slane %v1645, 5
      %v2719 = vsel %vm1230, %v2717, %v2718
      %v2720 = vrot.slane %v2718, 4
      %v2721 = vrot.slane %v1646, 5
      %v2722 = vsel %vm1230, %v2720, %v2721
      %v2723 = vrot.slane %v1647, 5
      %v2724 = vrot.slane %v2723, 4
      %v2725 = vrot.slane %v1648, 5
      %v2726 = vsel %vm1230, %v2724, %v2725
      %v2727 = vrot.slane %v2725, 4
      %v2728 = vrot.slane %v1649, 5
      %v2729 = vsel %vm1230, %v2727, %v2728
      %v2730 = vrot.slane %v1650, 5
      %v2731 = vrot.slane %v2730, 4
      %v2732 = vrot.slane %v1651, 5
      %v2733 = vsel %vm1230, %v2731, %v2732
      %v2734 = vrot.slane %v2732, 4
      %v2735 = vrot.slane %v1652, 5
      %v2736 = vsel %vm1230, %v2734, %v2735
      %v2737 = vrot.slane %v1653, 5
      %v2738 = vrot.slane %v2737, 4
      %v2739 = vrot.slane %v1654, 5
      %v2740 = vsel %vm1230, %v2738, %v2739
      %v2741 = vrot.slane %v2739, 4
      %v2742 = vrot.slane %v1655, 5
      %v2743 = vsel %vm1230, %v2741, %v2742
      %v2744 = vrot.slane %v1656, 5
      %v2745 = vrot.slane %v2744, 4
      %v2746 = vrot.slane %v1657, 5
      %v2747 = vsel %vm1230, %v2745, %v2746
      %v2748 = vrot.slane %v2746, 4
      %v2749 = vrot.slane %v1658, 5
      %v2750 = vsel %vm1230, %v2748, %v2749
      %v2751 = vrot.slane %v1659, 5
      %v2752 = vrot.slane %v2751, 4
      %v2753 = vrot.slane %v1660, 5
      %v2754 = vsel %vm1230, %v2752, %v2753
      %v2755 = vrot.slane %v2753, 4
      %v2756 = vrot.slane %v1661, 5
      %v2757 = vsel %vm1230, %v2755, %v2756
      %v2758 = vrot.slane %v1662, 5
      %v2759 = vrot.slane %v2758, 4
      %v2760 = vrot.slane %v1663, 5
      %v2761 = vsel %vm1230, %v2759, %v2760
      %v2762 = vrot.slane %v2760, 4
      %v2763 = vrot.slane %v1664, 5
      %v2764 = vsel %vm1230, %v2762, %v2763
      %v2765 = vrot.slane %v1665, 5
      %v2766 = vrot.slane %v2765, 4
      %v2767 = vrot.slane %v1666, 5
      %v2768 = vsel %vm1230, %v2766, %v2767
      %v2769 = vrot.slane %v2767, 4
      %v2770 = vrot.slane %v1667, 5
      %v2771 = vsel %vm1230, %v2769, %v2770
      %v2772 = vrot.slane %v1668, 5
      %v2773 = vrot.slane %v2772, 4
      %v2774 = vrot.slane %v1669, 5
      %v2775 = vsel %vm1230, %v2773, %v2774
      %v2776 = vrot.slane %v2774, 4
      %v2777 = vrot.slane %v1670, 5
      %v2778 = vsel %vm1230, %v2776, %v2777
      %v2779 = vrot.slane %v1671, 5
      %v2780 = vrot.slane %v2779, 4
      %v2781 = vrot.slane %v1672, 5
      %v2782 = vsel %vm1230, %v2780, %v2781
      %v2783 = vrot.slane %v2781, 4
      %v2784 = vrot.slane %v1673, 5
      %v2785 = vsel %vm1230, %v2783, %v2784
      %v2786 = vrot.slane %v1674, 5
      %v2787 = vrot.slane %v2786, 4
      %v2788 = vrot.slane %v1675, 5
      %v2789 = vsel %vm1230, %v2787, %v2788
      %v2790 = vrot.slane %v2788, 4
      %v2791 = vrot.slane %v1676, 5
      %v2792 = vsel %vm1230, %v2790, %v2791
      %v2793 = vrot.slane %v1677, 5
      %v2794 = vrot.slane %v2793, 4
      %v2795 = vrot.slane %v1678, 5
      %v2796 = vsel %vm1230, %v2794, %v2795
      %v2797 = vrot.slane %v2795, 4
      %v2798 = vrot.slane %v1679, 5
      %v2799 = vsel %vm1230, %v2797, %v2798
      %v2800 = vrot.slane %v1680, 5
      %v2801 = vrot.slane %v2800, 4
      %v2802 = vrot.slane %v1681, 5
      %v2803 = vsel %vm1230, %v2801, %v2802
      %v2804 = vrot.slane %v2802, 4
      %v2805 = vrot.slane %v1682, 5
      %v2806 = vsel %vm1230, %v2804, %v2805
      %v2807 = vrot.slane %v1683, 5
      %v2808 = vrot.slane %v2807, 4
      %v2809 = vrot.slane %v1684, 5
      %v2810 = vsel %vm1230, %v2808, %v2809
      %v2811 = vrot.slane %v2809, 4
      %v2812 = vrot.slane %v1685, 5
      %v2813 = vsel %vm1230, %v2811, %v2812
      %v2814 = vrot.slane %v1686, 5
      %v2815 = vrot.slane %v2814, 4
      %v2816 = vrot.slane %v1687, 5
      %v2817 = vsel %vm1230, %v2815, %v2816
      %v2818 = vrot.slane %v2816, 4
      %v2819 = vrot.slane %v1688, 5
      %v2820 = vsel %vm1230, %v2818, %v2819
      %s2821 = scalar_lea.vmem %s1, 20
      %v2822 = vld [vmem:[%s2821] sm:$0xf]
      %v2823 = vunpack.c.l.b16 %v2712
      %v2824 = vunpack.c.l.b16 %v2715
      %v2825 = vunpack.c.l.b16 %v2719
      %v2826 = vunpack.c.l.b16 %v2722
      %v2827 = vunpack.c.l.b16 %v2726
      %v2828 = vunpack.c.l.b16 %v2729
      %v2829 = vunpack.c.l.b16 %v2733
      %v2830 = vunpack.c.l.b16 %v2736
      %v2831 = vunpack.c.l.b16 %v2740
      %v2832 = vunpack.c.l.b16 %v2743
      %v2833 = vunpack.c.l.b16 %v2747
      %v2834 = vunpack.c.l.b16 %v2750
      %v2835 = vunpack.c.l.b16 %v2754
      %v2836 = vunpack.c.l.b16 %v2757
      %v2837 = vunpack.c.l.b16 %v2761
      %v2838 = vunpack.c.l.b16 %v2764
      %v2839 = vunpack.c.l.b16 %v2768
      %v2840 = vunpack.c.l.b16 %v2771
      %v2841 = vunpack.c.l.b16 %v2775
      %v2842 = vunpack.c.l.b16 %v2778
      %v2843 = vunpack.c.l.b16 %v2782
      %v2844 = vunpack.c.l.b16 %v2785
      %v2845 = vunpack.c.l.b16 %v2789
      %v2846 = vunpack.c.l.b16 %v2792
      %v2847 = vunpack.c.l.b16 %v2796
      %v2848 = vunpack.c.l.b16 %v2799
      %v2849 = vunpack.c.l.b16 %v2803
      %v2850 = vunpack.c.l.b16 %v2806
      %v2851 = vunpack.c.l.b16 %v2810
      %v2852 = vunpack.c.l.b16 %v2813
      %v2853 = vunpack.c.l.b16 %v2817
      %v2854 = vunpack.c.l.b16 %v2820
      %v2855 = vpack.c.b16 %v2824, %v2823
      %v2856 = vpack.c.b16 %v2826, %v2825
      %v2857 = vpack.c.b16 %v2828, %v2827
      %v2858 = vpack.c.b16 %v2830, %v2829
      %v2859 = vpack.c.b16 %v2832, %v2831
      %v2860 = vpack.c.b16 %v2834, %v2833
      %v2861 = vpack.c.b16 %v2836, %v2835
      %v2862 = vpack.c.b16 %v2838, %v2837
      %v2863 = vpack.c.b16 %v2840, %v2839
      %v2864 = vpack.c.b16 %v2842, %v2841
      %v2865 = vpack.c.b16 %v2844, %v2843
      %v2866 = vpack.c.b16 %v2846, %v2845
      %v2867 = vpack.c.b16 %v2848, %v2847
      %v2868 = vpack.c.b16 %v2850, %v2849
      %v2869 = vpack.c.b16 %v2852, %v2851
      %v2870 = vpack.c.b16 %v2854, %v2853
      %v2872 = vsel %vm706, %v2855, 0
      %v2875 = vsel %vm706, %v2856, 0
      %v2878 = vsel %vm706, %v2857, 0
      %v2881 = vsel %vm706, %v2858, 0
      %v2884 = vsel %vm706, %v2859, 0
      %v2887 = vsel %vm706, %v2860, 0
      %v2890 = vsel %vm706, %v2861, 0
      %v2893 = vsel %vm706, %v2862, 0
      %v2896 = vsel %vm706, %v2863, 0
      %v2899 = vsel %vm706, %v2864, 0
      %v2902 = vsel %vm706, %v2865, 0
      %v2905 = vsel %vm706, %v2866, 0
      %v2908 = vsel %vm706, %v2867, 0
      %v2911 = vsel %vm706, %v2868, 0
      %v2914 = vsel %vm706, %v2869, 0
      %v2917 = vsel %vm706, %v2870, 0
      %v2920 = vsel %vm755, %v2822, 0
      %2922 = vmatprep.subr.bf16.mxu0 0
      %2923 = vmatpush1.bf16.msra.mxu0 %v2920
      %2924 = vmatprep.subr.bf16.mxu0 0
      %2925 = vmatpush1.bf16.msra.mxu0 0
      %2926 = vmatprep.subr.bf16.mxu0 0
      %2927 = vmatpush1.bf16.msra.mxu0 0
      %2928 = vmatprep.subr.bf16.mxu0 0
      %2929 = vmatpush1.bf16.msra.mxu0 0
      %2930 = vmatprep.subr.bf16.mxu0 0
      %2931 = vmatpush1.bf16.msra.mxu0 0
      %2932 = vmatprep.subr.bf16.mxu0 0
      %2933 = vmatpush1.bf16.msra.mxu0 0
      %2934 = vmatprep.subr.bf16.mxu0 0
      %2935 = vmatpush1.bf16.msra.mxu0 0
      %2936 = vmatprep.subr.bf16.mxu0 0
      %2937 = vmatpush1.bf16.msra.mxu0 0
      %2938 = vmatprep.subr.bf16.mxu0 0
      %2939 = vmatpush1.bf16.msra.mxu0 0
      %2940 = vmatprep.subr.bf16.mxu0 0
      %2941 = vmatpush1.bf16.msra.mxu0 0
      %2942 = vmatprep.subr.bf16.mxu0 0
      %2943 = vmatpush1.bf16.msra.mxu0 0
      %2944 = vmatprep.subr.bf16.mxu0 0
      %2945 = vmatpush1.bf16.msra.mxu0 0
      %2946 = vmatprep.subr.bf16.mxu0 0
      %2947 = vmatpush1.bf16.msra.mxu0 0
      %2948 = vmatprep.subr.bf16.mxu0 0
      %2949 = vmatpush1.bf16.msra.mxu0 0
      %2950 = vmatprep.subr.bf16.mxu0 0
      %2951 = vmatpush1.bf16.msra.mxu0 0
      %2952 = vmatprep.subr.bf16.mxu0 0
      %2953 = vmatpush1.bf16.msra.mxu0 0
      %2954 = vmatprep.mubr.bf16.mxu0 0
      %2955 = vmatmul.mubr.bf16.gmra.mrb[0].mxu0 %v2872
      %v2956 = vpop.f32.mrb[0].mxu0
      %v2957 = vadd.f32 0.0, %v2956
      %v2958 = vpop.f32.mrb[0].mxu0
      %v2959 = vpop.f32.mrb[0].mxu0
      %v2960 = vadd.f32 0.0, %v2959
      %v2961 = vpop.f32.mrb[0].mxu0
      %2962 = vmatprep.mubr.bf16.mxu0 0
      %2963 = vmatmul.mubr.bf16.gmra.mrb[0].mxu0 %v2875
      %v2964 = vpop.f32.mrb[0].mxu0
      %v2965 = vadd.f32 0.0, %v2964
      %v2966 = vpop.f32.mrb[0].mxu0
      %v2967 = vpop.f32.mrb[0].mxu0
      %v2968 = vadd.f32 0.0, %v2967
      %v2969 = vpop.f32.mrb[0].mxu0
      %2970 = vmatprep.mubr.bf16.mxu0 0
      %2971 = vmatmul.mubr.bf16.gmra.mrb[0].mxu0 %v2878
      %v2972 = vpop.f32.mrb[0].mxu0
      %v2973 = vadd.f32 0.0, %v2972
      %v2974 = vpop.f32.mrb[0].mxu0
      %v2975 = vpop.f32.mrb[0].mxu0
      %v2976 = vadd.f32 0.0, %v2975
      %v2977 = vpop.f32.mrb[0].mxu0
      %2978 = vmatprep.mubr.bf16.mxu0 0
      %2979 = vmatmul.mubr.bf16.gmra.mrb[0].mxu0 %v2881
      %v2980 = vpop.f32.mrb[0].mxu0
      %v2981 = vadd.f32 0.0, %v2980
      %v2982 = vpop.f32.mrb[0].mxu0
      %v2983 = vpop.f32.mrb[0].mxu0
      %v2984 = vadd.f32 0.0, %v2983
      %v2985 = vpop.f32.mrb[0].mxu0
      %2986 = vmatprep.mubr.bf16.mxu0 0
      %2987 = vmatmul.mubr.bf16.gmra.mrb[0].mxu0 %v2884
      %v2988 = vpop.f32.mrb[0].mxu0
      %v2989 = vadd.f32 0.0, %v2988
      %v2990 = vpop.f32.mrb[0].mxu0
      %v2991 = vpop.f32.mrb[0].mxu0
      %v2992 = vadd.f32 0.0, %v2991
      %v2993 = vpop.f32.mrb[0].mxu0
      %2994 = vmatprep.mubr.bf16.mxu0 0
      %2995 = vmatmul.mubr.bf16.gmra.mrb[0].mxu0 %v2887
      %v2996 = vpop.f32.mrb[0].mxu0
      %v2997 = vadd.f32 0.0, %v2996
      %v2998 = vpop.f32.mrb[0].mxu0
      %v2999 = vpop.f32.mrb[0].mxu0
      %v3000 = vadd.f32 0.0, %v2999
      %v3001 = vpop.f32.mrb[0].mxu0
      %3002 = vmatprep.mubr.bf16.mxu0 0
      %3003 = vmatmul.mubr.bf16.gmra.mrb[0].mxu0 %v2890
      %v3004 = vpop.f32.mrb[0].mxu0
      %v3005 = vadd.f32 0.0, %v3004
      %v3006 = vpop.f32.mrb[0].mxu0
      %v3007 = vpop.f32.mrb[0].mxu0
      %v3008 = vadd.f32 0.0, %v3007
      %v3009 = vpop.f32.mrb[0].mxu0
      %3010 = vmatprep.mubr.bf16.mxu0 0
      %3011 = vmatmul.mubr.bf16.gmra.mrb[0].mxu0 %v2893
      %v3012 = vpop.f32.mrb[0].mxu0
      %v3013 = vadd.f32 0.0, %v3012
      %v3014 = vpop.f32.mrb[0].mxu0
      %v3015 = vpop.f32.mrb[0].mxu0
      %v3016 = vadd.f32 0.0, %v3015
      %v3017 = vpop.f32.mrb[0].mxu0
      %3018 = vmatprep.mubr.bf16.mxu0 0
      %3019 = vmatmul.mubr.bf16.gmra.mrb[0].mxu0 %v2896
      %v3020 = vpop.f32.mrb[0].mxu0
      %v3021 = vadd.f32 0.0, %v3020
      %v3022 = vpop.f32.mrb[0].mxu0
      %v3023 = vpop.f32.mrb[0].mxu0
      %v3024 = vadd.f32 0.0, %v3023
      %v3025 = vpop.f32.mrb[0].mxu0
      %3026 = vmatprep.mubr.bf16.mxu0 0
      %3027 = vmatmul.mubr.bf16.gmra.mrb[0].mxu0 %v2899
      %v3028 = vpop.f32.mrb[0].mxu0
      %v3029 = vadd.f32 0.0, %v3028
      %v3030 = vpop.f32.mrb[0].mxu0
      %v3031 = vpop.f32.mrb[0].mxu0
      %v3032 = vadd.f32 0.0, %v3031
      %v3033 = vpop.f32.mrb[0].mxu0
      %3034 = vmatprep.mubr.bf16.mxu0 0
      %3035 = vmatmul.mubr.bf16.gmra.mrb[0].mxu0 %v2902
      %v3036 = vpop.f32.mrb[0].mxu0
      %v3037 = vadd.f32 0.0, %v3036
      %v3038 = vpop.f32.mrb[0].mxu0
      %v3039 = vpop.f32.mrb[0].mxu0
      %v3040 = vadd.f32 0.0, %v3039
      %v3041 = vpop.f32.mrb[0].mxu0
      %3042 = vmatprep.mubr.bf16.mxu0 0
      %3043 = vmatmul.mubr.bf16.gmra.mrb[0].mxu0 %v2905
      %v3044 = vpop.f32.mrb[0].mxu0
      %v3045 = vadd.f32 0.0, %v3044
      %v3046 = vpop.f32.mrb[0].mxu0
      %v3047 = vpop.f32.mrb[0].mxu0
      %v3048 = vadd.f32 0.0, %v3047
      %v3049 = vpop.f32.mrb[0].mxu0
      %3050 = vmatprep.mubr.bf16.mxu0 0
      %3051 = vmatmul.mubr.bf16.gmra.mrb[0].mxu0 %v2908
      %v3052 = vpop.f32.mrb[0].mxu0
      %v3053 = vadd.f32 0.0, %v3052
      %v3054 = vpop.f32.mrb[0].mxu0
      %v3055 = vpop.f32.mrb[0].mxu0
      %v3056 = vadd.f32 0.0, %v3055
      %v3057 = vpop.f32.mrb[0].mxu0
      %3058 = vmatprep.mubr.bf16.mxu0 0
      %3059 = vmatmul.mubr.bf16.gmra.mrb[0].mxu0 %v2911
      %v3060 = vpop.f32.mrb[0].mxu0
      %v3061 = vadd.f32 0.0, %v3060
      %v3062 = vpop.f32.mrb[0].mxu0
      %v3063 = vpop.f32.mrb[0].mxu0
      %v3064 = vadd.f32 0.0, %v3063
      %v3065 = vpop.f32.mrb[0].mxu0
      %3066 = vmatprep.mubr.bf16.mxu0 0
      %3067 = vmatmul.mubr.bf16.gmra.mrb[0].mxu0 %v2914
      %v3068 = vpop.f32.mrb[0].mxu0
      %v3069 = vadd.f32 0.0, %v3068
      %v3070 = vpop.f32.mrb[0].mxu0
      %v3071 = vpop.f32.mrb[0].mxu0
      %v3072 = vadd.f32 0.0, %v3071
      %v3073 = vpop.f32.mrb[0].mxu0
      %3074 = vmatprep.mubr.bf16.mxu0 0
      %3075 = vmatmul.mubr.bf16.gmra.mrb[0].mxu0 %v2917
      %v3076 = vpop.f32.mrb[0].mxu0
      %v3077 = vadd.f32 0.0, %v3076
      %v3078 = vpop.f32.mrb[0].mxu0
      %v3079 = vpop.f32.mrb[0].mxu0
      %v3080 = vadd.f32 0.0, %v3079
      %v3081 = vpop.f32.mrb[0].mxu0
      %3082 = vdwg.mxu0
      %v3083 = vadd.f32 %v2661, %v2957
      %v3084 = vadd.f32 %v2662, %v2960
      %v3085 = vadd.f32 %v2663, %v2965
      %v3086 = vadd.f32 %v2664, %v2968
      %v3087 = vadd.f32 %v2665, %v2973
      %v3088 = vadd.f32 %v2666, %v2976
      %v3089 = vadd.f32 %v2667, %v2981
      %v3090 = vadd.f32 %v2668, %v2984
      %v3091 = vadd.f32 %v2669, %v2989
      %v3092 = vadd.f32 %v2670, %v2992
      %v3093 = vadd.f32 %v2671, %v2997
      %v3094 = vadd.f32 %v2672, %v3000
      %v3095 = vadd.f32 %v2673, %v3005
      %v3096 = vadd.f32 %v2674, %v3008
      %v3097 = vadd.f32 %v2675, %v3013
      %v3098 = vadd.f32 %v2676, %v3016
      %v3099 = vadd.f32 %v2677, %v3021
      %v3100 = vadd.f32 %v2678, %v3024
      %v3101 = vadd.f32 %v2679, %v3029
      %v3102 = vadd.f32 %v2680, %v3032
      %v3103 = vadd.f32 %v2681, %v3037
      %v3104 = vadd.f32 %v2682, %v3040
      %v3105 = vadd.f32 %v2683, %v3045
      %v3106 = vadd.f32 %v2684, %v3048
      %v3107 = vadd.f32 %v2685, %v3053
      %v3108 = vadd.f32 %v2686, %v3056
      %v3109 = vadd.f32 %v2687, %v3061
      %v3110 = vadd.f32 %v2688, %v3064
      %v3111 = vadd.f32 %v2689, %v3069
      %v3112 = vadd.f32 %v2690, %v3072
      %v3113 = vadd.f32 %v2691, %v3077
      %v3114 = vadd.f32 %v2692, %v3080
      %s3115 = sadd.s32 %s216, 2
      %s3116 = smul.u32 %s3115, 3
      %s3117 = smul.addr %s3116, 4
      %s3118 = scalar_lea.vmem %s196, %s3117
      %v3119 = vld [vmem:[%s3118] sm:$0xf]
      %v3120 = vld [vmem:[%s3118 + $0x4] sm:$0xf]
      %v3121 = vld [vmem:[%s3118 + $0x8] sm:$0x1]
      %v3122 = vld [vmem:[%s3118 + $0xc] sm:$0xf]
      %v3123 = vld [vmem:[%s3118 + $0x10] sm:$0xf]
      %v3124 = vld [vmem:[%s3118 + $0x14] sm:$0x1]
      %v3125 = vld [vmem:[%s3118 + $0x18] sm:$0xf]
      %v3126 = vld [vmem:[%s3118 + $0x1c] sm:$0xf]
      %v3127 = vld [vmem:[%s3118 + $0x20] sm:$0x1]
      %v3128 = vld [vmem:[%s3118 + $0x24] sm:$0xf]
      %v3129 = vld [vmem:[%s3118 + $0x28] sm:$0xf]
      %v3130 = vld [vmem:[%s3118 + $0x2c] sm:$0x1]
      %v3131 = vld [vmem:[%s3118 + $0x30] sm:$0xf]
      %v3132 = vld [vmem:[%s3118 + $0x34] sm:$0xf]
      %v3133 = vld [vmem:[%s3118 + $0x38] sm:$0x1]
      %v3134 = vld [vmem:[%s3118 + $0x3c] sm:$0xf]
      %v3135 = vld [vmem:[%s3118 + $0x40] sm:$0xf]
      %v3136 = vld [vmem:[%s3118 + $0x44] sm:$0x1]
      %v3137 = vld [vmem:[%s3118 + $0x48] sm:$0xf]
      %v3138 = vld [vmem:[%s3118 + $0x4c] sm:$0xf]
      %v3139 = vld [vmem:[%s3118 + $0x50] sm:$0x1]
      %v3140 = vld [vmem:[%s3118 + $0x54] sm:$0xf]
      %v3141 = vld [vmem:[%s3118 + $0x58] sm:$0xf]
      %v3142 = vld [vmem:[%s3118 + $0x5c] sm:$0x1]
      %v3143 = vld [vmem:[%s3118 + $0x60] sm:$0xf]
      %v3144 = vld [vmem:[%s3118 + $0x64] sm:$0xf]
      %v3145 = vld [vmem:[%s3118 + $0x68] sm:$0x1]
      %v3146 = vld [vmem:[%s3118 + $0x6c] sm:$0xf]
      %v3147 = vld [vmem:[%s3118 + $0x70] sm:$0xf]
      %v3148 = vld [vmem:[%s3118 + $0x74] sm:$0x1]
      %v3149 = vld [vmem:[%s3118 + $0x78] sm:$0xf]
      %v3150 = vld [vmem:[%s3118 + $0x7c] sm:$0xf]
      %v3151 = vld [vmem:[%s3118 + $0x80] sm:$0x1]
      %v3152 = vld [vmem:[%s3118 + $0x84] sm:$0xf]
      %v3153 = vld [vmem:[%s3118 + $0x88] sm:$0xf]
      %v3154 = vld [vmem:[%s3118 + $0x8c] sm:$0x1]
      %v3155 = vld [vmem:[%s3118 + $0x90] sm:$0xf]
      %v3156 = vld [vmem:[%s3118 + $0x94] sm:$0xf]
      %v3157 = vld [vmem:[%s3118 + $0x98] sm:$0x1]
      %v3158 = vld [vmem:[%s3118 + $0x9c] sm:$0xf]
      %v3159 = vld [vmem:[%s3118 + $0xa0] sm:$0xf]
      %v3160 = vld [vmem:[%s3118 + $0xa4] sm:$0x1]
      %v3161 = vld [vmem:[%s3118 + $0xa8] sm:$0xf]
      %v3162 = vld [vmem:[%s3118 + $0xac] sm:$0xf]
      %v3163 = vld [vmem:[%s3118 + $0xb0] sm:$0x1]
      %v3164 = vld [vmem:[%s3118 + $0xb4] sm:$0xf]
      %v3165 = vld [vmem:[%s3118 + $0xb8] sm:$0xf]
      %v3166 = vld [vmem:[%s3118 + $0xbc] sm:$0x1]
      %s3167 = scalar_lea.vmem %s1, 24
      %v3168 = vld [vmem:[%s3167] sm:$0xf]
      %v3201 = vunpack.c.l.b16 %v3119
      %v3202 = vunpack.c.l.b16 %v3120
      %v3203 = vunpack.c.l.b16 %v3122
      %v3204 = vunpack.c.l.b16 %v3123
      %v3205 = vunpack.c.l.b16 %v3125
      %v3206 = vunpack.c.l.b16 %v3126
      %v3207 = vunpack.c.l.b16 %v3128
      %v3208 = vunpack.c.l.b16 %v3129
      %v3209 = vunpack.c.l.b16 %v3131
      %v3210 = vunpack.c.l.b16 %v3132
      %v3211 = vunpack.c.l.b16 %v3134
      %v3212 = vunpack.c.l.b16 %v3135
      %v3213 = vunpack.c.l.b16 %v3137
      %v3214 = vunpack.c.l.b16 %v3138
      %v3215 = vunpack.c.l.b16 %v3140
      %v3216 = vunpack.c.l.b16 %v3141
      %v3217 = vunpack.c.l.b16 %v3143
      %v3218 = vunpack.c.l.b16 %v3144
      %v3219 = vunpack.c.l.b16 %v3146
      %v3220 = vunpack.c.l.b16 %v3147
      %v3221 = vunpack.c.l.b16 %v3149
      %v3222 = vunpack.c.l.b16 %v3150
      %v3223 = vunpack.c.l.b16 %v3152
      %v3224 = vunpack.c.l.b16 %v3153
      %v3225 = vunpack.c.l.b16 %v3155
      %v3226 = vunpack.c.l.b16 %v3156
      %v3227 = vunpack.c.l.b16 %v3158
      %v3228 = vunpack.c.l.b16 %v3159
      %v3229 = vunpack.c.l.b16 %v3161
      %v3230 = vunpack.c.l.b16 %v3162
      %v3231 = vunpack.c.l.b16 %v3164
      %v3232 = vunpack.c.l.b16 %v3165
      %v3233 = vpack.c.b16 %v3202, %v3201
      %v3234 = vpack.c.b16 %v3204, %v3203
      %v3235 = vpack.c.b16 %v3206, %v3205
      %v3236 = vpack.c.b16 %v3208, %v3207
      %v3237 = vpack.c.b16 %v3210, %v3209
      %v3238 = vpack.c.b16 %v3212, %v3211
      %v3239 = vpack.c.b16 %v3214, %v3213
      %v3240 = vpack.c.b16 %v3216, %v3215
      %v3241 = vpack.c.b16 %v3218, %v3217
      %v3242 = vpack.c.b16 %v3220, %v3219
      %v3243 = vpack.c.b16 %v3222, %v3221
      %v3244 = vpack.c.b16 %v3224, %v3223
      %v3245 = vpack.c.b16 %v3226, %v3225
      %v3246 = vpack.c.b16 %v3228, %v3227
      %v3247 = vpack.c.b16 %v3230, %v3229
      %v3248 = vpack.c.b16 %v3232, %v3231
      %v3250 = vsel %vm706, %v3233, 0
      %v3253 = vsel %vm706, %v3234, 0
      %v3256 = vsel %vm706, %v3235, 0
      %v3259 = vsel %vm706, %v3236, 0
      %v3262 = vsel %vm706, %v3237, 0
      %v3265 = vsel %vm706, %v3238, 0
      %v3268 = vsel %vm706, %v3239, 0
      %v3271 = vsel %vm706, %v3240, 0
      %v3274 = vsel %vm706, %v3241, 0
      %v3277 = vsel %vm706, %v3242, 0
      %v3280 = vsel %vm706, %v3243, 0
      %v3283 = vsel %vm706, %v3244, 0
      %v3286 = vsel %vm706, %v3245, 0
      %v3289 = vsel %vm706, %v3246, 0
      %v3292 = vsel %vm706, %v3247, 0
      %v3295 = vsel %vm706, %v3248, 0
      %v3298 = vsel %vm755, %v3168, 0
      %3300 = vmatprep.subr.bf16.mxu0 0
      %3301 = vmatpush1.bf16.msra.mxu0 %v3298
      %3302 = vmatprep.subr.bf16.mxu0 0
      %3303 = vmatpush1.bf16.msra.mxu0 0
      %3304 = vmatprep.subr.bf16.mxu0 0
      %3305 = vmatpush1.bf16.msra.mxu0 0
      %3306 = vmatprep.subr.bf16.mxu0 0
      %3307 = vmatpush1.bf16.msra.mxu0 0
      %3308 = vmatprep.subr.bf16.mxu0 0
      %3309 = vmatpush1.bf16.msra.mxu0 0
      %3310 = vmatprep.subr.bf16.mxu0 0
      %3311 = vmatpush1.bf16.msra.mxu0 0
      %3312 = vmatprep.subr.bf16.mxu0 0
      %3313 = vmatpush1.bf16.msra.mxu0 0
      %3314 = vmatprep.subr.bf16.mxu0 0
      %3315 = vmatpush1.bf16.msra.mxu0 0
      %3316 = vmatprep.subr.bf16.mxu0 0
      %3317 = vmatpush1.bf16.msra.mxu0 0
      %3318 = vmatprep.subr.bf16.mxu0 0
      %3319 = vmatpush1.bf16.msra.mxu0 0
      %3320 = vmatprep.subr.bf16.mxu0 0
      %3321 = vmatpush1.bf16.msra.mxu0 0
      %3322 = vmatprep.subr.bf16.mxu0 0
      %3323 = vmatpush1.bf16.msra.mxu0 0
      %3324 = vmatprep.subr.bf16.mxu0 0
      %3325 = vmatpush1.bf16.msra.mxu0 0
      %3326 = vmatprep.subr.bf16.mxu0 0
      %3327 = vmatpush1.bf16.msra.mxu0 0
      %3328 = vmatprep.subr.bf16.mxu0 0
      %3329 = vmatpush1.bf16.msra.mxu0 0
      %3330 = vmatprep.subr.bf16.mxu0 0
      %3331 = vmatpush1.bf16.msra.mxu0 0
      %3332 = vmatprep.mubr.bf16.mxu0 0
      %3333 = vmatmul.mubr.bf16.gmra.mrb[0].mxu0 %v3250
      %v3334 = vpop.f32.mrb[0].mxu0
      %v3335 = vadd.f32 0.0, %v3334
      %v3336 = vpop.f32.mrb[0].mxu0
      %v3337 = vpop.f32.mrb[0].mxu0
      %v3338 = vadd.f32 0.0, %v3337
      %v3339 = vpop.f32.mrb[0].mxu0
      %3340 = vmatprep.mubr.bf16.mxu0 0
      %3341 = vmatmul.mubr.bf16.gmra.mrb[0].mxu0 %v3253
      %v3342 = vpop.f32.mrb[0].mxu0
      %v3343 = vadd.f32 0.0, %v3342
      %v3344 = vpop.f32.mrb[0].mxu0
      %v3345 = vpop.f32.mrb[0].mxu0
      %v3346 = vadd.f32 0.0, %v3345
      %v3347 = vpop.f32.mrb[0].mxu0
      %3348 = vmatprep.mubr.bf16.mxu0 0
      %3349 = vmatmul.mubr.bf16.gmra.mrb[0].mxu0 %v3256
      %v3350 = vpop.f32.mrb[0].mxu0
      %v3351 = vadd.f32 0.0, %v3350
      %v3352 = vpop.f32.mrb[0].mxu0
      %v3353 = vpop.f32.mrb[0].mxu0
      %v3354 = vadd.f32 0.0, %v3353
      %v3355 = vpop.f32.mrb[0].mxu0
      %3356 = vmatprep.mubr.bf16.mxu0 0
      %3357 = vmatmul.mubr.bf16.gmra.mrb[0].mxu0 %v3259
      %v3358 = vpop.f32.mrb[0].mxu0
      %v3359 = vadd.f32 0.0, %v3358
      %v3360 = vpop.f32.mrb[0].mxu0
      %v3361 = vpop.f32.mrb[0].mxu0
      %v3362 = vadd.f32 0.0, %v3361
      %v3363 = vpop.f32.mrb[0].mxu0
      %3364 = vmatprep.mubr.bf16.mxu0 0
      %3365 = vmatmul.mubr.bf16.gmra.mrb[0].mxu0 %v3262
      %v3366 = vpop.f32.mrb[0].mxu0
      %v3367 = vadd.f32 0.0, %v3366
      %v3368 = vpop.f32.mrb[0].mxu0
      %v3369 = vpop.f32.mrb[0].mxu0
      %v3370 = vadd.f32 0.0, %v3369
      %v3371 = vpop.f32.mrb[0].mxu0
      %3372 = vmatprep.mubr.bf16.mxu0 0
      %3373 = vmatmul.mubr.bf16.gmra.mrb[0].mxu0 %v3265
      %v3374 = vpop.f32.mrb[0].mxu0
      %v3375 = vadd.f32 0.0, %v3374
      %v3376 = vpop.f32.mrb[0].mxu0
      %v3377 = vpop.f32.mrb[0].mxu0
      %v3378 = vadd.f32 0.0, %v3377
      %v3379 = vpop.f32.mrb[0].mxu0
      %3380 = vmatprep.mubr.bf16.mxu0 0
      %3381 = vmatmul.mubr.bf16.gmra.mrb[0].mxu0 %v3268
      %v3382 = vpop.f32.mrb[0].mxu0
      %v3383 = vadd.f32 0.0, %v3382
      %v3384 = vpop.f32.mrb[0].mxu0
      %v3385 = vpop.f32.mrb[0].mxu0
      %v3386 = vadd.f32 0.0, %v3385
      %v3387 = vpop.f32.mrb[0].mxu0
      %3388 = vmatprep.mubr.bf16.mxu0 0
      %3389 = vmatmul.mubr.bf16.gmra.mrb[0].mxu0 %v3271
      %v3390 = vpop.f32.mrb[0].mxu0
      %v3391 = vadd.f32 0.0, %v3390
      %v3392 = vpop.f32.mrb[0].mxu0
      %v3393 = vpop.f32.mrb[0].mxu0
      %v3394 = vadd.f32 0.0, %v3393
      %v3395 = vpop.f32.mrb[0].mxu0
      %3396 = vmatprep.mubr.bf16.mxu0 0
      %3397 = vmatmul.mubr.bf16.gmra.mrb[0].mxu0 %v3274
      %v3398 = vpop.f32.mrb[0].mxu0
      %v3399 = vadd.f32 0.0, %v3398
      %v3400 = vpop.f32.mrb[0].mxu0
      %v3401 = vpop.f32.mrb[0].mxu0
      %v3402 = vadd.f32 0.0, %v3401
      %v3403 = vpop.f32.mrb[0].mxu0
      %3404 = vmatprep.mubr.bf16.mxu0 0
      %3405 = vmatmul.mubr.bf16.gmra.mrb[0].mxu0 %v3277
      %v3406 = vpop.f32.mrb[0].mxu0
      %v3407 = vadd.f32 0.0, %v3406
      %v3408 = vpop.f32.mrb[0].mxu0
      %v3409 = vpop.f32.mrb[0].mxu0
      %v3410 = vadd.f32 0.0, %v3409
      %v3411 = vpop.f32.mrb[0].mxu0
      %3412 = vmatprep.mubr.bf16.mxu0 0
      %3413 = vmatmul.mubr.bf16.gmra.mrb[0].mxu0 %v3280
      %v3414 = vpop.f32.mrb[0].mxu0
      %v3415 = vadd.f32 0.0, %v3414
      %v3416 = vpop.f32.mrb[0].mxu0
      %v3417 = vpop.f32.mrb[0].mxu0
      %v3418 = vadd.f32 0.0, %v3417
      %v3419 = vpop.f32.mrb[0].mxu0
      %3420 = vmatprep.mubr.bf16.mxu0 0
      %3421 = vmatmul.mubr.bf16.gmra.mrb[0].mxu0 %v3283
      %v3422 = vpop.f32.mrb[0].mxu0
      %v3423 = vadd.f32 0.0, %v3422
      %v3424 = vpop.f32.mrb[0].mxu0
      %v3425 = vpop.f32.mrb[0].mxu0
      %v3426 = vadd.f32 0.0, %v3425
      %v3427 = vpop.f32.mrb[0].mxu0
      %3428 = vmatprep.mubr.bf16.mxu0 0
      %3429 = vmatmul.mubr.bf16.gmra.mrb[0].mxu0 %v3286
      %v3430 = vpop.f32.mrb[0].mxu0
      %v3431 = vadd.f32 0.0, %v3430
      %v3432 = vpop.f32.mrb[0].mxu0
      %v3433 = vpop.f32.mrb[0].mxu0
      %v3434 = vadd.f32 0.0, %v3433
      %v3435 = vpop.f32.mrb[0].mxu0
      %3436 = vmatprep.mubr.bf16.mxu0 0
      %3437 = vmatmul.mubr.bf16.gmra.mrb[0].mxu0 %v3289
      %v3438 = vpop.f32.mrb[0].mxu0
      %v3439 = vadd.f32 0.0, %v3438
      %v3440 = vpop.f32.mrb[0].mxu0
      %v3441 = vpop.f32.mrb[0].mxu0
      %v3442 = vadd.f32 0.0, %v3441
      %v3443 = vpop.f32.mrb[0].mxu0
      %3444 = vmatprep.mubr.bf16.mxu0 0
      %3445 = vmatmul.mubr.bf16.gmra.mrb[0].mxu0 %v3292
      %v3446 = vpop.f32.mrb[0].mxu0
      %v3447 = vadd.f32 0.0, %v3446
      %v3448 = vpop.f32.mrb[0].mxu0
      %v3449 = vpop.f32.mrb[0].mxu0
      %v3450 = vadd.f32 0.0, %v3449
      %v3451 = vpop.f32.mrb[0].mxu0
      %3452 = vmatprep.mubr.bf16.mxu0 0
      %3453 = vmatmul.mubr.bf16.gmra.mrb[0].mxu0 %v3295
      %v3454 = vpop.f32.mrb[0].mxu0
      %v3455 = vadd.f32 0.0, %v3454
      %v3456 = vpop.f32.mrb[0].mxu0
      %v3457 = vpop.f32.mrb[0].mxu0
      %v3458 = vadd.f32 0.0, %v3457
      %v3459 = vpop.f32.mrb[0].mxu0
      %3460 = vdwg.mxu0
      %v3461 = vadd.f32 %v3083, %v3335
      %v3462 = vadd.f32 %v3084, %v3338
      %v3463 = vadd.f32 %v3085, %v3343
      %v3464 = vadd.f32 %v3086, %v3346
      %v3465 = vadd.f32 %v3087, %v3351
      %v3466 = vadd.f32 %v3088, %v3354
      %v3467 = vadd.f32 %v3089, %v3359
      %v3468 = vadd.f32 %v3090, %v3362
      %v3469 = vadd.f32 %v3091, %v3367
      %v3470 = vadd.f32 %v3092, %v3370
      %v3471 = vadd.f32 %v3093, %v3375
      %v3472 = vadd.f32 %v3094, %v3378
      %v3473 = vadd.f32 %v3095, %v3383
      %v3474 = vadd.f32 %v3096, %v3386
      %v3475 = vadd.f32 %v3097, %v3391
      %v3476 = vadd.f32 %v3098, %v3394
      %v3477 = vadd.f32 %v3099, %v3399
      %v3478 = vadd.f32 %v3100, %v3402
      %v3479 = vadd.f32 %v3101, %v3407
      %v3480 = vadd.f32 %v3102, %v3410
      %v3481 = vadd.f32 %v3103, %v3415
      %v3482 = vadd.f32 %v3104, %v3418
      %v3483 = vadd.f32 %v3105, %v3423
      %v3484 = vadd.f32 %v3106, %v3426
      %v3485 = vadd.f32 %v3107, %v3431
      %v3486 = vadd.f32 %v3108, %v3434
      %v3487 = vadd.f32 %v3109, %v3439
      %v3488 = vadd.f32 %v3110, %v3442
      %v3489 = vadd.f32 %v3111, %v3447
      %v3490 = vadd.f32 %v3112, %v3450
      %v3491 = vadd.f32 %v3113, %v3455
      %v3492 = vadd.f32 %v3114, %v3458
      %v3494 = vshrl.u32 %v3119, 16
      %v3496 = vrot.slane %v3494, 4
      %v3497 = vshll.u32 %v3119, 16
      %v3499 = vrot.slane %v3497, 5
      %v3500 = vor.u32 %v3496, %v3499
      %v3501 = vrot.slane %v3500, 4
      %v3503 = vshll.u32 %v3120, 16
      %v3505 = vrot.slane %v3503, 5
      %v3506 = vsel %vm271, %v3501, %v3505
      %v3507 = vshrl.u32 %v3120, 16
      %v3509 = vrot.slane %v3507, 4
      %v3510 = vor.u32 %v3509, %v3505
      %v3511 = vrot.slane %v3510, 4
      %v3513 = vshll.u32 %v3121, 16
      %v3515 = vrot.slane %v3513, 5
      %v3516 = vsel %vm271, %v3511, %v3515
      %v3518 = vshrl.u32 %v3122, 16
      %v3520 = vrot.slane %v3518, 4
      %v3521 = vshll.u32 %v3122, 16
      %v3523 = vrot.slane %v3521, 5
      %v3524 = vor.u32 %v3520, %v3523
      %v3525 = vrot.slane %v3524, 4
      %v3527 = vshll.u32 %v3123, 16
      %v3529 = vrot.slane %v3527, 5
      %v3530 = vsel %vm271, %v3525, %v3529
      %v3531 = vshrl.u32 %v3123, 16
      %v3533 = vrot.slane %v3531, 4
      %v3534 = vor.u32 %v3533, %v3529
      %v3535 = vrot.slane %v3534, 4
      %v3537 = vshll.u32 %v3124, 16
      %v3539 = vrot.slane %v3537, 5
      %v3540 = vsel %vm271, %v3535, %v3539
      %v3542 = vshrl.u32 %v3125, 16
      %v3544 = vrot.slane %v3542, 4
      %v3545 = vshll.u32 %v3125, 16
      %v3547 = vrot.slane %v3545, 5
      %v3548 = vor.u32 %v3544, %v3547
      %v3549 = vrot.slane %v3548, 4
      %v3551 = vshll.u32 %v3126, 16
      %v3553 = vrot.slane %v3551, 5
      %v3554 = vsel %vm271, %v3549, %v3553
      %v3555 = vshrl.u32 %v3126, 16
      %v3557 = vrot.slane %v3555, 4
      %v3558 = vor.u32 %v3557, %v3553
      %v3559 = vrot.slane %v3558, 4
      %v3561 = vshll.u32 %v3127, 16
      %v3563 = vrot.slane %v3561, 5
      %v3564 = vsel %vm271, %v3559, %v3563
      %v3566 = vshrl.u32 %v3128, 16
      %v3568 = vrot.slane %v3566, 4
      %v3569 = vshll.u32 %v3128, 16
      %v3571 = vrot.slane %v3569, 5
      %v3572 = vor.u32 %v3568, %v3571
      %v3573 = vrot.slane %v3572, 4
      %v3575 = vshll.u32 %v3129, 16
      %v3577 = vrot.slane %v3575, 5
      %v3578 = vsel %vm271, %v3573, %v3577
      %v3579 = vshrl.u32 %v3129, 16
      %v3581 = vrot.slane %v3579, 4
      %v3582 = vor.u32 %v3581, %v3577
      %v3583 = vrot.slane %v3582, 4
      %v3585 = vshll.u32 %v3130, 16
      %v3587 = vrot.slane %v3585, 5
      %v3588 = vsel %vm271, %v3583, %v3587
      %v3590 = vshrl.u32 %v3131, 16
      %v3592 = vrot.slane %v3590, 4
      %v3593 = vshll.u32 %v3131, 16
      %v3595 = vrot.slane %v3593, 5
      %v3596 = vor.u32 %v3592, %v3595
      %v3597 = vrot.slane %v3596, 4
      %v3599 = vshll.u32 %v3132, 16
      %v3601 = vrot.slane %v3599, 5
      %v3602 = vsel %vm271, %v3597, %v3601
      %v3603 = vshrl.u32 %v3132, 16
      %v3605 = vrot.slane %v3603, 4
      %v3606 = vor.u32 %v3605, %v3601
      %v3607 = vrot.slane %v3606, 4
      %v3609 = vshll.u32 %v3133, 16
      %v3611 = vrot.slane %v3609, 5
      %v3612 = vsel %vm271, %v3607, %v3611
      %v3614 = vshrl.u32 %v3134, 16
      %v3616 = vrot.slane %v3614, 4
      %v3617 = vshll.u32 %v3134, 16
      %v3619 = vrot.slane %v3617, 5
      %v3620 = vor.u32 %v3616, %v3619
      %v3621 = vrot.slane %v3620, 4
      %v3623 = vshll.u32 %v3135, 16
      %v3625 = vrot.slane %v3623, 5
      %v3626 = vsel %vm271, %v3621, %v3625
      %v3627 = vshrl.u32 %v3135, 16
      %v3629 = vrot.slane %v3627, 4
      %v3630 = vor.u32 %v3629, %v3625
      %v3631 = vrot.slane %v3630, 4
      %v3633 = vshll.u32 %v3136, 16
      %v3635 = vrot.slane %v3633, 5
      %v3636 = vsel %vm271, %v3631, %v3635
      %v3638 = vshrl.u32 %v3137, 16
      %v3640 = vrot.slane %v3638, 4
      %v3641 = vshll.u32 %v3137, 16
      %v3643 = vrot.slane %v3641, 5
      %v3644 = vor.u32 %v3640, %v3643
      %v3645 = vrot.slane %v3644, 4
      %v3647 = vshll.u32 %v3138, 16
      %v3649 = vrot.slane %v3647, 5
      %v3650 = vsel %vm271, %v3645, %v3649
      %v3651 = vshrl.u32 %v3138, 16
      %v3653 = vrot.slane %v3651, 4
      %v3654 = vor.u32 %v3653, %v3649
      %v3655 = vrot.slane %v3654, 4
      %v3657 = vshll.u32 %v3139, 16
      %v3659 = vrot.slane %v3657, 5
      %v3660 = vsel %vm271, %v3655, %v3659
      %v3662 = vshrl.u32 %v3140, 16
      %v3664 = vrot.slane %v3662, 4
      %v3665 = vshll.u32 %v3140, 16
      %v3667 = vrot.slane %v3665, 5
      %v3668 = vor.u32 %v3664, %v3667
      %v3669 = vrot.slane %v3668, 4
      %v3671 = vshll.u32 %v3141, 16
      %v3673 = vrot.slane %v3671, 5
      %v3674 = vsel %vm271, %v3669, %v3673
      %v3675 = vshrl.u32 %v3141, 16
      %v3677 = vrot.slane %v3675, 4
      %v3678 = vor.u32 %v3677, %v3673
      %v3679 = vrot.slane %v3678, 4
      %v3681 = vshll.u32 %v3142, 16
      %v3683 = vrot.slane %v3681, 5
      %v3684 = vsel %vm271, %v3679, %v3683
      %v3686 = vshrl.u32 %v3143, 16
      %v3688 = vrot.slane %v3686, 4
      %v3689 = vshll.u32 %v3143, 16
      %v3691 = vrot.slane %v3689, 5
      %v3692 = vor.u32 %v3688, %v3691
      %v3693 = vrot.slane %v3692, 4
      %v3695 = vshll.u32 %v3144, 16
      %v3697 = vrot.slane %v3695, 5
      %v3698 = vsel %vm271, %v3693, %v3697
      %v3699 = vshrl.u32 %v3144, 16
      %v3701 = vrot.slane %v3699, 4
      %v3702 = vor.u32 %v3701, %v3697
      %v3703 = vrot.slane %v3702, 4
      %v3705 = vshll.u32 %v3145, 16
      %v3707 = vrot.slane %v3705, 5
      %v3708 = vsel %vm271, %v3703, %v3707
      %v3710 = vshrl.u32 %v3146, 16
      %v3712 = vrot.slane %v3710, 4
      %v3713 = vshll.u32 %v3146, 16
      %v3715 = vrot.slane %v3713, 5
      %v3716 = vor.u32 %v3712, %v3715
      %v3717 = vrot.slane %v3716, 4
      %v3719 = vshll.u32 %v3147, 16
      %v3721 = vrot.slane %v3719, 5
      %v3722 = vsel %vm271, %v3717, %v3721
      %v3723 = vshrl.u32 %v3147, 16
      %v3725 = vrot.slane %v3723, 4
      %v3726 = vor.u32 %v3725, %v3721
      %v3727 = vrot.slane %v3726, 4
      %v3729 = vshll.u32 %v3148, 16
      %v3731 = vrot.slane %v3729, 5
      %v3732 = vsel %vm271, %v3727, %v3731
      %v3734 = vshrl.u32 %v3149, 16
      %v3736 = vrot.slane %v3734, 4
      %v3737 = vshll.u32 %v3149, 16
      %v3739 = vrot.slane %v3737, 5
      %v3740 = vor.u32 %v3736, %v3739
      %v3741 = vrot.slane %v3740, 4
      %v3743 = vshll.u32 %v3150, 16
      %v3745 = vrot.slane %v3743, 5
      %v3746 = vsel %vm271, %v3741, %v3745
      %v3747 = vshrl.u32 %v3150, 16
      %v3749 = vrot.slane %v3747, 4
      %v3750 = vor.u32 %v3749, %v3745
      %v3751 = vrot.slane %v3750, 4
      %v3753 = vshll.u32 %v3151, 16
      %v3755 = vrot.slane %v3753, 5
      %v3756 = vsel %vm271, %v3751, %v3755
      %v3758 = vshrl.u32 %v3152, 16
      %v3760 = vrot.slane %v3758, 4
      %v3761 = vshll.u32 %v3152, 16
      %v3763 = vrot.slane %v3761, 5
      %v3764 = vor.u32 %v3760, %v3763
      %v3765 = vrot.slane %v3764, 4
      %v3767 = vshll.u32 %v3153, 16
      %v3769 = vrot.slane %v3767, 5
      %v3770 = vsel %vm271, %v3765, %v3769
      %v3771 = vshrl.u32 %v3153, 16
      %v3773 = vrot.slane %v3771, 4
      %v3774 = vor.u32 %v3773, %v3769
      %v3775 = vrot.slane %v3774, 4
      %v3777 = vshll.u32 %v3154, 16
      %v3779 = vrot.slane %v3777, 5
      %v3780 = vsel %vm271, %v3775, %v3779
      %v3782 = vshrl.u32 %v3155, 16
      %v3784 = vrot.slane %v3782, 4
      %v3785 = vshll.u32 %v3155, 16
      %v3787 = vrot.slane %v3785, 5
      %v3788 = vor.u32 %v3784, %v3787
      %v3789 = vrot.slane %v3788, 4
      %v3791 = vshll.u32 %v3156, 16
      %v3793 = vrot.slane %v3791, 5
      %v3794 = vsel %vm271, %v3789, %v3793
      %v3795 = vshrl.u32 %v3156, 16
      %v3797 = vrot.slane %v3795, 4
      %v3798 = vor.u32 %v3797, %v3793
      %v3799 = vrot.slane %v3798, 4
      %v3801 = vshll.u32 %v3157, 16
      %v3803 = vrot.slane %v3801, 5
      %v3804 = vsel %vm271, %v3799, %v3803
      %v3806 = vshrl.u32 %v3158, 16
      %v3808 = vrot.slane %v3806, 4
      %v3809 = vshll.u32 %v3158, 16
      %v3811 = vrot.slane %v3809, 5
      %v3812 = vor.u32 %v3808, %v3811
      %v3813 = vrot.slane %v3812, 4
      %v3815 = vshll.u32 %v3159, 16
      %v3817 = vrot.slane %v3815, 5
      %v3818 = vsel %vm271, %v3813, %v3817
      %v3819 = vshrl.u32 %v3159, 16
      %v3821 = vrot.slane %v3819, 4
      %v3822 = vor.u32 %v3821, %v3817
      %v3823 = vrot.slane %v3822, 4
      %v3825 = vshll.u32 %v3160, 16
      %v3827 = vrot.slane %v3825, 5
      %v3828 = vsel %vm271, %v3823, %v3827
      %v3830 = vshrl.u32 %v3161, 16
      %v3832 = vrot.slane %v3830, 4
      %v3833 = vshll.u32 %v3161, 16
      %v3835 = vrot.slane %v3833, 5
      %v3836 = vor.u32 %v3832, %v3835
      %v3837 = vrot.slane %v3836, 4
      %v3839 = vshll.u32 %v3162, 16
      %v3841 = vrot.slane %v3839, 5
      %v3842 = vsel %vm271, %v3837, %v3841
      %v3843 = vshrl.u32 %v3162, 16
      %v3845 = vrot.slane %v3843, 4
      %v3846 = vor.u32 %v3845, %v3841
      %v3847 = vrot.slane %v3846, 4
      %v3849 = vshll.u32 %v3163, 16
      %v3851 = vrot.slane %v3849, 5
      %v3852 = vsel %vm271, %v3847, %v3851
      %v3854 = vshrl.u32 %v3164, 16
      %v3856 = vrot.slane %v3854, 4
      %v3857 = vshll.u32 %v3164, 16
      %v3859 = vrot.slane %v3857, 5
      %v3860 = vor.u32 %v3856, %v3859
      %v3861 = vrot.slane %v3860, 4
      %v3863 = vshll.u32 %v3165, 16
      %v3865 = vrot.slane %v3863, 5
      %v3866 = vsel %vm271, %v3861, %v3865
      %v3867 = vshrl.u32 %v3165, 16
      %v3869 = vrot.slane %v3867, 4
      %v3870 = vor.u32 %v3869, %v3865
      %v3871 = vrot.slane %v3870, 4
      %v3873 = vshll.u32 %v3166, 16
      %v3875 = vrot.slane %v3873, 5
      %v3876 = vsel %vm271, %v3871, %v3875
      %s3877 = scalar_lea.vmem %s1, 28
      %v3878 = vld [vmem:[%s3877] sm:$0xf]
      %v3879 = vunpack.c.l.b16 %v3506
      %v3880 = vunpack.c.l.b16 %v3516
      %v3881 = vunpack.c.l.b16 %v3530
      %v3882 = vunpack.c.l.b16 %v3540
      %v3883 = vunpack.c.l.b16 %v3554
      %v3884 = vunpack.c.l.b16 %v3564
      %v3885 = vunpack.c.l.b16 %v3578
      %v3886 = vunpack.c.l.b16 %v3588
      %v3887 = vunpack.c.l.b16 %v3602
      %v3888 = vunpack.c.l.b16 %v3612
      %v3889 = vunpack.c.l.b16 %v3626
      %v3890 = vunpack.c.l.b16 %v3636
      %v3891 = vunpack.c.l.b16 %v3650
      %v3892 = vunpack.c.l.b16 %v3660
      %v3893 = vunpack.c.l.b16 %v3674
      %v3894 = vunpack.c.l.b16 %v3684
      %v3895 = vunpack.c.l.b16 %v3698
      %v3896 = vunpack.c.l.b16 %v3708
      %v3897 = vunpack.c.l.b16 %v3722
      %v3898 = vunpack.c.l.b16 %v3732
      %v3899 = vunpack.c.l.b16 %v3746
      %v3900 = vunpack.c.l.b16 %v3756
      %v3901 = vunpack.c.l.b16 %v3770
      %v3902 = vunpack.c.l.b16 %v3780
      %v3903 = vunpack.c.l.b16 %v3794
      %v3904 = vunpack.c.l.b16 %v3804
      %v3905 = vunpack.c.l.b16 %v3818
      %v3906 = vunpack.c.l.b16 %v3828
      %v3907 = vunpack.c.l.b16 %v3842
      %v3908 = vunpack.c.l.b16 %v3852
      %v3909 = vunpack.c.l.b16 %v3866
      %v3910 = vunpack.c.l.b16 %v3876
      %v3911 = vpack.c.b16 %v3880, %v3879
      %v3912 = vpack.c.b16 %v3882, %v3881
      %v3913 = vpack.c.b16 %v3884, %v3883
      %v3914 = vpack.c.b16 %v3886, %v3885
      %v3915 = vpack.c.b16 %v3888, %v3887
      %v3916 = vpack.c.b16 %v3890, %v3889
      %v3917 = vpack.c.b16 %v3892, %v3891
      %v3918 = vpack.c.b16 %v3894, %v3893
      %v3919 = vpack.c.b16 %v3896, %v3895
      %v3920 = vpack.c.b16 %v3898, %v3897
      %v3921 = vpack.c.b16 %v3900, %v3899
      %v3922 = vpack.c.b16 %v3902, %v3901
      %v3923 = vpack.c.b16 %v3904, %v3903
      %v3924 = vpack.c.b16 %v3906, %v3905
      %v3925 = vpack.c.b16 %v3908, %v3907
      %v3926 = vpack.c.b16 %v3910, %v3909
      %v3928 = vsel %vm706, %v3911, 0
      %v3931 = vsel %vm706, %v3912, 0
      %v3934 = vsel %vm706, %v3913, 0
      %v3937 = vsel %vm706, %v3914, 0
      %v3940 = vsel %vm706, %v3915, 0
      %v3943 = vsel %vm706, %v3916, 0
      %v3946 = vsel %vm706, %v3917, 0
      %v3949 = vsel %vm706, %v3918, 0
      %v3952 = vsel %vm706, %v3919, 0
      %v3955 = vsel %vm706, %v3920, 0
      %v3958 = vsel %vm706, %v3921, 0
      %v3961 = vsel %vm706, %v3922, 0
      %v3964 = vsel %vm706, %v3923, 0
      %v3967 = vsel %vm706, %v3924, 0
      %v3970 = vsel %vm706, %v3925, 0
      %v3973 = vsel %vm706, %v3926, 0
      %v3976 = vsel %vm755, %v3878, 0
      %3978 = vmatprep.subr.bf16.mxu0 0
      %3979 = vmatpush1.bf16.msra.mxu0 %v3976
      %3980 = vmatprep.subr.bf16.mxu0 0
      %3981 = vmatpush1.bf16.msra.mxu0 0
      %3982 = vmatprep.subr.bf16.mxu0 0
      %3983 = vmatpush1.bf16.msra.mxu0 0
      %3984 = vmatprep.subr.bf16.mxu0 0
      %3985 = vmatpush1.bf16.msra.mxu0 0
      %3986 = vmatprep.subr.bf16.mxu0 0
      %3987 = vmatpush1.bf16.msra.mxu0 0
      %3988 = vmatprep.subr.bf16.mxu0 0
      %3989 = vmatpush1.bf16.msra.mxu0 0
      %3990 = vmatprep.subr.bf16.mxu0 0
      %3991 = vmatpush1.bf16.msra.mxu0 0
      %3992 = vmatprep.subr.bf16.mxu0 0
      %3993 = vmatpush1.bf16.msra.mxu0 0
      %3994 = vmatprep.subr.bf16.mxu0 0
      %3995 = vmatpush1.bf16.msra.mxu0 0
      %3996 = vmatprep.subr.bf16.mxu0 0
      %3997 = vmatpush1.bf16.msra.mxu0 0
      %3998 = vmatprep.subr.bf16.mxu0 0
      %3999 = vmatpush1.bf16.msra.mxu0 0
      %4000 = vmatprep.subr.bf16.mxu0 0
      %4001 = vmatpush1.bf16.msra.mxu0 0
      %4002 = vmatprep.subr.bf16.mxu0 0
      %4003 = vmatpush1.bf16.msra.mxu0 0
      %4004 = vmatprep.subr.bf16.mxu0 0
      %4005 = vmatpush1.bf16.msra.mxu0 0
      %4006 = vmatprep.subr.bf16.mxu0 0
      %4007 = vmatpush1.bf16.msra.mxu0 0
      %4008 = vmatprep.subr.bf16.mxu0 0
      %4009 = vmatpush1.bf16.msra.mxu0 0
      %4010 = vmatprep.mubr.bf16.mxu0 0
      %4011 = vmatmul.mubr.bf16.gmra.mrb[0].mxu0 %v3928
      %v4012 = vpop.f32.mrb[0].mxu0
      %v4013 = vadd.f32 0.0, %v4012
      %v4014 = vpop.f32.mrb[0].mxu0
      %v4015 = vpop.f32.mrb[0].mxu0
      %v4016 = vadd.f32 0.0, %v4015
      %v4017 = vpop.f32.mrb[0].mxu0
      %4018 = vmatprep.mubr.bf16.mxu0 0
      %4019 = vmatmul.mubr.bf16.gmra.mrb[0].mxu0 %v3931
      %v4020 = vpop.f32.mrb[0].mxu0
      %v4021 = vadd.f32 0.0, %v4020
      %v4022 = vpop.f32.mrb[0].mxu0
      %v4023 = vpop.f32.mrb[0].mxu0
      %v4024 = vadd.f32 0.0, %v4023
      %v4025 = vpop.f32.mrb[0].mxu0
      %4026 = vmatprep.mubr.bf16.mxu0 0
      %4027 = vmatmul.mubr.bf16.gmra.mrb[0].mxu0 %v3934
      %v4028 = vpop.f32.mrb[0].mxu0
      %v4029 = vadd.f32 0.0, %v4028
      %v4030 = vpop.f32.mrb[0].mxu0
      %v4031 = vpop.f32.mrb[0].mxu0
      %v4032 = vadd.f32 0.0, %v4031
      %v4033 = vpop.f32.mrb[0].mxu0
      %4034 = vmatprep.mubr.bf16.mxu0 0
      %4035 = vmatmul.mubr.bf16.gmra.mrb[0].mxu0 %v3937
      %v4036 = vpop.f32.mrb[0].mxu0
      %v4037 = vadd.f32 0.0, %v4036
      %v4038 = vpop.f32.mrb[0].mxu0
      %v4039 = vpop.f32.mrb[0].mxu0
      %v4040 = vadd.f32 0.0, %v4039
      %v4041 = vpop.f32.mrb[0].mxu0
      %4042 = vmatprep.mubr.bf16.mxu0 0
      %4043 = vmatmul.mubr.bf16.gmra.mrb[0].mxu0 %v3940
      %v4044 = vpop.f32.mrb[0].mxu0
      %v4045 = vadd.f32 0.0, %v4044
      %v4046 = vpop.f32.mrb[0].mxu0
      %v4047 = vpop.f32.mrb[0].mxu0
      %v4048 = vadd.f32 0.0, %v4047
      %v4049 = vpop.f32.mrb[0].mxu0
      %4050 = vmatprep.mubr.bf16.mxu0 0
      %4051 = vmatmul.mubr.bf16.gmra.mrb[0].mxu0 %v3943
      %v4052 = vpop.f32.mrb[0].mxu0
      %v4053 = vadd.f32 0.0, %v4052
      %v4054 = vpop.f32.mrb[0].mxu0
      %v4055 = vpop.f32.mrb[0].mxu0
      %v4056 = vadd.f32 0.0, %v4055
      %v4057 = vpop.f32.mrb[0].mxu0
      %4058 = vmatprep.mubr.bf16.mxu0 0
      %4059 = vmatmul.mubr.bf16.gmra.mrb[0].mxu0 %v3946
      %v4060 = vpop.f32.mrb[0].mxu0
      %v4061 = vadd.f32 0.0, %v4060
      %v4062 = vpop.f32.mrb[0].mxu0
      %v4063 = vpop.f32.mrb[0].mxu0
      %v4064 = vadd.f32 0.0, %v4063
      %v4065 = vpop.f32.mrb[0].mxu0
      %4066 = vmatprep.mubr.bf16.mxu0 0
      %4067 = vmatmul.mubr.bf16.gmra.mrb[0].mxu0 %v3949
      %v4068 = vpop.f32.mrb[0].mxu0
      %v4069 = vadd.f32 0.0, %v4068
      %v4070 = vpop.f32.mrb[0].mxu0
      %v4071 = vpop.f32.mrb[0].mxu0
      %v4072 = vadd.f32 0.0, %v4071
      %v4073 = vpop.f32.mrb[0].mxu0
      %4074 = vmatprep.mubr.bf16.mxu0 0
      %4075 = vmatmul.mubr.bf16.gmra.mrb[0].mxu0 %v3952
      %v4076 = vpop.f32.mrb[0].mxu0
      %v4077 = vadd.f32 0.0, %v4076
      %v4078 = vpop.f32.mrb[0].mxu0
      %v4079 = vpop.f32.mrb[0].mxu0
      %v4080 = vadd.f32 0.0, %v4079
      %v4081 = vpop.f32.mrb[0].mxu0
      %4082 = vmatprep.mubr.bf16.mxu0 0
      %4083 = vmatmul.mubr.bf16.gmra.mrb[0].mxu0 %v3955
      %v4084 = vpop.f32.mrb[0].mxu0
      %v4085 = vadd.f32 0.0, %v4084
      %v4086 = vpop.f32.mrb[0].mxu0
      %v4087 = vpop.f32.mrb[0].mxu0
      %v4088 = vadd.f32 0.0, %v4087
      %v4089 = vpop.f32.mrb[0].mxu0
      %4090 = vmatprep.mubr.bf16.mxu0 0
      %4091 = vmatmul.mubr.bf16.gmra.mrb[0].mxu0 %v3958
      %v4092 = vpop.f32.mrb[0].mxu0
      %v4093 = vadd.f32 0.0, %v4092
      %v4094 = vpop.f32.mrb[0].mxu0
      %v4095 = vpop.f32.mrb[0].mxu0
      %v4096 = vadd.f32 0.0, %v4095
      %v4097 = vpop.f32.mrb[0].mxu0
      %4098 = vmatprep.mubr.bf16.mxu0 0
      %4099 = vmatmul.mubr.bf16.gmra.mrb[0].mxu0 %v3961
      %v4100 = vpop.f32.mrb[0].mxu0
      %v4101 = vadd.f32 0.0, %v4100
      %v4102 = vpop.f32.mrb[0].mxu0
      %v4103 = vpop.f32.mrb[0].mxu0
      %v4104 = vadd.f32 0.0, %v4103
      %v4105 = vpop.f32.mrb[0].mxu0
      %4106 = vmatprep.mubr.bf16.mxu0 0
      %4107 = vmatmul.mubr.bf16.gmra.mrb[0].mxu0 %v3964
      %v4108 = vpop.f32.mrb[0].mxu0
      %v4109 = vadd.f32 0.0, %v4108
      %v4110 = vpop.f32.mrb[0].mxu0
      %v4111 = vpop.f32.mrb[0].mxu0
      %v4112 = vadd.f32 0.0, %v4111
      %v4113 = vpop.f32.mrb[0].mxu0
      %4114 = vmatprep.mubr.bf16.mxu0 0
      %4115 = vmatmul.mubr.bf16.gmra.mrb[0].mxu0 %v3967
      %v4116 = vpop.f32.mrb[0].mxu0
      %v4117 = vadd.f32 0.0, %v4116
      %v4118 = vpop.f32.mrb[0].mxu0
      %v4119 = vpop.f32.mrb[0].mxu0
      %v4120 = vadd.f32 0.0, %v4119
      %v4121 = vpop.f32.mrb[0].mxu0
      %4122 = vmatprep.mubr.bf16.mxu0 0
      %4123 = vmatmul.mubr.bf16.gmra.mrb[0].mxu0 %v3970
      %v4124 = vpop.f32.mrb[0].mxu0
      %v4125 = vadd.f32 0.0, %v4124
      %v4126 = vpop.f32.mrb[0].mxu0
      %v4127 = vpop.f32.mrb[0].mxu0
      %v4128 = vadd.f32 0.0, %v4127
      %v4129 = vpop.f32.mrb[0].mxu0
      %4130 = vmatprep.mubr.bf16.mxu0 0
      %4131 = vmatmul.mubr.bf16.gmra.mrb[0].mxu0 %v3973
      %v4132 = vpop.f32.mrb[0].mxu0
      %v4133 = vadd.f32 0.0, %v4132
      %v4134 = vpop.f32.mrb[0].mxu0
      %v4135 = vpop.f32.mrb[0].mxu0
      %v4136 = vadd.f32 0.0, %v4135
      %v4137 = vpop.f32.mrb[0].mxu0
      %4138 = vdwg.mxu0
      %v4139 = vadd.f32 %v3461, %v4013
      %v4140 = vadd.f32 %v3462, %v4016
      %v4141 = vadd.f32 %v3463, %v4021
      %v4142 = vadd.f32 %v3464, %v4024
      %v4143 = vadd.f32 %v3465, %v4029
      %v4144 = vadd.f32 %v3466, %v4032
      %v4145 = vadd.f32 %v3467, %v4037
      %v4146 = vadd.f32 %v3468, %v4040
      %v4147 = vadd.f32 %v3469, %v4045
      %v4148 = vadd.f32 %v3470, %v4048
      %v4149 = vadd.f32 %v3471, %v4053
      %v4150 = vadd.f32 %v3472, %v4056
      %v4151 = vadd.f32 %v3473, %v4061
      %v4152 = vadd.f32 %v3474, %v4064
      %v4153 = vadd.f32 %v3475, %v4069
      %v4154 = vadd.f32 %v3476, %v4072
      %v4155 = vadd.f32 %v3477, %v4077
      %v4156 = vadd.f32 %v3478, %v4080
      %v4157 = vadd.f32 %v3479, %v4085
      %v4158 = vadd.f32 %v3480, %v4088
      %v4159 = vadd.f32 %v3481, %v4093
      %v4160 = vadd.f32 %v3482, %v4096
      %v4161 = vadd.f32 %v3483, %v4101
      %v4162 = vadd.f32 %v3484, %v4104
      %v4163 = vadd.f32 %v3485, %v4109
      %v4164 = vadd.f32 %v3486, %v4112
      %v4165 = vadd.f32 %v3487, %v4117
      %v4166 = vadd.f32 %v3488, %v4120
      %v4167 = vadd.f32 %v3489, %v4125
      %v4168 = vadd.f32 %v3490, %v4128
      %v4169 = vadd.f32 %v3491, %v4133
      %v4170 = vadd.f32 %v3492, %v4136
      %v4187 = vrot.slane %v3119, 5
      %v4188 = vrot.slane %v4187, 4
      %v4189 = vrot.slane %v3120, 5
      %v4190 = vsel %vm1230, %v4188, %v4189
      %v4191 = vrot.slane %v4189, 4
      %v4192 = vrot.slane %v3121, 5
      %v4193 = vsel %vm1230, %v4191, %v4192
      %v4194 = vrot.slane %v3122, 5
      %v4195 = vrot.slane %v4194, 4
      %v4196 = vrot.slane %v3123, 5
      %v4197 = vsel %vm1230, %v4195, %v4196
      %v4198 = vrot.slane %v4196, 4
      %v4199 = vrot.slane %v3124, 5
      %v4200 = vsel %vm1230, %v4198, %v4199
      %v4201 = vrot.slane %v3125, 5
      %v4202 = vrot.slane %v4201, 4
      %v4203 = vrot.slane %v3126, 5
      %v4204 = vsel %vm1230, %v4202, %v4203
      %v4205 = vrot.slane %v4203, 4
      %v4206 = vrot.slane %v3127, 5
      %v4207 = vsel %vm1230, %v4205, %v4206
      %v4208 = vrot.slane %v3128, 5
      %v4209 = vrot.slane %v4208, 4
      %v4210 = vrot.slane %v3129, 5
      %v4211 = vsel %vm1230, %v4209, %v4210
      %v4212 = vrot.slane %v4210, 4
      %v4213 = vrot.slane %v3130, 5
      %v4214 = vsel %vm1230, %v4212, %v4213
      %v4215 = vrot.slane %v3131, 5
      %v4216 = vrot.slane %v4215, 4
      %v4217 = vrot.slane %v3132, 5
      %v4218 = vsel %vm1230, %v4216, %v4217
      %v4219 = vrot.slane %v4217, 4
      %v4220 = vrot.slane %v3133, 5
      %v4221 = vsel %vm1230, %v4219, %v4220
      %v4222 = vrot.slane %v3134, 5
      %v4223 = vrot.slane %v4222, 4
      %v4224 = vrot.slane %v3135, 5
      %v4225 = vsel %vm1230, %v4223, %v4224
      %v4226 = vrot.slane %v4224, 4
      %v4227 = vrot.slane %v3136, 5
      %v4228 = vsel %vm1230, %v4226, %v4227
      %v4229 = vrot.slane %v3137, 5
      %v4230 = vrot.slane %v4229, 4
      %v4231 = vrot.slane %v3138, 5
      %v4232 = vsel %vm1230, %v4230, %v4231
      %v4233 = vrot.slane %v4231, 4
      %v4234 = vrot.slane %v3139, 5
      %v4235 = vsel %vm1230, %v4233, %v4234
      %v4236 = vrot.slane %v3140, 5
      %v4237 = vrot.slane %v4236, 4
      %v4238 = vrot.slane %v3141, 5
      %v4239 = vsel %vm1230, %v4237, %v4238
      %v4240 = vrot.slane %v4238, 4
      %v4241 = vrot.slane %v3142, 5
      %v4242 = vsel %vm1230, %v4240, %v4241
      %v4243 = vrot.slane %v3143, 5
      %v4244 = vrot.slane %v4243, 4
      %v4245 = vrot.slane %v3144, 5
      %v4246 = vsel %vm1230, %v4244, %v4245
      %v4247 = vrot.slane %v4245, 4
      %v4248 = vrot.slane %v3145, 5
      %v4249 = vsel %vm1230, %v4247, %v4248
      %v4250 = vrot.slane %v3146, 5
      %v4251 = vrot.slane %v4250, 4
      %v4252 = vrot.slane %v3147, 5
      %v4253 = vsel %vm1230, %v4251, %v4252
      %v4254 = vrot.slane %v4252, 4
      %v4255 = vrot.slane %v3148, 5
      %v4256 = vsel %vm1230, %v4254, %v4255
      %v4257 = vrot.slane %v3149, 5
      %v4258 = vrot.slane %v4257, 4
      %v4259 = vrot.slane %v3150, 5
      %v4260 = vsel %vm1230, %v4258, %v4259
      %v4261 = vrot.slane %v4259, 4
      %v4262 = vrot.slane %v3151, 5
      %v4263 = vsel %vm1230, %v4261, %v4262
      %v4264 = vrot.slane %v3152, 5
      %v4265 = vrot.slane %v4264, 4
      %v4266 = vrot.slane %v3153, 5
      %v4267 = vsel %vm1230, %v4265, %v4266
      %v4268 = vrot.slane %v4266, 4
      %v4269 = vrot.slane %v3154, 5
      %v4270 = vsel %vm1230, %v4268, %v4269
      %v4271 = vrot.slane %v3155, 5
      %v4272 = vrot.slane %v4271, 4
      %v4273 = vrot.slane %v3156, 5
      %v4274 = vsel %vm1230, %v4272, %v4273
      %v4275 = vrot.slane %v4273, 4
      %v4276 = vrot.slane %v3157, 5
      %v4277 = vsel %vm1230, %v4275, %v4276
      %v4278 = vrot.slane %v3158, 5
      %v4279 = vrot.slane %v4278, 4
      %v4280 = vrot.slane %v3159, 5
      %v4281 = vsel %vm1230, %v4279, %v4280
      %v4282 = vrot.slane %v4280, 4
      %v4283 = vrot.slane %v3160, 5
      %v4284 = vsel %vm1230, %v4282, %v4283
      %v4285 = vrot.slane %v3161, 5
      %v4286 = vrot.slane %v4285, 4
      %v4287 = vrot.slane %v3162, 5
      %v4288 = vsel %vm1230, %v4286, %v4287
      %v4289 = vrot.slane %v4287, 4
      %v4290 = vrot.slane %v3163, 5
      %v4291 = vsel %vm1230, %v4289, %v4290
      %v4292 = vrot.slane %v3164, 5
      %v4293 = vrot.slane %v4292, 4
      %v4294 = vrot.slane %v3165, 5
      %v4295 = vsel %vm1230, %v4293, %v4294
      %v4296 = vrot.slane %v4294, 4
      %v4297 = vrot.slane %v3166, 5
      %v4298 = vsel %vm1230, %v4296, %v4297
      %s4299 = scalar_lea.vmem %s1, 32
      %v4300 = vld [vmem:[%s4299] sm:$0xf]
      %v4301 = vunpack.c.l.b16 %v4190
      %v4302 = vunpack.c.l.b16 %v4193
      %v4303 = vunpack.c.l.b16 %v4197
      %v4304 = vunpack.c.l.b16 %v4200
      %v4305 = vunpack.c.l.b16 %v4204
      %v4306 = vunpack.c.l.b16 %v4207
      %v4307 = vunpack.c.l.b16 %v4211
      %v4308 = vunpack.c.l.b16 %v4214
      %v4309 = vunpack.c.l.b16 %v4218
      %v4310 = vunpack.c.l.b16 %v4221
      %v4311 = vunpack.c.l.b16 %v4225
      %v4312 = vunpack.c.l.b16 %v4228
      %v4313 = vunpack.c.l.b16 %v4232
      %v4314 = vunpack.c.l.b16 %v4235
      %v4315 = vunpack.c.l.b16 %v4239
      %v4316 = vunpack.c.l.b16 %v4242
      %v4317 = vunpack.c.l.b16 %v4246
      %v4318 = vunpack.c.l.b16 %v4249
      %v4319 = vunpack.c.l.b16 %v4253
      %v4320 = vunpack.c.l.b16 %v4256
      %v4321 = vunpack.c.l.b16 %v4260
      %v4322 = vunpack.c.l.b16 %v4263
      %v4323 = vunpack.c.l.b16 %v4267
      %v4324 = vunpack.c.l.b16 %v4270
      %v4325 = vunpack.c.l.b16 %v4274
      %v4326 = vunpack.c.l.b16 %v4277
      %v4327 = vunpack.c.l.b16 %v4281
      %v4328 = vunpack.c.l.b16 %v4284
      %v4329 = vunpack.c.l.b16 %v4288
      %v4330 = vunpack.c.l.b16 %v4291
      %v4331 = vunpack.c.l.b16 %v4295
      %v4332 = vunpack.c.l.b16 %v4298
      %v4333 = vpack.c.b16 %v4302, %v4301
      %v4334 = vpack.c.b16 %v4304, %v4303
      %v4335 = vpack.c.b16 %v4306, %v4305
      %v4336 = vpack.c.b16 %v4308, %v4307
      %v4337 = vpack.c.b16 %v4310, %v4309
      %v4338 = vpack.c.b16 %v4312, %v4311
      %v4339 = vpack.c.b16 %v4314, %v4313
      %v4340 = vpack.c.b16 %v4316, %v4315
      %v4341 = vpack.c.b16 %v4318, %v4317
      %v4342 = vpack.c.b16 %v4320, %v4319
      %v4343 = vpack.c.b16 %v4322, %v4321
      %v4344 = vpack.c.b16 %v4324, %v4323
      %v4345 = vpack.c.b16 %v4326, %v4325
      %v4346 = vpack.c.b16 %v4328, %v4327
      %v4347 = vpack.c.b16 %v4330, %v4329
      %v4348 = vpack.c.b16 %v4332, %v4331
      %v4350 = vsel %vm706, %v4333, 0
      %v4353 = vsel %vm706, %v4334, 0
      %v4356 = vsel %vm706, %v4335, 0
      %v4359 = vsel %vm706, %v4336, 0
      %v4362 = vsel %vm706, %v4337, 0
      %v4365 = vsel %vm706, %v4338, 0
      %v4368 = vsel %vm706, %v4339, 0
      %v4371 = vsel %vm706, %v4340, 0
      %v4374 = vsel %vm706, %v4341, 0
      %v4377 = vsel %vm706, %v4342, 0
      %v4380 = vsel %vm706, %v4343, 0
      %v4383 = vsel %vm706, %v4344, 0
      %v4386 = vsel %vm706, %v4345, 0
      %v4389 = vsel %vm706, %v4346, 0
      %v4392 = vsel %vm706, %v4347, 0
      %v4395 = vsel %vm706, %v4348, 0
      %v4398 = vsel %vm755, %v4300, 0
      %4400 = vmatprep.subr.bf16.mxu0 0
      %4401 = vmatpush1.bf16.msra.mxu0 %v4398
      %4402 = vmatprep.subr.bf16.mxu0 0
      %4403 = vmatpush1.bf16.msra.mxu0 0
      %4404 = vmatprep.subr.bf16.mxu0 0
      %4405 = vmatpush1.bf16.msra.mxu0 0
      %4406 = vmatprep.subr.bf16.mxu0 0
      %4407 = vmatpush1.bf16.msra.mxu0 0
      %4408 = vmatprep.subr.bf16.mxu0 0
      %4409 = vmatpush1.bf16.msra.mxu0 0
      %4410 = vmatprep.subr.bf16.mxu0 0
      %4411 = vmatpush1.bf16.msra.mxu0 0
      %4412 = vmatprep.subr.bf16.mxu0 0
      %4413 = vmatpush1.bf16.msra.mxu0 0
      %4414 = vmatprep.subr.bf16.mxu0 0
      %4415 = vmatpush1.bf16.msra.mxu0 0
      %4416 = vmatprep.subr.bf16.mxu0 0
      %4417 = vmatpush1.bf16.msra.mxu0 0
      %4418 = vmatprep.subr.bf16.mxu0 0
      %4419 = vmatpush1.bf16.msra.mxu0 0
      %4420 = vmatprep.subr.bf16.mxu0 0
      %4421 = vmatpush1.bf16.msra.mxu0 0
      %4422 = vmatprep.subr.bf16.mxu0 0
      %4423 = vmatpush1.bf16.msra.mxu0 0
      %4424 = vmatprep.subr.bf16.mxu0 0
      %4425 = vmatpush1.bf16.msra.mxu0 0
      %4426 = vmatprep.subr.bf16.mxu0 0
      %4427 = vmatpush1.bf16.msra.mxu0 0
      %4428 = vmatprep.subr.bf16.mxu0 0
      %4429 = vmatpush1.bf16.msra.mxu0 0
      %4430 = vmatprep.subr.bf16.mxu0 0
      %4431 = vmatpush1.bf16.msra.mxu0 0
      %4432 = vmatprep.mubr.bf16.mxu0 0
      %4433 = vmatmul.mubr.bf16.gmra.mrb[0].mxu0 %v4350
      %v4434 = vpop.f32.mrb[0].mxu0
      %v4435 = vadd.f32 0.0, %v4434
      %v4436 = vpop.f32.mrb[0].mxu0
      %v4437 = vpop.f32.mrb[0].mxu0
      %v4438 = vadd.f32 0.0, %v4437
      %v4439 = vpop.f32.mrb[0].mxu0
      %4440 = vmatprep.mubr.bf16.mxu0 0
      %4441 = vmatmul.mubr.bf16.gmra.mrb[0].mxu0 %v4353
      %v4442 = vpop.f32.mrb[0].mxu0
      %v4443 = vadd.f32 0.0, %v4442
      %v4444 = vpop.f32.mrb[0].mxu0
      %v4445 = vpop.f32.mrb[0].mxu0
      %v4446 = vadd.f32 0.0, %v4445
      %v4447 = vpop.f32.mrb[0].mxu0
      %4448 = vmatprep.mubr.bf16.mxu0 0
      %4449 = vmatmul.mubr.bf16.gmra.mrb[0].mxu0 %v4356
      %v4450 = vpop.f32.mrb[0].mxu0
      %v4451 = vadd.f32 0.0, %v4450
      %v4452 = vpop.f32.mrb[0].mxu0
      %v4453 = vpop.f32.mrb[0].mxu0
      %v4454 = vadd.f32 0.0, %v4453
      %v4455 = vpop.f32.mrb[0].mxu0
      %4456 = vmatprep.mubr.bf16.mxu0 0
      %4457 = vmatmul.mubr.bf16.gmra.mrb[0].mxu0 %v4359
      %v4458 = vpop.f32.mrb[0].mxu0
      %v4459 = vadd.f32 0.0, %v4458
      %v4460 = vpop.f32.mrb[0].mxu0
      %v4461 = vpop.f32.mrb[0].mxu0
      %v4462 = vadd.f32 0.0, %v4461
      %v4463 = vpop.f32.mrb[0].mxu0
      %4464 = vmatprep.mubr.bf16.mxu0 0
      %4465 = vmatmul.mubr.bf16.gmra.mrb[0].mxu0 %v4362
      %v4466 = vpop.f32.mrb[0].mxu0
      %v4467 = vadd.f32 0.0, %v4466
      %v4468 = vpop.f32.mrb[0].mxu0
      %v4469 = vpop.f32.mrb[0].mxu0
      %v4470 = vadd.f32 0.0, %v4469
      %v4471 = vpop.f32.mrb[0].mxu0
      %4472 = vmatprep.mubr.bf16.mxu0 0
      %4473 = vmatmul.mubr.bf16.gmra.mrb[0].mxu0 %v4365
      %v4474 = vpop.f32.mrb[0].mxu0
      %v4475 = vadd.f32 0.0, %v4474
      %v4476 = vpop.f32.mrb[0].mxu0
      %v4477 = vpop.f32.mrb[0].mxu0
      %v4478 = vadd.f32 0.0, %v4477
      %v4479 = vpop.f32.mrb[0].mxu0
      %4480 = vmatprep.mubr.bf16.mxu0 0
      %4481 = vmatmul.mubr.bf16.gmra.mrb[0].mxu0 %v4368
      %v4482 = vpop.f32.mrb[0].mxu0
      %v4483 = vadd.f32 0.0, %v4482
      %v4484 = vpop.f32.mrb[0].mxu0
      %v4485 = vpop.f32.mrb[0].mxu0
      %v4486 = vadd.f32 0.0, %v4485
      %v4487 = vpop.f32.mrb[0].mxu0
      %4488 = vmatprep.mubr.bf16.mxu0 0
      %4489 = vmatmul.mubr.bf16.gmra.mrb[0].mxu0 %v4371
      %v4490 = vpop.f32.mrb[0].mxu0
      %v4491 = vadd.f32 0.0, %v4490
      %v4492 = vpop.f32.mrb[0].mxu0
      %v4493 = vpop.f32.mrb[0].mxu0
      %v4494 = vadd.f32 0.0, %v4493
      %v4495 = vpop.f32.mrb[0].mxu0
      %4496 = vmatprep.mubr.bf16.mxu0 0
      %4497 = vmatmul.mubr.bf16.gmra.mrb[0].mxu0 %v4374
      %v4498 = vpop.f32.mrb[0].mxu0
      %v4499 = vadd.f32 0.0, %v4498
      %v4500 = vpop.f32.mrb[0].mxu0
      %v4501 = vpop.f32.mrb[0].mxu0
      %v4502 = vadd.f32 0.0, %v4501
      %v4503 = vpop.f32.mrb[0].mxu0
      %4504 = vmatprep.mubr.bf16.mxu0 0
      %4505 = vmatmul.mubr.bf16.gmra.mrb[0].mxu0 %v4377
      %v4506 = vpop.f32.mrb[0].mxu0
      %v4507 = vadd.f32 0.0, %v4506
      %v4508 = vpop.f32.mrb[0].mxu0
      %v4509 = vpop.f32.mrb[0].mxu0
      %v4510 = vadd.f32 0.0, %v4509
      %v4511 = vpop.f32.mrb[0].mxu0
      %4512 = vmatprep.mubr.bf16.mxu0 0
      %4513 = vmatmul.mubr.bf16.gmra.mrb[0].mxu0 %v4380
      %v4514 = vpop.f32.mrb[0].mxu0
      %v4515 = vadd.f32 0.0, %v4514
      %v4516 = vpop.f32.mrb[0].mxu0
      %v4517 = vpop.f32.mrb[0].mxu0
      %v4518 = vadd.f32 0.0, %v4517
      %v4519 = vpop.f32.mrb[0].mxu0
      %4520 = vmatprep.mubr.bf16.mxu0 0
      %4521 = vmatmul.mubr.bf16.gmra.mrb[0].mxu0 %v4383
      %v4522 = vpop.f32.mrb[0].mxu0
      %v4523 = vadd.f32 0.0, %v4522
      %v4524 = vpop.f32.mrb[0].mxu0
      %v4525 = vpop.f32.mrb[0].mxu0
      %v4526 = vadd.f32 0.0, %v4525
      %v4527 = vpop.f32.mrb[0].mxu0
      %4528 = vmatprep.mubr.bf16.mxu0 0
      %4529 = vmatmul.mubr.bf16.gmra.mrb[0].mxu0 %v4386
      %v4530 = vpop.f32.mrb[0].mxu0
      %v4531 = vadd.f32 0.0, %v4530
      %v4532 = vpop.f32.mrb[0].mxu0
      %v4533 = vpop.f32.mrb[0].mxu0
      %v4534 = vadd.f32 0.0, %v4533
      %v4535 = vpop.f32.mrb[0].mxu0
      %4536 = vmatprep.mubr.bf16.mxu0 0
      %4537 = vmatmul.mubr.bf16.gmra.mrb[0].mxu0 %v4389
      %v4538 = vpop.f32.mrb[0].mxu0
      %v4539 = vadd.f32 0.0, %v4538
      %v4540 = vpop.f32.mrb[0].mxu0
      %v4541 = vpop.f32.mrb[0].mxu0
      %v4542 = vadd.f32 0.0, %v4541
      %v4543 = vpop.f32.mrb[0].mxu0
      %4544 = vmatprep.mubr.bf16.mxu0 0
      %4545 = vmatmul.mubr.bf16.gmra.mrb[0].mxu0 %v4392
      %v4546 = vpop.f32.mrb[0].mxu0
      %v4547 = vadd.f32 0.0, %v4546
      %v4548 = vpop.f32.mrb[0].mxu0
      %v4549 = vpop.f32.mrb[0].mxu0
      %v4550 = vadd.f32 0.0, %v4549
      %v4551 = vpop.f32.mrb[0].mxu0
      %4552 = vmatprep.mubr.bf16.mxu0 0
      %4553 = vmatmul.mubr.bf16.gmra.mrb[0].mxu0 %v4395
      %v4554 = vpop.f32.mrb[0].mxu0
      %v4555 = vadd.f32 0.0, %v4554
      %v4556 = vpop.f32.mrb[0].mxu0
      %v4557 = vpop.f32.mrb[0].mxu0
      %v4558 = vadd.f32 0.0, %v4557
      %v4559 = vpop.f32.mrb[0].mxu0
      %4560 = vdwg.mxu0
      %v4561 = vadd.f32 %v4139, %v4435
      %v4562 = vadd.f32 %v4140, %v4438
      %v4563 = vadd.f32 %v4141, %v4443
      %v4564 = vadd.f32 %v4142, %v4446
      %v4565 = vadd.f32 %v4143, %v4451
      %v4566 = vadd.f32 %v4144, %v4454
      %v4567 = vadd.f32 %v4145, %v4459
      %v4568 = vadd.f32 %v4146, %v4462
      %v4569 = vadd.f32 %v4147, %v4467
      %v4570 = vadd.f32 %v4148, %v4470
      %v4571 = vadd.f32 %v4149, %v4475
      %v4572 = vadd.f32 %v4150, %v4478
      %v4573 = vadd.f32 %v4151, %v4483
      %v4574 = vadd.f32 %v4152, %v4486
      %v4575 = vadd.f32 %v4153, %v4491
      %v4576 = vadd.f32 %v4154, %v4494
      %v4577 = vadd.f32 %v4155, %v4499
      %v4578 = vadd.f32 %v4156, %v4502
      %v4579 = vadd.f32 %v4157, %v4507
      %v4580 = vadd.f32 %v4158, %v4510
      %v4581 = vadd.f32 %v4159, %v4515
      %v4582 = vadd.f32 %v4160, %v4518
      %v4583 = vadd.f32 %v4161, %v4523
      %v4584 = vadd.f32 %v4162, %v4526
      %v4585 = vadd.f32 %v4163, %v4531
      %v4586 = vadd.f32 %v4164, %v4534
      %v4587 = vadd.f32 %v4165, %v4539
      %v4588 = vadd.f32 %v4166, %v4542
      %v4589 = vadd.f32 %v4167, %v4547
      %v4590 = vadd.f32 %v4168, %v4550
      %v4591 = vadd.f32 %v4169, %v4555
      %v4592 = vadd.f32 %v4170, %v4558
      %v4593 = vpack.c.bf16 %v4562, %v4561
      %v4594 = vpack.c.bf16 %v4564, %v4563
      %v4595 = vpack.c.bf16 %v4566, %v4565
      %v4596 = vpack.c.bf16 %v4568, %v4567
      %v4597 = vpack.c.bf16 %v4570, %v4569
      %v4598 = vpack.c.bf16 %v4572, %v4571
      %v4599 = vpack.c.bf16 %v4574, %v4573
      %v4600 = vpack.c.bf16 %v4576, %v4575
      %v4601 = vpack.c.bf16 %v4578, %v4577
      %v4602 = vpack.c.bf16 %v4580, %v4579
      %v4603 = vpack.c.bf16 %v4582, %v4581
      %v4604 = vpack.c.bf16 %v4584, %v4583
      %v4605 = vpack.c.bf16 %v4586, %v4585
      %v4606 = vpack.c.bf16 %v4588, %v4587
      %v4607 = vpack.c.bf16 %v4590, %v4589
      %v4608 = vpack.c.bf16 %v4592, %v4591
      %v4625 = vunpack.c.l.b16 %v4593
      %v4626 = vunpack.c.h.b16 %v4593
      %v4627 = vunpack.c.l.b16 %v4594
      %v4628 = vunpack.c.h.b16 %v4594
      %v4629 = vunpack.c.l.b16 %v4595
      %v4630 = vunpack.c.h.b16 %v4595
      %v4631 = vunpack.c.l.b16 %v4596
      %v4632 = vunpack.c.h.b16 %v4596
      %v4633 = vunpack.c.l.b16 %v4597
      %v4634 = vunpack.c.h.b16 %v4597
      %v4635 = vunpack.c.l.b16 %v4598
      %v4636 = vunpack.c.h.b16 %v4598
      %v4637 = vunpack.c.l.b16 %v4599
      %v4638 = vunpack.c.h.b16 %v4599
      %v4639 = vunpack.c.l.b16 %v4600
      %v4640 = vunpack.c.h.b16 %v4600
      %v4641 = vunpack.c.l.b16 %v4601
      %v4642 = vunpack.c.h.b16 %v4601
      %v4643 = vunpack.c.l.b16 %v4602
      %v4644 = vunpack.c.h.b16 %v4602
      %v4645 = vunpack.c.l.b16 %v4603
      %v4646 = vunpack.c.h.b16 %v4603
      %v4647 = vunpack.c.l.b16 %v4604
      %v4648 = vunpack.c.h.b16 %v4604
      %v4649 = vunpack.c.l.b16 %v4605
      %v4650 = vunpack.c.h.b16 %v4605
      %v4651 = vunpack.c.l.b16 %v4606
      %v4652 = vunpack.c.h.b16 %v4606
      %v4653 = vunpack.c.l.b16 %v4607
      %v4654 = vunpack.c.h.b16 %v4607
      %v4655 = vunpack.c.l.b16 %v4608
      %v4656 = vunpack.c.h.b16 %v4608
      %v4657 = vpack.c.b16 %v4625, %v4625
      %v4658 = vpack.c.b16 %v4626, %v4626
      %v4659 = vpack.c.b16 %v4627, %v4627
      %v4660 = vpack.c.b16 %v4628, %v4628
      %v4661 = vpack.c.b16 %v4629, %v4629
      %v4662 = vpack.c.b16 %v4630, %v4630
      %v4663 = vpack.c.b16 %v4631, %v4631
      %v4664 = vpack.c.b16 %v4632, %v4632
      %v4665 = vpack.c.b16 %v4633, %v4633
      %v4666 = vpack.c.b16 %v4634, %v4634
      %v4667 = vpack.c.b16 %v4635, %v4635
      %v4668 = vpack.c.b16 %v4636, %v4636
      %v4669 = vpack.c.b16 %v4637, %v4637
      %v4670 = vpack.c.b16 %v4638, %v4638
      %v4671 = vpack.c.b16 %v4639, %v4639
      %v4672 = vpack.c.b16 %v4640, %v4640
      %v4673 = vpack.c.b16 %v4641, %v4641
      %v4674 = vpack.c.b16 %v4642, %v4642
      %v4675 = vpack.c.b16 %v4643, %v4643
      %v4676 = vpack.c.b16 %v4644, %v4644
      %v4677 = vpack.c.b16 %v4645, %v4645
      %v4678 = vpack.c.b16 %v4646, %v4646
      %v4679 = vpack.c.b16 %v4647, %v4647
      %v4680 = vpack.c.b16 %v4648, %v4648
      %v4681 = vpack.c.b16 %v4649, %v4649
      %v4682 = vpack.c.b16 %v4650, %v4650
      %v4683 = vpack.c.b16 %v4651, %v4651
      %v4684 = vpack.c.b16 %v4652, %v4652
      %v4685 = vpack.c.b16 %v4653, %v4653
      %v4686 = vpack.c.b16 %v4654, %v4654
      %v4687 = vpack.c.b16 %v4655, %v4655
      %v4688 = vpack.c.b16 %v4656, %v4656
      %4721 = vst [vmem:[%s206] sm:$0xf] %v4657
      %4722 = vst [vmem:[%s206 + $0x4] sm:$0xf] %v4658
      %4723 = vst [vmem:[%s206 + $0x8] sm:$0xf] %v4659
      %4724 = vst [vmem:[%s206 + $0xc] sm:$0xf] %v4660
      %4725 = vst [vmem:[%s206 + $0x10] sm:$0xf] %v4661
      %4726 = vst [vmem:[%s206 + $0x14] sm:$0xf] %v4662
      %4727 = vst [vmem:[%s206 + $0x18] sm:$0xf] %v4663
      %4728 = vst [vmem:[%s206 + $0x1c] sm:$0xf] %v4664
      %4729 = vst [vmem:[%s206 + $0x20] sm:$0xf] %v4665
      %4730 = vst [vmem:[%s206 + $0x24] sm:$0xf] %v4666
      %4731 = vst [vmem:[%s206 + $0x28] sm:$0xf] %v4667
      %4732 = vst [vmem:[%s206 + $0x2c] sm:$0xf] %v4668
      %4733 = vst [vmem:[%s206 + $0x30] sm:$0xf] %v4669
      %4734 = vst [vmem:[%s206 + $0x34] sm:$0xf] %v4670
      %4735 = vst [vmem:[%s206 + $0x38] sm:$0xf] %v4671
      %4736 = vst [vmem:[%s206 + $0x3c] sm:$0xf] %v4672
      %4737 = vst [vmem:[%s206 + $0x40] sm:$0xf] %v4673
      %4738 = vst [vmem:[%s206 + $0x44] sm:$0xf] %v4674
      %4739 = vst [vmem:[%s206 + $0x48] sm:$0xf] %v4675
      %4740 = vst [vmem:[%s206 + $0x4c] sm:$0xf] %v4676
      %4741 = vst [vmem:[%s206 + $0x50] sm:$0xf] %v4677
      %4742 = vst [vmem:[%s206 + $0x54] sm:$0xf] %v4678
      %4743 = vst [vmem:[%s206 + $0x58] sm:$0xf] %v4679
      %4744 = vst [vmem:[%s206 + $0x5c] sm:$0xf] %v4680
      %4745 = vst [vmem:[%s206 + $0x60] sm:$0xf] %v4681
      %4746 = vst [vmem:[%s206 + $0x64] sm:$0xf] %v4682
      %4747 = vst [vmem:[%s206 + $0x68] sm:$0xf] %v4683
      %4748 = vst [vmem:[%s206 + $0x6c] sm:$0xf] %v4684
      %4749 = vst [vmem:[%s206 + $0x70] sm:$0xf] %v4685
      %4750 = vst [vmem:[%s206 + $0x74] sm:$0xf] %v4686
      %4751 = vst [vmem:[%s206 + $0x78] sm:$0xf] %v4687
      %4752 = vst [vmem:[%s206 + $0x7c] sm:$0xf] %v4688
      %v4753 = vadd.f32 %v4561, %v4562
      %v4754 = vadd.f32 %v4753, %v4563
      %v4755 = vadd.f32 %v4754, %v4564
      %v4756 = vadd.f32 %v4755, %v4565
      %v4757 = vadd.f32 %v4756, %v4566
      %v4758 = vadd.f32 %v4757, %v4567
      %v4759 = vadd.f32 %v4758, %v4568
      %v4760 = vadd.f32 %v4759, %v4569
      %v4761 = vadd.f32 %v4760, %v4570
      %v4762 = vadd.f32 %v4761, %v4571
      %v4763 = vadd.f32 %v4762, %v4572
      %v4764 = vadd.f32 %v4763, %v4573
      %v4765 = vadd.f32 %v4764, %v4574
      %v4766 = vadd.f32 %v4765, %v4575
      %v4767 = vadd.f32 %v4766, %v4576
      %v4768 = vadd.f32 %v4767, %v4577
      %v4769 = vadd.f32 %v4768, %v4578
      %v4770 = vadd.f32 %v4769, %v4579
      %v4771 = vadd.f32 %v4770, %v4580
      %v4772 = vadd.f32 %v4771, %v4581
      %v4773 = vadd.f32 %v4772, %v4582
      %v4774 = vadd.f32 %v4773, %v4583
      %v4775 = vadd.f32 %v4774, %v4584
      %v4776 = vadd.f32 %v4775, %v4585
      %v4777 = vadd.f32 %v4776, %v4586
      %v4778 = vadd.f32 %v4777, %v4587
      %v4779 = vadd.f32 %v4778, %v4588
      %v4780 = vadd.f32 %v4779, %v4589
      %v4781 = vadd.f32 %v4780, %v4590
      %v4782 = vadd.f32 %v4781, %v4591
      %v4783 = vadd.f32 %v4782, %v4592
      %v4784 = vrot.slane %v4783, 4
      %v4785 = vadd.f32 %v4783, %v4784
      %v4786 = vrot.slane %v4785, 2
      %v4787 = vadd.f32 %v4785, %v4786
      %v4788 = vrot.slane %v4787, 1
      %v4789 = vadd.f32 %v4787, %v4788
      %v4790 = vmul.f32 %v4561, %v4561
      %v4791 = vmul.f32 %v4562, %v4562
      %v4792 = vmul.f32 %v4563, %v4563
      %v4793 = vmul.f32 %v4564, %v4564
      %v4794 = vmul.f32 %v4565, %v4565
      %v4795 = vmul.f32 %v4566, %v4566
      %v4796 = vmul.f32 %v4567, %v4567
      %v4797 = vmul.f32 %v4568, %v4568
      %v4798 = vmul.f32 %v4569, %v4569
      %v4799 = vmul.f32 %v4570, %v4570
      %v4800 = vmul.f32 %v4571, %v4571
      %v4801 = vmul.f32 %v4572, %v4572
      %v4802 = vmul.f32 %v4573, %v4573
      %v4803 = vmul.f32 %v4574, %v4574
      %v4804 = vmul.f32 %v4575, %v4575
      %v4805 = vmul.f32 %v4576, %v4576
      %v4806 = vmul.f32 %v4577, %v4577
      %v4807 = vmul.f32 %v4578, %v4578
      %v4808 = vmul.f32 %v4579, %v4579
      %v4809 = vmul.f32 %v4580, %v4580
      %v4810 = vmul.f32 %v4581, %v4581
      %v4811 = vmul.f32 %v4582, %v4582
      %v4812 = vmul.f32 %v4583, %v4583
      %v4813 = vmul.f32 %v4584, %v4584
      %v4814 = vmul.f32 %v4585, %v4585
      %v4815 = vmul.f32 %v4586, %v4586
      %v4816 = vmul.f32 %v4587, %v4587
      %v4817 = vmul.f32 %v4588, %v4588
      %v4818 = vmul.f32 %v4589, %v4589
      %v4819 = vmul.f32 %v4590, %v4590
      %v4820 = vmul.f32 %v4591, %v4591
      %v4821 = vmul.f32 %v4592, %v4592
      %v4822 = vadd.f32 %v4790, %v4791
      %v4823 = vadd.f32 %v4822, %v4792
      %v4824 = vadd.f32 %v4823, %v4793
      %v4825 = vadd.f32 %v4824, %v4794
      %v4826 = vadd.f32 %v4825, %v4795
      %v4827 = vadd.f32 %v4826, %v4796
      %v4828 = vadd.f32 %v4827, %v4797
      %v4829 = vadd.f32 %v4828, %v4798
      %v4830 = vadd.f32 %v4829, %v4799
      %v4831 = vadd.f32 %v4830, %v4800
      %v4832 = vadd.f32 %v4831, %v4801
      %v4833 = vadd.f32 %v4832, %v4802
      %v4834 = vadd.f32 %v4833, %v4803
      %v4835 = vadd.f32 %v4834, %v4804
      %v4836 = vadd.f32 %v4835, %v4805
      %v4837 = vadd.f32 %v4836, %v4806
      %v4838 = vadd.f32 %v4837, %v4807
      %v4839 = vadd.f32 %v4838, %v4808
      %v4840 = vadd.f32 %v4839, %v4809
      %v4841 = vadd.f32 %v4840, %v4810
      %v4842 = vadd.f32 %v4841, %v4811
      %v4843 = vadd.f32 %v4842, %v4812
      %v4844 = vadd.f32 %v4843, %v4813
      %v4845 = vadd.f32 %v4844, %v4814
      %v4846 = vadd.f32 %v4845, %v4815
      %v4847 = vadd.f32 %v4846, %v4816
      %v4848 = vadd.f32 %v4847, %v4817
      %v4849 = vadd.f32 %v4848, %v4818
      %v4850 = vadd.f32 %v4849, %v4819
      %v4851 = vadd.f32 %v4850, %v4820
      %v4852 = vadd.f32 %v4851, %v4821
      %v4853 = vrot.slane %v4852, 4
      %v4854 = vadd.f32 %v4852, %v4853
      %v4855 = vrot.slane %v4854, 2
      %v4856 = vadd.f32 %v4854, %v4855
      %v4857 = vrot.slane %v4856, 1
      %v4858 = vadd.f32 %v4856, %v4857
      %4859 = vst [vmem:[%s214] sm:$0x1] %v4789
      %4860 = vst [vmem:[%s214 + $0x1] sm:$0x1] %v4858
      %s4861 = smul.u32 16, %s20
      %p4862 = scmp.lt.s32.totalorder %s19, 1
      %s4863 = scalar_select %p4862, %s19, 1
      %p4864 = scmp.lt.s32.totalorder %s4861, 15
      %s4865 = scalar_select %p4864, %s4861, 15
      %s4866 = smul.addr %s4865, 2
      %s4867 = smul.addr %s4863, 32
      %s4868 = sadd.s32 %s4866, %s4867
      %s4869 = smul.addr %s4868, 4
      %s4870 = scalar_lea.vmem %s2, %s4869
      %p4871 = scmp.lt.s32.totalorder %s19, 1
      %s4872 = scalar_select %p4871, %s19, 1
      %p4873 = scmp.lt.s32.totalorder %s20, 0
      %s4874 = scalar_select %p4873, %s20, 0
      %s4875 = sadd.s32 %s4874, %s4872
      %s4876 = smul.addr %s4875, 2
      %s4877 = scalar_lea.vmem %s3, %s4876
      // Predicated region
      $region29: #{conv_bn_relu.2} parent=27 // pred_check
        %p4878 = pneg %p94
      $region30: #{conv_bn_relu.2} parent=27 // pred_check_branch
        %4880 = sbr.rel (%p4878) target = $region32
      $region31: #{conv_bn_relu.2} parent=27 // pred_region
        %s4881 = smul.u32 16, %s20
      $region32: #{conv_bn_relu.2} parent=27 // pred_fallthru
        _
      // Predicated region
      $region33: #{conv_bn_relu.2} parent=27 // pred_check
        %p4882 = pneg %p122
      $region34: #{conv_bn_relu.2} parent=27 // pred_check_branch
        %4884 = sbr.rel (%p4882) target = $region36
      $region35: #{conv_bn_relu.2} parent=27 // pred_region
        _
      $region36: #{conv_bn_relu.2} parent=27 // pred_fallthru
        _
    $region28: #{conv_bn_relu.2} parent=5 // pred_fallthru
      _
    %p4885 = scmp.le.s32.totalorder 2, %s10
    // Predicated region
    $region37: #{conv_bn_relu.2} parent=5 // pred_check
      %p4886 = pneg %p4885
    $region38: #{conv_bn_relu.2} parent=5 // pred_check_branch
      %4888 = sbr.rel (%p4886) target = $region40
    $region39: #{conv_bn_relu.2} parent=5 // pred_region
      %s4889 = ssub.s32 %s10, 2
      // Predicated region
      $region41: #{conv_bn_relu.2} parent=39 // pred_check
        %p4890 = pneg %p100
      $region42: #{conv_bn_relu.2} parent=39 // pred_check_branch
        %4892 = sbr.rel (%p4890) target = $region44
      $region43: #{conv_bn_relu.2} parent=39 // pred_region
        %s4893 = smul.u32 16, %s22
        %p4894 = scmp.lt.s32.totalorder %s21, 1
        %s4895 = scalar_select %p4894, %s21, 1
        %p4896 = scmp.lt.s32.totalorder %s4893, 15
        %s4897 = scalar_select %p4896, %s4893, 15
        %s4898 = smul.addr %s4897, 2
        %s4899 = smul.addr %s4895, 32
        %s4900 = sadd.s32 %s4898, %s4899
        %s4901 = smul.addr %s4900, 4
        %s4902 = scalar_lea.vmem %s2, %s4901
      $region44: #{conv_bn_relu.2} parent=39 // pred_fallthru
        _
      // Predicated region
      $region45: #{conv_bn_relu.2} parent=39 // pred_check
        %p4903 = pneg %p128
      $region46: #{conv_bn_relu.2} parent=39 // pred_check_branch
        %4905 = sbr.rel (%p4903) target = $region48
      $region47: #{conv_bn_relu.2} parent=39 // pred_region
        %p4906 = scmp.lt.s32.totalorder %s21, 1
        %s4907 = scalar_select %p4906, %s21, 1
        %p4908 = scmp.lt.s32.totalorder %s22, 0
        %s4909 = scalar_select %p4908, %s22, 0
        %s4910 = sadd.s32 %s4909, %s4907
        %s4911 = smul.addr %s4910, 2
        %s4912 = scalar_lea.vmem %s3, %s4911
      $region48: #{conv_bn_relu.2} parent=39 // pred_fallthru
        _
    $region40: #{conv_bn_relu.2} parent=5 // pred_fallthru
      _
  $region6: #{conv_bn_relu.2} parent=0 // loop_footer
    %s14 = sadd.s32 1, %s10
  $region7: #{conv_bn_relu.2} parent=0 // loop_footer_branch
    %9 = sbr.rel target = $region3
  $region8: #{conv_bn_relu.2} parent=0 // loop_exit
    _

</llo_original>
